<compile_context>
chip_gen: v7x
topology: tpu7x:2x2x1
jax: 0.10.0
libtpu: 0.0.40
codegen_flags: <defaults>
</compile_context>

<pallas_src>
import functools

import jax
import jax.numpy as jnp
from jax.experimental import pallas as pl
from jax.experimental.pallas import tpu as pltpu


def _residual_block_kernel(x_ref, w1_ref, w2_ref, o_ref, xp_s, hp_s, *,
                           negative_slope):
    # x_ref : (1, H, W, C)       input tile (NHWC)
    # w1_ref: (9*C, C)           conv1 weights, im2col layout (kh, kw, cin) x cout
    # w2_ref: (9*C, C)           conv2 weights, same layout
    # o_ref : (1, H, W, C)       output tile
    # xp_s  : (H+2, W+2, C) f32  zero-padded input          (VMEM scratch)
    # hp_s  : (H+2, W+2, C) f32  zero-padded conv1 output   (VMEM scratch)
    H, W, C = o_ref.shape[1], o_ref.shape[2], o_ref.shape[3]

    def conv3x3(src_ref, w):
        # im2col: build the (H*W, 9*C) patch matrix once, then a single MXU
        # matmul with K = 9*C = 576 (instead of 9 under-filled K=64 dots).
        patches = [
            src_ref[kh:kh + H, kw:kw + W, :].reshape(H * W, C)
            for kh in range(3) for kw in range(3)
        ]
        col = jnp.concatenate(patches, axis=-1)            # (H*W, 9*C)
        return jnp.dot(col, w, preferred_element_type=jnp.float32)

    # Zero the padded scratches (provides the 1-pixel zero border both convs
    # need); re-zeroed every grid step so no stale halo data leaks across
    # batch elements / cores.  Interiors are fully overwritten below.
    xp_s[...] = jnp.zeros_like(xp_s)
    hp_s[...] = jnp.zeros_like(hp_s)

    x = x_ref[0]                                           # (H, W, C)
    xp_s[1:H + 1, 1:W + 1, :] = x.astype(jnp.float32)

    # conv1 + LeakyReLU(0.2); h stays resident in VMEM.
    h = conv3x3(xp_s, w1_ref[...])                         # (H*W, C) f32
    h = jnp.where(h > 0, h, negative_slope * h)
    hp_s[1:H + 1, 1:W + 1, :] = h.reshape(H, W, C)

    # conv2 + residual add (residual read from the already-resident x tile).
    out = conv3x3(hp_s, w2_ref[...])                       # (H*W, C) f32
    out = out + x.reshape(H * W, C).astype(jnp.float32)
    o_ref[0] = out.reshape(H, W, C).astype(o_ref.dtype)


def _fused_residual_block(x_nhwc, w1_mat, w2_mat, negative_slope=0.2):
    N, H, W, C = x_nhwc.shape
    kernel = functools.partial(_residual_block_kernel,
                               negative_slope=negative_slope)
    return pl.pallas_call(
        kernel,
        out_shape=jax.ShapeDtypeStruct((N, H, W, C), x_nhwc.dtype),
        grid_spec=pltpu.PrefetchScalarGridSpec(
            num_scalar_prefetch=0,
            grid=(N,),
            in_specs=[
                pl.BlockSpec((1, H, W, C), lambda n: (n, 0, 0, 0)),
                pl.BlockSpec((9 * C, C), lambda n: (0, 0)),
                pl.BlockSpec((9 * C, C), lambda n: (0, 0)),
            ],
            out_specs=pl.BlockSpec((1, H, W, C), lambda n: (n, 0, 0, 0)),
            scratch_shapes=[
                pltpu.VMEM((H + 2, W + 2, C), jnp.float32),
                pltpu.VMEM((H + 2, W + 2, C), jnp.float32),
            ],
        ),
        compiler_params=pltpu.CompilerParams(
            dimension_semantics=("parallel",)),
    )(x_nhwc, w1_mat, w2_mat)


def residual_block(x_nchw, w1_oihw, w2_oihw):
    """Forward pass of _Residual_Block. Input/weights use PyTorch conventions."""
    # NCHW -> NHWC
    x = jnp.transpose(x_nchw, (0, 2, 3, 1))
    # (Cout, Cin, kh, kw) -> (kh, kw, Cin, Cout) -> (9*Cin, Cout): exactly the
    # im2col matmul layout used in-kernel, so no in-kernel weight relayout.
    cout, cin = w1_oihw.shape[0], w1_oihw.shape[1]
    w1 = jnp.transpose(w1_oihw, (2, 3, 1, 0)).reshape(9 * cin, cout)
    w2 = jnp.transpose(w2_oihw, (2, 3, 1, 0)).reshape(9 * cin, cout)

    out = _fused_residual_block(x, w1, w2, negative_slope=0.2)

    # NHWC -> NCHW to match the PyTorch module's output layout.
    return jnp.transpose(out, (0, 3, 1, 2))


def _reference(x_nchw, w1_oihw, w2_oihw):
    """Pure-JAX reference using lax.conv for correctness checking."""
    dn = jax.lax.conv_dimension_numbers(x_nchw.shape, w1_oihw.shape,
                                        ("NCHW", "OIHW", "NCHW"))
    h = jax.lax.conv_general_dilated(x_nchw, w1_oihw, (1, 1), ((1, 1), (1, 1)),
                                     dimension_numbers=dn)
    h = jnp.where(h > 0, h, 0.2 * h)
    o = jax.lax.conv_general_dilated(h, w2_oihw, (1, 1), ((1, 1), (1, 1)),
                                     dimension_numbers=dn)
    return o + x_nchw


if __name__ == "__main__":
    key = jax.random.PRNGKey(0)
    k_x, k_w1, k_w2 = jax.random.split(key, 3)

    N, C, H, W = 2, 64, 16, 16  # channels fixed at 64 by the module definition
    x = jax.random.normal(k_x, (N, C, H, W), dtype=jnp.float32)
    # Deterministic Kaiming-ish init for the two 3x3 conv weights (Cout, Cin, 3, 3).
    fan_in = C * 3 * 3
    w1 = jax.random.normal(k_w1, (64, 64, 3, 3), dtype=jnp.float32) * (2.0 / fan_in) ** 0.5
    w2 = jax.random.normal(k_w2, (64, 64, 3, 3), dtype=jnp.float32) * (2.0 / fan_in) ** 0.5

    out = jax.jit(residual_block)(x, w1, w2)
    out = jax.block_until_ready(out)

    ref = _reference(x, w1, w2)
    assert out.shape == (N, C, H, W), out.shape
    assert jnp.allclose(out, ref, atol=1e-4, rtol=1e-4), float(jnp.max(jnp.abs(out - ref)))

    print("KERNEL_OK")
</pallas_src>

<mosaic_0001>
module attributes {stable_mosaic.version = 11 : i64} {
  func.func @_residual_block_kernel(%arg0: i32, %arg1: memref<1x16x16x64xf32, #tpu.memory_space<vmem>>, %arg2: memref<576x64xf32, #tpu.memory_space<vmem>>, %arg3: memref<576x64xf32, #tpu.memory_space<vmem>>, %arg4: memref<1x16x16x64xf32, #tpu.memory_space<vmem>>, %arg5: memref<18x18x64xf32, #tpu.memory_space<vmem>>, %arg6: memref<18x18x64xf32, #tpu.memory_space<vmem>>) attributes {dimension_semantics = [#tpu.dimension_semantics<parallel>], iteration_bounds = array<i64: 2>, scalar_prefetch = 0 : i64, scratch_operands = 2 : i64, tpu.core_type = #tpu.core_type<tc>, window_params = [{transform_indices = @transform_0, window_bounds = array<i64: 1, 16, 16, 64>}, {pipeline_mode = #tpu.pipeline_mode<synchronous>, transform_indices = @transform_1, window_bounds = array<i64: 576, 64>}, {pipeline_mode = #tpu.pipeline_mode<synchronous>, transform_indices = @transform_2, window_bounds = array<i64: 576, 64>}, {transform_indices = @transform_3, window_bounds = array<i64: 1, 16, 16, 64>}]} {
    %cst = arith.constant 0.000000e+00 : f32
    %0 = vector.broadcast %cst : f32 to vector<18x18x64xf32>
    %c0 = arith.constant 0 : index
    %c0_0 = arith.constant 0 : index
    %c0_1 = arith.constant 0 : index
    %1 = vector.load %arg5[%c0, %c0_0, %c0_1] : memref<18x18x64xf32, #tpu.memory_space<vmem>>, vector<18x18x64xf32>
    tpu.vector_store %arg5[%c0, %c0_0, %c0_1], %0 {strides = array<i32>} : memref<18x18x64xf32, #tpu.memory_space<vmem>>, vector<18x18x64xf32>,
    %cst_2 = arith.constant 0.000000e+00 : f32
    %2 = vector.broadcast %cst_2 : f32 to vector<18x18x64xf32>
    %c0_3 = arith.constant 0 : index
    %c0_4 = arith.constant 0 : index
    %c0_5 = arith.constant 0 : index
    %3 = vector.load %arg6[%c0_3, %c0_4, %c0_5] : memref<18x18x64xf32, #tpu.memory_space<vmem>>, vector<18x18x64xf32>
    tpu.vector_store %arg6[%c0_3, %c0_4, %c0_5], %2 {strides = array<i32>} : memref<18x18x64xf32, #tpu.memory_space<vmem>>, vector<18x18x64xf32>,
    %c0_6 = arith.constant 0 : index
    %c0_7 = arith.constant 0 : index
    %c0_8 = arith.constant 0 : index
    %c0_9 = arith.constant 0 : index
    %4 = vector.load %arg1[%c0_6, %c0_7, %c0_8, %c0_9] : memref<1x16x16x64xf32, #tpu.memory_space<vmem>>, vector<1x16x16x64xf32>
    %5 = vector.shape_cast %4 : vector<1x16x16x64xf32> to vector<16x16x64xf32>
    %c1 = arith.constant 1 : index
    %c1_10 = arith.constant 1 : index
    %c0_11 = arith.constant 0 : index
    %6 = vector.load %arg5[%c1, %c1_10, %c0_11] : memref<18x18x64xf32, #tpu.memory_space<vmem>>, vector<16x16x64xf32>
    tpu.vector_store %arg5[%c1, %c1_10, %c0_11], %5 {strides = array<i32>} : memref<18x18x64xf32, #tpu.memory_space<vmem>>, vector<16x16x64xf32>,
    %c0_12 = arith.constant 0 : index
    %c0_13 = arith.constant 0 : index
    %7 = vector.load %arg2[%c0_12, %c0_13] : memref<576x64xf32, #tpu.memory_space<vmem>>, vector<576x64xf32>
    %c0_14 = arith.constant 0 : index
    %c0_15 = arith.constant 0 : index
    %c0_16 = arith.constant 0 : index
    %8 = vector.load %arg5[%c0_14, %c0_15, %c0_16] : memref<18x18x64xf32, #tpu.memory_space<vmem>>, vector<16x16x64xf32>
    %9 = vector.shape_cast %8 : vector<16x16x64xf32> to vector<256x64xf32>
    %c0_17 = arith.constant 0 : index
    %c1_18 = arith.constant 1 : index
    %c0_19 = arith.constant 0 : index
    %10 = vector.load %arg5[%c0_17, %c1_18, %c0_19] : memref<18x18x64xf32, #tpu.memory_space<vmem>>, vector<16x16x64xf32>
    %11 = vector.shape_cast %10 : vector<16x16x64xf32> to vector<256x64xf32>
    %c0_20 = arith.constant 0 : index
    %c2 = arith.constant 2 : index
    %c0_21 = arith.constant 0 : index
    %12 = vector.load %arg5[%c0_20, %c2, %c0_21] : memref<18x18x64xf32, #tpu.memory_space<vmem>>, vector<16x16x64xf32>
    %13 = vector.shape_cast %12 : vector<16x16x64xf32> to vector<256x64xf32>
    %c1_22 = arith.constant 1 : index
    %c0_23 = arith.constant 0 : index
    %c0_24 = arith.constant 0 : index
    %14 = vector.load %arg5[%c1_22, %c0_23, %c0_24] : memref<18x18x64xf32, #tpu.memory_space<vmem>>, vector<16x16x64xf32>
    %15 = vector.shape_cast %14 : vector<16x16x64xf32> to vector<256x64xf32>
    %c1_25 = arith.constant 1 : index
    %c1_26 = arith.constant 1 : index
    %c0_27 = arith.constant 0 : index
    %16 = vector.load %arg5[%c1_25, %c1_26, %c0_27] : memref<18x18x64xf32, #tpu.memory_space<vmem>>, vector<16x16x64xf32>
    %17 = vector.shape_cast %16 : vector<16x16x64xf32> to vector<256x64xf32>
    %c1_28 = arith.constant 1 : index
    %c2_29 = arith.constant 2 : index
    %c0_30 = arith.constant 0 : index
    %18 = vector.load %arg5[%c1_28, %c2_29, %c0_30] : memref<18x18x64xf32, #tpu.memory_space<vmem>>, vector<16x16x64xf32>
    %19 = vector.shape_cast %18 : vector<16x16x64xf32> to vector<256x64xf32>
    %c2_31 = arith.constant 2 : index
    %c0_32 = arith.constant 0 : index
    %c0_33 = arith.constant 0 : index
    %20 = vector.load %arg5[%c2_31, %c0_32, %c0_33] : memref<18x18x64xf32, #tpu.memory_space<vmem>>, vector<16x16x64xf32>
    %21 = vector.shape_cast %20 : vector<16x16x64xf32> to vector<256x64xf32>
    %c2_34 = arith.constant 2 : index
    %c1_35 = arith.constant 1 : index
    %c0_36 = arith.constant 0 : index
    %22 = vector.load %arg5[%c2_34, %c1_35, %c0_36] : memref<18x18x64xf32, #tpu.memory_space<vmem>>, vector<16x16x64xf32>
    %23 = vector.shape_cast %22 : vector<16x16x64xf32> to vector<256x64xf32>
    %c2_37 = arith.constant 2 : index
    %c2_38 = arith.constant 2 : index
    %c0_39 = arith.constant 0 : index
    %24 = vector.load %arg5[%c2_37, %c2_38, %c0_39] : memref<18x18x64xf32, #tpu.memory_space<vmem>>, vector<16x16x64xf32>
    %25 = vector.shape_cast %24 : vector<16x16x64xf32> to vector<256x64xf32>
    %26 = tpu.concatenate %9, %11, %13, %15, %17, %19, %21, %23, %25 in 1 : vector<256x64xf32>, vector<256x64xf32>, vector<256x64xf32>, vector<256x64xf32>, vector<256x64xf32>, vector<256x64xf32>, vector<256x64xf32>, vector<256x64xf32>, vector<256x64xf32> -> vector<256x576xf32>
    %cst_40 = arith.constant dense<0.000000e+00> : vector<256x64xf32>
    %27 = tpu.matmul %26, %7, %cst_40 {dimension_numbers = #tpu.dot_dimension_numbers<[1], [0], [0], [1], [0, 0, 1, 1], [], []>} : vector<256x576xf32>, vector<576x64xf32>, vector<256x64xf32> -> vector<256x64xf32>
    %cst_41 = arith.constant 0.000000e+00 : f32
    %28 = vector.broadcast %cst_41 : f32 to vector<256x64xf32>
    %29 = arith.cmpf ogt, %27, %28 : vector<256x64xf32>
    %cst_42 = arith.constant 2.000000e-01 : f32
    %30 = vector.broadcast %cst_42 : f32 to vector<256x64xf32>
    %31 = arith.mulf %30, %27 : vector<256x64xf32>
    %32 = arith.select %29, %27, %31 : vector<256x64xi1>, vector<256x64xf32>
    %33 = vector.shape_cast %32 : vector<256x64xf32> to vector<16x16x64xf32>
    %c1_43 = arith.constant 1 : index
    %c1_44 = arith.constant 1 : index
    %c0_45 = arith.constant 0 : index
    %34 = vector.load %arg6[%c1_43, %c1_44, %c0_45] : memref<18x18x64xf32, #tpu.memory_space<vmem>>, vector<16x16x64xf32>
    tpu.vector_store %arg6[%c1_43, %c1_44, %c0_45], %33 {strides = array<i32>} : memref<18x18x64xf32, #tpu.memory_space<vmem>>, vector<16x16x64xf32>,
    %c0_46 = arith.constant 0 : index
    %c0_47 = arith.constant 0 : index
    %35 = vector.load %arg3[%c0_46, %c0_47] : memref<576x64xf32, #tpu.memory_space<vmem>>, vector<576x64xf32>
    %c0_48 = arith.constant 0 : index
    %c0_49 = arith.constant 0 : index
    %c0_50 = arith.constant 0 : index
    %36 = vector.load %arg6[%c0_48, %c0_49, %c0_50] : memref<18x18x64xf32, #tpu.memory_space<vmem>>, vector<16x16x64xf32>
    %37 = vector.shape_cast %36 : vector<16x16x64xf32> to vector<256x64xf32>
    %c0_51 = arith.constant 0 : index
    %c1_52 = arith.constant 1 : index
    %c0_53 = arith.constant 0 : index
    %38 = vector.load %arg6[%c0_51, %c1_52, %c0_53] : memref<18x18x64xf32, #tpu.memory_space<vmem>>, vector<16x16x64xf32>
    %39 = vector.shape_cast %38 : vector<16x16x64xf32> to vector<256x64xf32>
    %c0_54 = arith.constant 0 : index
    %c2_55 = arith.constant 2 : index
    %c0_56 = arith.constant 0 : index
    %40 = vector.load %arg6[%c0_54, %c2_55, %c0_56] : memref<18x18x64xf32, #tpu.memory_space<vmem>>, vector<16x16x64xf32>
    %41 = vector.shape_cast %40 : vector<16x16x64xf32> to vector<256x64xf32>
    %c1_57 = arith.constant 1 : index
    %c0_58 = arith.constant 0 : index
    %c0_59 = arith.constant 0 : index
    %42 = vector.load %arg6[%c1_57, %c0_58, %c0_59] : memref<18x18x64xf32, #tpu.memory_space<vmem>>, vector<16x16x64xf32>
    %43 = vector.shape_cast %42 : vector<16x16x64xf32> to vector<256x64xf32>
    %c1_60 = arith.constant 1 : index
    %c1_61 = arith.constant 1 : index
    %c0_62 = arith.constant 0 : index
    %44 = vector.load %arg6[%c1_60, %c1_61, %c0_62] : memref<18x18x64xf32, #tpu.memory_space<vmem>>, vector<16x16x64xf32>
    %45 = vector.shape_cast %44 : vector<16x16x64xf32> to vector<256x64xf32>
    %c1_63 = arith.constant 1 : index
    %c2_64 = arith.constant 2 : index
    %c0_65 = arith.constant 0 : index
    %46 = vector.load %arg6[%c1_63, %c2_64, %c0_65] : memref<18x18x64xf32, #tpu.memory_space<vmem>>, vector<16x16x64xf32>
    %47 = vector.shape_cast %46 : vector<16x16x64xf32> to vector<256x64xf32>
    %c2_66 = arith.constant 2 : index
    %c0_67 = arith.constant 0 : index
    %c0_68 = arith.constant 0 : index
    %48 = vector.load %arg6[%c2_66, %c0_67, %c0_68] : memref<18x18x64xf32, #tpu.memory_space<vmem>>, vector<16x16x64xf32>
    %49 = vector.shape_cast %48 : vector<16x16x64xf32> to vector<256x64xf32>
    %c2_69 = arith.constant 2 : index
    %c1_70 = arith.constant 1 : index
    %c0_71 = arith.constant 0 : index
    %50 = vector.load %arg6[%c2_69, %c1_70, %c0_71] : memref<18x18x64xf32, #tpu.memory_space<vmem>>, vector<16x16x64xf32>
    %51 = vector.shape_cast %50 : vector<16x16x64xf32> to vector<256x64xf32>
    %c2_72 = arith.constant 2 : index
    %c2_73 = arith.constant 2 : index
    %c0_74 = arith.constant 0 : index
    %52 = vector.load %arg6[%c2_72, %c2_73, %c0_74] : memref<18x18x64xf32, #tpu.memory_space<vmem>>, vector<16x16x64xf32>
    %53 = vector.shape_cast %52 : vector<16x16x64xf32> to vector<256x64xf32>
    %54 = tpu.concatenate %37, %39, %41, %43, %45, %47, %49, %51, %53 in 1 : vector<256x64xf32>, vector<256x64xf32>, vector<256x64xf32>, vector<256x64xf32>, vector<256x64xf32>, vector<256x64xf32>, vector<256x64xf32>, vector<256x64xf32>, vector<256x64xf32> -> vector<256x576xf32>
    %cst_75 = arith.constant dense<0.000000e+00> : vector<256x64xf32>
    %55 = tpu.matmul %54, %35, %cst_75 {dimension_numbers = #tpu.dot_dimension_numbers<[1], [0], [0], [1], [0, 0, 1, 1], [], []>} : vector<256x576xf32>, vector<576x64xf32>, vector<256x64xf32> -> vector<256x64xf32>
    %56 = vector.shape_cast %5 : vector<16x16x64xf32> to vector<256x64xf32>
    %57 = arith.addf %55, %56 : vector<256x64xf32>
    %58 = vector.shape_cast %57 : vector<256x64xf32> to vector<16x16x64xf32>
    %c0_76 = arith.constant 0 : index
    %c0_77 = arith.constant 0 : index
    %c0_78 = arith.constant 0 : index
    %c0_79 = arith.constant 0 : index
    %59 = vector.load %arg4[%c0_76, %c0_77, %c0_78, %c0_79] : memref<1x16x16x64xf32, #tpu.memory_space<vmem>>, vector<1x16x16x64xf32>
    %60 = vector.shape_cast %59 : vector<1x16x16x64xf32> to vector<16x16x64xf32>
    %61 = vector.shape_cast %58 : vector<16x16x64xf32> to vector<1x16x16x64xf32>
    tpu.vector_store %arg4[%c0_76, %c0_77, %c0_78, %c0_79], %61 {strides = array<i32>} : memref<1x16x16x64xf32, #tpu.memory_space<vmem>>, vector<1x16x16x64xf32>,
    return
  }
  func.func @transform_0(%arg0: i32) -> (i32, i32, i32, i32) {
    %c0_i32 = arith.constant 0 : i32
    %c0_i32_0 = arith.constant 0 : i32
    %c0_i32_1 = arith.constant 0 : i32
    %c0_i32_2 = arith.constant 0 : i32
    return %arg0, %c0_i32, %c0_i32_0, %c0_i32_1 : i32, i32, i32, i32
  }
  func.func @transform_1(%arg0: i32) -> (i32, i32) {
    %c0_i32 = arith.constant 0 : i32
    %c0_i32_0 = arith.constant 0 : i32
    %c0_i32_1 = arith.constant 0 : i32
    return %c0_i32, %c0_i32_0 : i32, i32
  }
  func.func @transform_2(%arg0: i32) -> (i32, i32) {
    %c0_i32 = arith.constant 0 : i32
    %c0_i32_0 = arith.constant 0 : i32
    %c0_i32_1 = arith.constant 0 : i32
    return %c0_i32, %c0_i32_0 : i32, i32
  }
  func.func @transform_3(%arg0: i32) -> (i32, i32, i32, i32) {
    %c0_i32 = arith.constant 0 : i32
    %c0_i32_0 = arith.constant 0 : i32
    %c0_i32_1 = arith.constant 0 : i32
    %c0_i32_2 = arith.constant 0 : i32
    return %arg0, %c0_i32, %c0_i32_0, %c0_i32_1 : i32, i32, i32, i32
  }
}

</mosaic_0001>

<llo_original>
// kernel: residual_block.1
$region0: #{residual_block.1}
  #allocation0 [shape = 'u32[]', space=smem, size = 0x4, offset = 0x4, fixed_abs, tag = 'smem constant byte address 0x4 - core index']
  #allocation1 [shape = 'u32[144,128]{1,0:T(1,128)}', space=vmem, size = 0x12000, scoped, tag = 'internal scratch']
  #allocation2 [shape = 'f32[18,18,64]{2,1,0:T(8,128)}', space=vmem, size = 0x36000, scoped, tag = 'scratch operand']
  #allocation3 [shape = 'f32[18,18,64]{2,1,0:T(8,128)}', space=vmem, size = 0x36000, scoped, tag = 'scratch operand']
  %s0 = inlined_call_operand.vmem [shape: f32[2,16,16,64], index: 0, kind: input, shape index: {}]
  %s1 = inlined_call_operand.vmem [shape: f32[576,64], index: 1, kind: input, shape index: {}]
  %s2 = inlined_call_operand.vmem [shape: f32[576,64], index: 2, kind: input, shape index: {}]
  %s3 = inlined_call_operand.hbm [shape: f32[2,16,16,64], index: 3, kind: output, shape index: {}]
  %s4 = sld [smem:[#allocation0]]
  $region45: #{residual_block.1} parent=0
    _
  %s6 = ssub.s32 1, %s4
  %s7 = scalar_select 0, %s6, %s4
  $region1: #{residual_block.1} parent=0
    #allocation4 [shape = 'u8[262144]{0}', space=vmem, size = 0x40000, scoped, tag = 'output window, operand 0']
    #allocation5 [shape = 's32[2]{0}', space=sflag, size = 0x8, scoped, tag = 'scoped memory for residual_block.1']
    %8 = vsyncpa [#allocation5], 0
    %s9 = scalar_lea.sflag [#allocation5], 1
    %10 = vsyncpa %s9, 0
    loop: start=0, step=1, limit=4
    $region2: #{residual_block.1} parent=1 // loop_pre_header
      _
    $region3: #{residual_block.1} parent=1 // loop_header
      %s12 = sphi 0, %s16
      %p13 = scmp.ge.s32.totalorder %s12, 4
      %s22 = sphi 0, %s24
      %s25 = sphi 0, %s22
      %s26 = sphi 0, %s25
      %s42 = sphi 0, %s26
      %s46 = sphi 0, %s46
      %s48 = sphi 0, %s46
      %s49 = sphi 0, %s48
      %s63 = sphi 0, %s49
      %s67 = sphi 0, %s67
      %s69 = sphi 0, %s67
      %s70 = sphi 0, %s69
      %s84 = sphi 0, %s70
      %s90 = sphi 0, %s92
      %s93 = sphi 0, %s90
      %s94 = sphi 0, %s93
      %s110 = sphi 0, %s94
    $region4: #{residual_block.1} parent=1 // loop_header_branch
      %15 = sbr.rel (%p13) target = $region8
    $region5: #{residual_block.1} parent=1 // loop_body
      %s17 = ssub.s32 %s12, 1
      %s18 = ssub.s32 %s12, 2
      %s19 = sadd.s32 %s12, 1
      %s20 = ssub.s32 %s12, %s19
      %p21 = scmp.eq.s32.totalorder %s20, 0
      %s23 = sadd.s32 %s22, 1
      %s24 = scalar_select %p21, %s22, %s23
      %p27 = pneg %p21
      %p28 = scmp.eq.s32.totalorder %s12, 1
      %p29 = por %p27, %p28
      %p30 = scmp.ne.s32.totalorder %s22, %s25
      %p31 = scmp.eq.s32.totalorder %s12, 0
      %p32 = por %p30, %p31
      %p33 = scmp.ne.s32.totalorder %s22, %s25
      %p34 = scmp.eq.s32.totalorder %s17, 1
      %p35 = por %p33, %p34
      %p36 = scmp.ne.s32.totalorder %s25, %s26
      %p37 = scmp.eq.s32.totalorder %s17, 0
      %p38 = por %p36, %p37
      %p39 = scmp.ne.s32.totalorder %s25, %s26
      %p40 = scmp.eq.s32.totalorder %s18, 1
      %p41 = por %p39, %p40
      %p43 = scmp.ne.s32.totalorder %s26, %s42
      %p44 = scmp.eq.s32.totalorder %s18, 0
      %p45 = por %p43, %p44
      %s47 = sadd.s32 %s46, 1
      %p50 = scmp.eq.s32.totalorder %s12, 1
      %p51 = scmp.ne.s32.totalorder %s46, %s48
      %p52 = scmp.eq.s32.totalorder %s12, 0
      %p53 = por %p51, %p52
      %p54 = scmp.ne.s32.totalorder %s46, %s48
      %p55 = scmp.eq.s32.totalorder %s17, 1
      %p56 = por %p54, %p55
      %p57 = scmp.ne.s32.totalorder %s48, %s49
      %p58 = scmp.eq.s32.totalorder %s17, 0
      %p59 = por %p57, %p58
      %p60 = scmp.ne.s32.totalorder %s48, %s49
      %p61 = scmp.eq.s32.totalorder %s18, 1
      %p62 = por %p60, %p61
      %p64 = scmp.ne.s32.totalorder %s49, %s63
      %p65 = scmp.eq.s32.totalorder %s18, 0
      %p66 = por %p64, %p65
      %s68 = sadd.s32 %s67, 1
      %p71 = scmp.eq.s32.totalorder %s12, 1
      %p72 = scmp.ne.s32.totalorder %s67, %s69
      %p73 = scmp.eq.s32.totalorder %s12, 0
      %p74 = por %p72, %p73
      %p75 = scmp.ne.s32.totalorder %s67, %s69
      %p76 = scmp.eq.s32.totalorder %s17, 1
      %p77 = por %p75, %p76
      %p78 = scmp.ne.s32.totalorder %s69, %s70
      %p79 = scmp.eq.s32.totalorder %s17, 0
      %p80 = por %p78, %p79
      %p81 = scmp.ne.s32.totalorder %s69, %s70
      %p82 = scmp.eq.s32.totalorder %s18, 1
      %p83 = por %p81, %p82
      %p85 = scmp.ne.s32.totalorder %s70, %s84
      %p86 = scmp.eq.s32.totalorder %s18, 0
      %p87 = por %p85, %p86
      %s88 = ssub.s32 %s12, %s19
      %p89 = scmp.eq.s32.totalorder %s88, 0
      %s91 = sadd.s32 %s90, 1
      %s92 = scalar_select %p89, %s90, %s91
      %p95 = pneg %p89
      %p96 = scmp.eq.s32.totalorder %s12, 1
      %p97 = por %p95, %p96
      %p98 = scmp.ne.s32.totalorder %s90, %s93
      %p99 = scmp.eq.s32.totalorder %s12, 0
      %p100 = por %p98, %p99
      %p101 = scmp.ne.s32.totalorder %s90, %s93
      %p102 = scmp.eq.s32.totalorder %s17, 1
      %p103 = por %p101, %p102
      %p104 = scmp.ne.s32.totalorder %s93, %s94
      %p105 = scmp.eq.s32.totalorder %s17, 0
      %p106 = por %p104, %p105
      %p107 = scmp.ne.s32.totalorder %s93, %s94
      %p108 = scmp.eq.s32.totalorder %s18, 1
      %p109 = por %p107, %p108
      %p111 = scmp.ne.s32.totalorder %s94, %s110
      %p112 = scmp.eq.s32.totalorder %s18, 0
      %p113 = por %p111, %p112
      %p114 = scmp.le.s32.totalorder 1, %s12
      %p115 = scmp.lt.s32.totalorder %s12, 3
      %p116 = pnand %p114, %p115
      %p117 = pneg %p116
      // Predicated region
      $region9: #{residual_block.1} parent=5 // pred_check
        _
      $region10: #{residual_block.1} parent=5 // pred_check_branch
        %119 = sbr.rel (%p116) target = $region12
      $region11: #{residual_block.1} parent=5 // pred_region
        %s120 = ssub.s32 %s12, 1
        // Predicated region
        $region13: #{residual_block.1} parent=11 // pred_check
          %p121 = pneg %p59
        $region14: #{residual_block.1} parent=11 // pred_check_branch
          %123 = sbr.rel (%p121) target = $region16
        $region15: #{residual_block.1} parent=11 // pred_region
          _
        $region16: #{residual_block.1} parent=11 // pred_fallthru
          _
        // Predicated region
        $region17: #{residual_block.1} parent=11 // pred_check
          %p124 = pneg %p80
        $region18: #{residual_block.1} parent=11 // pred_check_branch
          %126 = sbr.rel (%p124) target = $region20
        $region19: #{residual_block.1} parent=11 // pred_region
          _
        $region20: #{residual_block.1} parent=11 // pred_fallthru
          _
      $region12: #{residual_block.1} parent=5 // pred_fallthru
        _
      %p127 = scmp.lt.s32.totalorder %s12, 2
      // Predicated region
      $region21: #{residual_block.1} parent=5 // pred_check
        %p128 = pneg %p127
      $region22: #{residual_block.1} parent=5 // pred_check_branch
        %130 = sbr.rel (%p128) target = $region24
      $region23: #{residual_block.1} parent=5 // pred_region
        // Predicated region
        $region25: #{residual_block.1} parent=23 // pred_check
          %p131 = pneg %p32
        $region26: #{residual_block.1} parent=23 // pred_check_branch
          %133 = sbr.rel (%p131) target = $region28
        $region27: #{residual_block.1} parent=23 // pred_region
          %p134 = scmp.lt.s32.totalorder %s12, 1
          %s135 = scalar_select %p134, %s12, 1
          %s136 = smul.addr %s135, 32
          %s137 = smul.addr %s136, 8
          %s138 = scalar_lea.vmem %s0, %s137
        $region28: #{residual_block.1} parent=23 // pred_fallthru
          _
      $region24: #{residual_block.1} parent=5 // pred_fallthru
        _
      %p139 = scmp.le.s32.totalorder 1, %s12
      %p140 = scmp.lt.s32.totalorder %s12, 3
      %p141 = pnand %p139, %p140
      %p142 = pneg %p141
      // Predicated region
      $region29: #{residual_block.1} parent=5 // pred_check
        _
      $region30: #{residual_block.1} parent=5 // pred_check_branch
        %144 = sbr.rel (%p141) target = $region32
      $region31: #{residual_block.1} parent=5 // pred_region
        %s145 = ssub.s32 %s12, 1
        %p146 = scmp.lt.s32.totalorder %s17, 1
        %s147 = scalar_select %p146, %s17, 1
        %s148 = smul.addr %s147, 32
        %s149 = smul.addr %s148, 8
        %s150 = scalar_lea.vmem %s0, %s149
        %p151 = pneg %p38
        %p152 = pneg %p35
        %p153 = pneg %p59
        %p154 = pneg %p56
        %p155 = pneg %p80
        %p156 = pneg %p77
        %p157 = pneg %p106
        %p158 = pneg %p103
        %s159 = sand.u32 %s93, 1
        %s160 = scalar_lea.sflag [#allocation5], %s159
        %s161 = sand.u32 %s93, 1
        %s162 = smul.addr %s161, 256
        %s163 = scalar_lea.vmem [#allocation4], %s162
        %p164 = scmp.lt.s32.totalorder %s17, 1
        %s165 = scalar_select %p164, %s17, 1
        %s166 = smul.addr %s165, 32
        %s167 = smul.addr %s166, 8
        %s168 = scalar_lea.vmem %s0, %s167
        %vm169 = vcmask 523264
        %170 = vst.msk [vmem:[#allocation2] sm:$0xff] %vm169, 0.0
        %171 = vst.msk [vmem:[#allocation2 + $0x8] sm:$0xff] %vm169, 0.0
        %vm172 = vcmask 517120
        %173 = vst.msk [vmem:[#allocation2 + $0x10] sm:$0x3] %vm172, 0.0
        %174 = vst.msk [vmem:[#allocation2 + $0x18] sm:$0xff] %vm169, 0.0
        %175 = vst.msk [vmem:[#allocation2 + $0x20] sm:$0xff] %vm169, 0.0
        %176 = vst.msk [vmem:[#allocation2 + $0x28] sm:$0x3] %vm172, 0.0
        %177 = vst.msk [vmem:[#allocation2 + $0x30] sm:$0xff] %vm169, 0.0
        %178 = vst.msk [vmem:[#allocation2 + $0x38] sm:$0xff] %vm169, 0.0
        %179 = vst.msk [vmem:[#allocation2 + $0x40] sm:$0x3] %vm172, 0.0
        %180 = vst.msk [vmem:[#allocation2 + $0x48] sm:$0xff] %vm169, 0.0
        %181 = vst.msk [vmem:[#allocation2 + $0x50] sm:$0xff] %vm169, 0.0
        %182 = vst.msk [vmem:[#allocation2 + $0x58] sm:$0x3] %vm172, 0.0
        %183 = vst.msk [vmem:[#allocation2 + $0x60] sm:$0xff] %vm169, 0.0
        %184 = vst.msk [vmem:[#allocation2 + $0x68] sm:$0xff] %vm169, 0.0
        %185 = vst.msk [vmem:[#allocation2 + $0x70] sm:$0x3] %vm172, 0.0
        %186 = vst.msk [vmem:[#allocation2 + $0x78] sm:$0xff] %vm169, 0.0
        %187 = vst.msk [vmem:[#allocation2 + $0x80] sm:$0xff] %vm169, 0.0
        %188 = vst.msk [vmem:[#allocation2 + $0x88] sm:$0x3] %vm172, 0.0
        %189 = vst.msk [vmem:[#allocation2 + $0x90] sm:$0xff] %vm169, 0.0
        %190 = vst.msk [vmem:[#allocation2 + $0x98] sm:$0xff] %vm169, 0.0
        %191 = vst.msk [vmem:[#allocation2 + $0xa0] sm:$0x3] %vm172, 0.0
        %192 = vst.msk [vmem:[#allocation2 + $0xa8] sm:$0xff] %vm169, 0.0
        %193 = vst.msk [vmem:[#allocation2 + $0xb0] sm:$0xff] %vm169, 0.0
        %194 = vst.msk [vmem:[#allocation2 + $0xb8] sm:$0x3] %vm172, 0.0
        %195 = vst.msk [vmem:[#allocation2 + $0xc0] sm:$0xff] %vm169, 0.0
        %196 = vst.msk [vmem:[#allocation2 + $0xc8] sm:$0xff] %vm169, 0.0
        %197 = vst.msk [vmem:[#allocation2 + $0xd0] sm:$0x3] %vm172, 0.0
        %198 = vst.msk [vmem:[#allocation2 + $0xd8] sm:$0xff] %vm169, 0.0
        %199 = vst.msk [vmem:[#allocation2 + $0xe0] sm:$0xff] %vm169, 0.0
        %200 = vst.msk [vmem:[#allocation2 + $0xe8] sm:$0x3] %vm172, 0.0
        %201 = vst.msk [vmem:[#allocation2 + $0xf0] sm:$0xff] %vm169, 0.0
        %202 = vst.msk [vmem:[#allocation2 + $0xf8] sm:$0xff] %vm169, 0.0
        %203 = vst.msk [vmem:[#allocation2 + $0x100] sm:$0x3] %vm172, 0.0
        %204 = vst.msk [vmem:[#allocation2 + $0x108] sm:$0xff] %vm169, 0.0
        %205 = vst.msk [vmem:[#allocation2 + $0x110] sm:$0xff] %vm169, 0.0
        %206 = vst.msk [vmem:[#allocation2 + $0x118] sm:$0x3] %vm172, 0.0
        %207 = vst.msk [vmem:[#allocation2 + $0x120] sm:$0xff] %vm169, 0.0
        %208 = vst.msk [vmem:[#allocation2 + $0x128] sm:$0xff] %vm169, 0.0
        %209 = vst.msk [vmem:[#allocation2 + $0x130] sm:$0x3] %vm172, 0.0
        %210 = vst.msk [vmem:[#allocation2 + $0x138] sm:$0xff] %vm169, 0.0
        %211 = vst.msk [vmem:[#allocation2 + $0x140] sm:$0xff] %vm169, 0.0
        %212 = vst.msk [vmem:[#allocation2 + $0x148] sm:$0x3] %vm172, 0.0
        %213 = vst.msk [vmem:[#allocation2 + $0x150] sm:$0xff] %vm169, 0.0
        %214 = vst.msk [vmem:[#allocation2 + $0x158] sm:$0xff] %vm169, 0.0
        %215 = vst.msk [vmem:[#allocation2 + $0x160] sm:$0x3] %vm172, 0.0
        %216 = vst.msk [vmem:[#allocation2 + $0x168] sm:$0xff] %vm169, 0.0
        %217 = vst.msk [vmem:[#allocation2 + $0x170] sm:$0xff] %vm169, 0.0
        %218 = vst.msk [vmem:[#allocation2 + $0x178] sm:$0x3] %vm172, 0.0
        %219 = vst.msk [vmem:[#allocation2 + $0x180] sm:$0xff] %vm169, 0.0
        %220 = vst.msk [vmem:[#allocation2 + $0x188] sm:$0xff] %vm169, 0.0
        %221 = vst.msk [vmem:[#allocation2 + $0x190] sm:$0x3] %vm172, 0.0
        %222 = vst.msk [vmem:[#allocation2 + $0x198] sm:$0xff] %vm169, 0.0
        %223 = vst.msk [vmem:[#allocation2 + $0x1a0] sm:$0xff] %vm169, 0.0
        %224 = vst.msk [vmem:[#allocation2 + $0x1a8] sm:$0x3] %vm172, 0.0
        %225 = vst.msk [vmem:[#allocation3] sm:$0xff] %vm169, 0.0
        %226 = vst.msk [vmem:[#allocation3 + $0x8] sm:$0xff] %vm169, 0.0
        %227 = vst.msk [vmem:[#allocation3 + $0x10] sm:$0x3] %vm172, 0.0
        %228 = vst.msk [vmem:[#allocation3 + $0x18] sm:$0xff] %vm169, 0.0
        %229 = vst.msk [vmem:[#allocation3 + $0x20] sm:$0xff] %vm169, 0.0
        %230 = vst.msk [vmem:[#allocation3 + $0x28] sm:$0x3] %vm172, 0.0
        %231 = vst.msk [vmem:[#allocation3 + $0x30] sm:$0xff] %vm169, 0.0
        %232 = vst.msk [vmem:[#allocation3 + $0x38] sm:$0xff] %vm169, 0.0
        %233 = vst.msk [vmem:[#allocation3 + $0x40] sm:$0x3] %vm172, 0.0
        %234 = vst.msk [vmem:[#allocation3 + $0x48] sm:$0xff] %vm169, 0.0
        %235 = vst.msk [vmem:[#allocation3 + $0x50] sm:$0xff] %vm169, 0.0
        %236 = vst.msk [vmem:[#allocation3 + $0x58] sm:$0x3] %vm172, 0.0
        %237 = vst.msk [vmem:[#allocation3 + $0x60] sm:$0xff] %vm169, 0.0
        %238 = vst.msk [vmem:[#allocation3 + $0x68] sm:$0xff] %vm169, 0.0
        %239 = vst.msk [vmem:[#allocation3 + $0x70] sm:$0x3] %vm172, 0.0
        %240 = vst.msk [vmem:[#allocation3 + $0x78] sm:$0xff] %vm169, 0.0
        %241 = vst.msk [vmem:[#allocation3 + $0x80] sm:$0xff] %vm169, 0.0
        %242 = vst.msk [vmem:[#allocation3 + $0x88] sm:$0x3] %vm172, 0.0
        %243 = vst.msk [vmem:[#allocation3 + $0x90] sm:$0xff] %vm169, 0.0
        %244 = vst.msk [vmem:[#allocation3 + $0x98] sm:$0xff] %vm169, 0.0
        %245 = vst.msk [vmem:[#allocation3 + $0xa0] sm:$0x3] %vm172, 0.0
        %246 = vst.msk [vmem:[#allocation3 + $0xa8] sm:$0xff] %vm169, 0.0
        %247 = vst.msk [vmem:[#allocation3 + $0xb0] sm:$0xff] %vm169, 0.0
        %248 = vst.msk [vmem:[#allocation3 + $0xb8] sm:$0x3] %vm172, 0.0
        %249 = vst.msk [vmem:[#allocation3 + $0xc0] sm:$0xff] %vm169, 0.0
        %250 = vst.msk [vmem:[#allocation3 + $0xc8] sm:$0xff] %vm169, 0.0
        %251 = vst.msk [vmem:[#allocation3 + $0xd0] sm:$0x3] %vm172, 0.0
        %252 = vst.msk [vmem:[#allocation3 + $0xd8] sm:$0xff] %vm169, 0.0
        %253 = vst.msk [vmem:[#allocation3 + $0xe0] sm:$0xff] %vm169, 0.0
        %254 = vst.msk [vmem:[#allocation3 + $0xe8] sm:$0x3] %vm172, 0.0
        %255 = vst.msk [vmem:[#allocation3 + $0xf0] sm:$0xff] %vm169, 0.0
        %256 = vst.msk [vmem:[#allocation3 + $0xf8] sm:$0xff] %vm169, 0.0
        %257 = vst.msk [vmem:[#allocation3 + $0x100] sm:$0x3] %vm172, 0.0
        %258 = vst.msk [vmem:[#allocation3 + $0x108] sm:$0xff] %vm169, 0.0
        %259 = vst.msk [vmem:[#allocation3 + $0x110] sm:$0xff] %vm169, 0.0
        %260 = vst.msk [vmem:[#allocation3 + $0x118] sm:$0x3] %vm172, 0.0
        %261 = vst.msk [vmem:[#allocation3 + $0x120] sm:$0xff] %vm169, 0.0
        %262 = vst.msk [vmem:[#allocation3 + $0x128] sm:$0xff] %vm169, 0.0
        %263 = vst.msk [vmem:[#allocation3 + $0x130] sm:$0x3] %vm172, 0.0
        %264 = vst.msk [vmem:[#allocation3 + $0x138] sm:$0xff] %vm169, 0.0
        %265 = vst.msk [vmem:[#allocation3 + $0x140] sm:$0xff] %vm169, 0.0
        %266 = vst.msk [vmem:[#allocation3 + $0x148] sm:$0x3] %vm172, 0.0
        %267 = vst.msk [vmem:[#allocation3 + $0x150] sm:$0xff] %vm169, 0.0
        %268 = vst.msk [vmem:[#allocation3 + $0x158] sm:$0xff] %vm169, 0.0
        %269 = vst.msk [vmem:[#allocation3 + $0x160] sm:$0x3] %vm172, 0.0
        %270 = vst.msk [vmem:[#allocation3 + $0x168] sm:$0xff] %vm169, 0.0
        %271 = vst.msk [vmem:[#allocation3 + $0x170] sm:$0xff] %vm169, 0.0
        %272 = vst.msk [vmem:[#allocation3 + $0x178] sm:$0x3] %vm172, 0.0
        %273 = vst.msk [vmem:[#allocation3 + $0x180] sm:$0xff] %vm169, 0.0
        %274 = vst.msk [vmem:[#allocation3 + $0x188] sm:$0xff] %vm169, 0.0
        %275 = vst.msk [vmem:[#allocation3 + $0x190] sm:$0x3] %vm172, 0.0
        %276 = vst.msk [vmem:[#allocation3 + $0x198] sm:$0xff] %vm169, 0.0
        %277 = vst.msk [vmem:[#allocation3 + $0x1a0] sm:$0xff] %vm169, 0.0
        %278 = vst.msk [vmem:[#allocation3 + $0x1a8] sm:$0x3] %vm172, 0.0
        %v279 = vld [vmem:[%s168] sm:$0xff]
        %v280 = vld [vmem:[%s168 + $0x8] sm:$0xff]
        %v281 = vld [vmem:[%s168 + $0x10] sm:$0xff]
        %v282 = vld [vmem:[%s168 + $0x18] sm:$0xff]
        %v283 = vld [vmem:[%s168 + $0x20] sm:$0xff]
        %v284 = vld [vmem:[%s168 + $0x28] sm:$0xff]
        %v285 = vld [vmem:[%s168 + $0x30] sm:$0xff]
        %v286 = vld [vmem:[%s168 + $0x38] sm:$0xff]
        %v287 = vld [vmem:[%s168 + $0x40] sm:$0xff]
        %v288 = vld [vmem:[%s168 + $0x48] sm:$0xff]
        %v289 = vld [vmem:[%s168 + $0x50] sm:$0xff]
        %v290 = vld [vmem:[%s168 + $0x58] sm:$0xff]
        %v291 = vld [vmem:[%s168 + $0x60] sm:$0xff]
        %v292 = vld [vmem:[%s168 + $0x68] sm:$0xff]
        %v293 = vld [vmem:[%s168 + $0x70] sm:$0xff]
        %v294 = vld [vmem:[%s168 + $0x78] sm:$0xff]
        %v295 = vld [vmem:[%s168 + $0x80] sm:$0xff]
        %v296 = vld [vmem:[%s168 + $0x88] sm:$0xff]
        %v297 = vld [vmem:[%s168 + $0x90] sm:$0xff]
        %v298 = vld [vmem:[%s168 + $0x98] sm:$0xff]
        %v299 = vld [vmem:[%s168 + $0xa0] sm:$0xff]
        %v300 = vld [vmem:[%s168 + $0xa8] sm:$0xff]
        %v301 = vld [vmem:[%s168 + $0xb0] sm:$0xff]
        %v302 = vld [vmem:[%s168 + $0xb8] sm:$0xff]
        %v303 = vld [vmem:[%s168 + $0xc0] sm:$0xff]
        %v304 = vld [vmem:[%s168 + $0xc8] sm:$0xff]
        %v305 = vld [vmem:[%s168 + $0xd0] sm:$0xff]
        %v306 = vld [vmem:[%s168 + $0xd8] sm:$0xff]
        %v307 = vld [vmem:[%s168 + $0xe0] sm:$0xff]
        %v308 = vld [vmem:[%s168 + $0xe8] sm:$0xff]
        %v309 = vld [vmem:[%s168 + $0xf0] sm:$0xff]
        %v310 = vld [vmem:[%s168 + $0xf8] sm:$0xff]
        %s311 = scalar_lea.vmem [#allocation2], 24
        %312 = vst.msk [vmem:[%s311 + $0x1] sm:$0xff] %vm169, %v279
        %313 = vst.msk [vmem:[%s311 + $0x9] sm:$0xff] %vm169, %v280
        %314 = vst.msk [vmem:[%s311 + $0x19] sm:$0xff] %vm169, %v281
        %315 = vst.msk [vmem:[%s311 + $0x21] sm:$0xff] %vm169, %v282
        %316 = vst.msk [vmem:[%s311 + $0x31] sm:$0xff] %vm169, %v283
        %317 = vst.msk [vmem:[%s311 + $0x39] sm:$0xff] %vm169, %v284
        %318 = vst.msk [vmem:[%s311 + $0x49] sm:$0xff] %vm169, %v285
        %319 = vst.msk [vmem:[%s311 + $0x51] sm:$0xff] %vm169, %v286
        %320 = vst.msk [vmem:[%s311 + $0x61] sm:$0xff] %vm169, %v287
        %321 = vst.msk [vmem:[%s311 + $0x69] sm:$0xff] %vm169, %v288
        %322 = vst.msk [vmem:[%s311 + $0x79] sm:$0xff] %vm169, %v289
        %323 = vst.msk [vmem:[%s311 + $0x81] sm:$0xff] %vm169, %v290
        %324 = vst.msk [vmem:[%s311 + $0x91] sm:$0xff] %vm169, %v291
        %325 = vst.msk [vmem:[%s311 + $0x99] sm:$0xff] %vm169, %v292
        %326 = vst.msk [vmem:[%s311 + $0xa9] sm:$0xff] %vm169, %v293
        %327 = vst.msk [vmem:[%s311 + $0xb1] sm:$0xff] %vm169, %v294
        %328 = vst.msk [vmem:[%s311 + $0xc1] sm:$0xff] %vm169, %v295
        %329 = vst.msk [vmem:[%s311 + $0xc9] sm:$0xff] %vm169, %v296
        %330 = vst.msk [vmem:[%s311 + $0xd9] sm:$0xff] %vm169, %v297
        %331 = vst.msk [vmem:[%s311 + $0xe1] sm:$0xff] %vm169, %v298
        %332 = vst.msk [vmem:[%s311 + $0xf1] sm:$0xff] %vm169, %v299
        %333 = vst.msk [vmem:[%s311 + $0xf9] sm:$0xff] %vm169, %v300
        %334 = vst.msk [vmem:[%s311 + $0x109] sm:$0xff] %vm169, %v301
        %335 = vst.msk [vmem:[%s311 + $0x111] sm:$0xff] %vm169, %v302
        %336 = vst.msk [vmem:[%s311 + $0x121] sm:$0xff] %vm169, %v303
        %337 = vst.msk [vmem:[%s311 + $0x129] sm:$0xff] %vm169, %v304
        %338 = vst.msk [vmem:[%s311 + $0x139] sm:$0xff] %vm169, %v305
        %339 = vst.msk [vmem:[%s311 + $0x141] sm:$0xff] %vm169, %v306
        %340 = vst.msk [vmem:[%s311 + $0x151] sm:$0xff] %vm169, %v307
        %341 = vst.msk [vmem:[%s311 + $0x159] sm:$0xff] %vm169, %v308
        %342 = vst.msk [vmem:[%s311 + $0x169] sm:$0xff] %vm169, %v309
        %343 = vst.msk [vmem:[%s311 + $0x171] sm:$0xff] %vm169, %v310
        %v344 = vld [vmem:[%s1] sm:$0xff]
        %v345 = vld [vmem:[%s1 + $0x8] sm:$0xff]
        %v346 = vld [vmem:[%s1 + $0x10] sm:$0xff]
        %v347 = vld [vmem:[%s1 + $0x18] sm:$0xff]
        %v348 = vld [vmem:[%s1 + $0x20] sm:$0xff]
        %v349 = vld [vmem:[%s1 + $0x28] sm:$0xff]
        %v350 = vld [vmem:[%s1 + $0x30] sm:$0xff]
        %v351 = vld [vmem:[%s1 + $0x38] sm:$0xff]
        %v352 = vld [vmem:[%s1 + $0x40] sm:$0xff]
        %v353 = vld [vmem:[%s1 + $0x48] sm:$0xff]
        %v354 = vld [vmem:[%s1 + $0x50] sm:$0xff]
        %v355 = vld [vmem:[%s1 + $0x58] sm:$0xff]
        %v356 = vld [vmem:[%s1 + $0x60] sm:$0xff]
        %v357 = vld [vmem:[%s1 + $0x68] sm:$0xff]
        %v358 = vld [vmem:[%s1 + $0x70] sm:$0xff]
        %v359 = vld [vmem:[%s1 + $0x78] sm:$0xff]
        %v360 = vld [vmem:[%s1 + $0x80] sm:$0xff]
        %v361 = vld [vmem:[%s1 + $0x88] sm:$0xff]
        %v362 = vld [vmem:[%s1 + $0x90] sm:$0xff]
        %v363 = vld [vmem:[%s1 + $0x98] sm:$0xff]
        %v364 = vld [vmem:[%s1 + $0xa0] sm:$0xff]
        %v365 = vld [vmem:[%s1 + $0xa8] sm:$0xff]
        %v366 = vld [vmem:[%s1 + $0xb0] sm:$0xff]
        %v367 = vld [vmem:[%s1 + $0xb8] sm:$0xff]
        %v368 = vld [vmem:[%s1 + $0xc0] sm:$0xff]
        %v369 = vld [vmem:[%s1 + $0xc8] sm:$0xff]
        %v370 = vld [vmem:[%s1 + $0xd0] sm:$0xff]
        %v371 = vld [vmem:[%s1 + $0xd8] sm:$0xff]
        %v372 = vld [vmem:[%s1 + $0xe0] sm:$0xff]
        %v373 = vld [vmem:[%s1 + $0xe8] sm:$0xff]
        %v374 = vld [vmem:[%s1 + $0xf0] sm:$0xff]
        %v375 = vld [vmem:[%s1 + $0xf8] sm:$0xff]
        %v376 = vld [vmem:[%s1 + $0x100] sm:$0xff]
        %v377 = vld [vmem:[%s1 + $0x108] sm:$0xff]
        %v378 = vld [vmem:[%s1 + $0x110] sm:$0xff]
        %v379 = vld [vmem:[%s1 + $0x118] sm:$0xff]
        %v380 = vld [vmem:[%s1 + $0x120] sm:$0xff]
        %v381 = vld [vmem:[%s1 + $0x128] sm:$0xff]
        %v382 = vld [vmem:[%s1 + $0x130] sm:$0xff]
        %v383 = vld [vmem:[%s1 + $0x138] sm:$0xff]
        %v384 = vld [vmem:[%s1 + $0x140] sm:$0xff]
        %v385 = vld [vmem:[%s1 + $0x148] sm:$0xff]
        %v386 = vld [vmem:[%s1 + $0x150] sm:$0xff]
        %v387 = vld [vmem:[%s1 + $0x158] sm:$0xff]
        %v388 = vld [vmem:[%s1 + $0x160] sm:$0xff]
        %v389 = vld [vmem:[%s1 + $0x168] sm:$0xff]
        %v390 = vld [vmem:[%s1 + $0x170] sm:$0xff]
        %v391 = vld [vmem:[%s1 + $0x178] sm:$0xff]
        %v392 = vld [vmem:[%s1 + $0x180] sm:$0xff]
        %v393 = vld [vmem:[%s1 + $0x188] sm:$0xff]
        %v394 = vld [vmem:[%s1 + $0x190] sm:$0xff]
        %v395 = vld [vmem:[%s1 + $0x198] sm:$0xff]
        %v396 = vld [vmem:[%s1 + $0x1a0] sm:$0xff]
        %v397 = vld [vmem:[%s1 + $0x1a8] sm:$0xff]
        %v398 = vld [vmem:[%s1 + $0x1b0] sm:$0xff]
        %v399 = vld [vmem:[%s1 + $0x1b8] sm:$0xff]
        %v400 = vld [vmem:[%s1 + $0x1c0] sm:$0xff]
        %v401 = vld [vmem:[%s1 + $0x1c8] sm:$0xff]
        %v402 = vld [vmem:[%s1 + $0x1d0] sm:$0xff]
        %v403 = vld [vmem:[%s1 + $0x1d8] sm:$0xff]
        %v404 = vld [vmem:[%s1 + $0x1e0] sm:$0xff]
        %v405 = vld [vmem:[%s1 + $0x1e8] sm:$0xff]
        %v406 = vld [vmem:[%s1 + $0x1f0] sm:$0xff]
        %v407 = vld [vmem:[%s1 + $0x1f8] sm:$0xff]
        %v408 = vld [vmem:[%s1 + $0x200] sm:$0xff]
        %v409 = vld [vmem:[%s1 + $0x208] sm:$0xff]
        %v410 = vld [vmem:[%s1 + $0x210] sm:$0xff]
        %v411 = vld [vmem:[%s1 + $0x218] sm:$0xff]
        %v412 = vld [vmem:[%s1 + $0x220] sm:$0xff]
        %v413 = vld [vmem:[%s1 + $0x228] sm:$0xff]
        %v414 = vld [vmem:[%s1 + $0x230] sm:$0xff]
        %v415 = vld [vmem:[%s1 + $0x238] sm:$0xff]
        %v416 = vld [vmem:[#allocation2] sm:$0xff]
        %v417 = vld [vmem:[#allocation2 + $0x8] sm:$0xff]
        %v418 = vld [vmem:[#allocation2 + $0x18] sm:$0xff]
        %v419 = vld [vmem:[#allocation2 + $0x20] sm:$0xff]
        %v420 = vld [vmem:[#allocation2 + $0x30] sm:$0xff]
        %v421 = vld [vmem:[#allocation2 + $0x38] sm:$0xff]
        %v422 = vld [vmem:[#allocation2 + $0x48] sm:$0xff]
        %v423 = vld [vmem:[#allocation2 + $0x50] sm:$0xff]
        %v424 = vld [vmem:[#allocation2 + $0x60] sm:$0xff]
        %v425 = vld [vmem:[#allocation2 + $0x68] sm:$0xff]
        %v426 = vld [vmem:[#allocation2 + $0x78] sm:$0xff]
        %v427 = vld [vmem:[#allocation2 + $0x80] sm:$0xff]
        %v428 = vld [vmem:[#allocation2 + $0x90] sm:$0xff]
        %v429 = vld [vmem:[#allocation2 + $0x98] sm:$0xff]
        %v430 = vld [vmem:[#allocation2 + $0xa8] sm:$0xff]
        %v431 = vld [vmem:[#allocation2 + $0xb0] sm:$0xff]
        %v432 = vld [vmem:[#allocation2 + $0xc0] sm:$0xff]
        %v433 = vld [vmem:[#allocation2 + $0xc8] sm:$0xff]
        %v434 = vld [vmem:[#allocation2 + $0xd8] sm:$0xff]
        %v435 = vld [vmem:[#allocation2 + $0xe0] sm:$0xff]
        %v436 = vld [vmem:[#allocation2 + $0xf0] sm:$0xff]
        %v437 = vld [vmem:[#allocation2 + $0xf8] sm:$0xff]
        %v438 = vld [vmem:[#allocation2 + $0x108] sm:$0xff]
        %v439 = vld [vmem:[#allocation2 + $0x110] sm:$0xff]
        %v440 = vld [vmem:[#allocation2 + $0x120] sm:$0xff]
        %v441 = vld [vmem:[#allocation2 + $0x128] sm:$0xff]
        %v442 = vld [vmem:[#allocation2 + $0x138] sm:$0xff]
        %v443 = vld [vmem:[#allocation2 + $0x140] sm:$0xff]
        %v444 = vld [vmem:[#allocation2 + $0x150] sm:$0xff]
        %v445 = vld [vmem:[#allocation2 + $0x158] sm:$0xff]
        %v446 = vld [vmem:[#allocation2 + $0x168] sm:$0xff]
        %v447 = vld [vmem:[#allocation2 + $0x170] sm:$0xff]
        %v448 = vld [vmem:[#allocation2 + $0x1] sm:$0xff]
        %v449 = vld [vmem:[#allocation2 + $0x9] sm:$0xff]
        %v450 = vld [vmem:[#allocation2 + $0x19] sm:$0xff]
        %v451 = vld [vmem:[#allocation2 + $0x21] sm:$0xff]
        %v452 = vld [vmem:[#allocation2 + $0x31] sm:$0xff]
        %v453 = vld [vmem:[#allocation2 + $0x39] sm:$0xff]
        %v454 = vld [vmem:[#allocation2 + $0x49] sm:$0xff]
        %v455 = vld [vmem:[#allocation2 + $0x51] sm:$0xff]
        %v456 = vld [vmem:[#allocation2 + $0x61] sm:$0xff]
        %v457 = vld [vmem:[#allocation2 + $0x69] sm:$0xff]
        %v458 = vld [vmem:[#allocation2 + $0x79] sm:$0xff]
        %v459 = vld [vmem:[#allocation2 + $0x81] sm:$0xff]
        %v460 = vld [vmem:[#allocation2 + $0x91] sm:$0xff]
        %v461 = vld [vmem:[#allocation2 + $0x99] sm:$0xff]
        %v462 = vld [vmem:[#allocation2 + $0xa9] sm:$0xff]
        %v463 = vld [vmem:[#allocation2 + $0xb1] sm:$0xff]
        %v464 = vld [vmem:[#allocation2 + $0xc1] sm:$0xff]
        %v465 = vld [vmem:[#allocation2 + $0xc9] sm:$0xff]
        %v466 = vld [vmem:[#allocation2 + $0xd9] sm:$0xff]
        %v467 = vld [vmem:[#allocation2 + $0xe1] sm:$0xff]
        %v468 = vld [vmem:[#allocation2 + $0xf1] sm:$0xff]
        %v469 = vld [vmem:[#allocation2 + $0xf9] sm:$0xff]
        %v470 = vld [vmem:[#allocation2 + $0x109] sm:$0xff]
        %v471 = vld [vmem:[#allocation2 + $0x111] sm:$0xff]
        %v472 = vld [vmem:[#allocation2 + $0x121] sm:$0xff]
        %v473 = vld [vmem:[#allocation2 + $0x129] sm:$0xff]
        %v474 = vld [vmem:[#allocation2 + $0x139] sm:$0xff]
        %v475 = vld [vmem:[#allocation2 + $0x141] sm:$0xff]
        %v476 = vld [vmem:[#allocation2 + $0x151] sm:$0xff]
        %v477 = vld [vmem:[#allocation2 + $0x159] sm:$0xff]
        %v478 = vld [vmem:[#allocation2 + $0x169] sm:$0xff]
        %v479 = vld [vmem:[#allocation2 + $0x171] sm:$0xff]
        %v480 = vld [vmem:[#allocation2 + $0x2] sm:$0xff]
        %v481 = vld [vmem:[#allocation2 + $0xa] sm:$0xff]
        %v482 = vld [vmem:[#allocation2 + $0x1a] sm:$0xff]
        %v483 = vld [vmem:[#allocation2 + $0x22] sm:$0xff]
        %v484 = vld [vmem:[#allocation2 + $0x32] sm:$0xff]
        %v485 = vld [vmem:[#allocation2 + $0x3a] sm:$0xff]
        %v486 = vld [vmem:[#allocation2 + $0x4a] sm:$0xff]
        %v487 = vld [vmem:[#allocation2 + $0x52] sm:$0xff]
        %v488 = vld [vmem:[#allocation2 + $0x62] sm:$0xff]
        %v489 = vld [vmem:[#allocation2 + $0x6a] sm:$0xff]
        %v490 = vld [vmem:[#allocation2 + $0x7a] sm:$0xff]
        %v491 = vld [vmem:[#allocation2 + $0x82] sm:$0xff]
        %v492 = vld [vmem:[#allocation2 + $0x92] sm:$0xff]
        %v493 = vld [vmem:[#allocation2 + $0x9a] sm:$0xff]
        %v494 = vld [vmem:[#allocation2 + $0xaa] sm:$0xff]
        %v495 = vld [vmem:[#allocation2 + $0xb2] sm:$0xff]
        %v496 = vld [vmem:[#allocation2 + $0xc2] sm:$0xff]
        %v497 = vld [vmem:[#allocation2 + $0xca] sm:$0xff]
        %v498 = vld [vmem:[#allocation2 + $0xda] sm:$0xff]
        %v499 = vld [vmem:[#allocation2 + $0xe2] sm:$0xff]
        %v500 = vld [vmem:[#allocation2 + $0xf2] sm:$0xff]
        %v501 = vld [vmem:[#allocation2 + $0xfa] sm:$0xff]
        %v502 = vld [vmem:[#allocation2 + $0x10a] sm:$0xff]
        %v503 = vld [vmem:[#allocation2 + $0x112] sm:$0xff]
        %v504 = vld [vmem:[#allocation2 + $0x122] sm:$0xff]
        %v505 = vld [vmem:[#allocation2 + $0x12a] sm:$0xff]
        %v506 = vld [vmem:[#allocation2 + $0x13a] sm:$0xff]
        %v507 = vld [vmem:[#allocation2 + $0x142] sm:$0xff]
        %v508 = vld [vmem:[#allocation2 + $0x152] sm:$0xff]
        %v509 = vld [vmem:[#allocation2 + $0x15a] sm:$0xff]
        %v510 = vld [vmem:[#allocation2 + $0x16a] sm:$0xff]
        %v511 = vld [vmem:[#allocation2 + $0x172] sm:$0xff]
        %v512 = vld [vmem:[%s311] sm:$0xff]
        %v513 = vld [vmem:[%s311 + $0x8] sm:$0xff]
        %v514 = vld [vmem:[%s311 + $0x18] sm:$0xff]
        %v515 = vld [vmem:[%s311 + $0x20] sm:$0xff]
        %v516 = vld [vmem:[%s311 + $0x30] sm:$0xff]
        %v517 = vld [vmem:[%s311 + $0x38] sm:$0xff]
        %v518 = vld [vmem:[%s311 + $0x48] sm:$0xff]
        %v519 = vld [vmem:[%s311 + $0x50] sm:$0xff]
        %v520 = vld [vmem:[%s311 + $0x60] sm:$0xff]
        %v521 = vld [vmem:[%s311 + $0x68] sm:$0xff]
        %v522 = vld [vmem:[%s311 + $0x78] sm:$0xff]
        %v523 = vld [vmem:[%s311 + $0x80] sm:$0xff]
        %v524 = vld [vmem:[%s311 + $0x90] sm:$0xff]
        %v525 = vld [vmem:[%s311 + $0x98] sm:$0xff]
        %v526 = vld [vmem:[%s311 + $0xa8] sm:$0xff]
        %v527 = vld [vmem:[%s311 + $0xb0] sm:$0xff]
        %v528 = vld [vmem:[%s311 + $0xc0] sm:$0xff]
        %v529 = vld [vmem:[%s311 + $0xc8] sm:$0xff]
        %v530 = vld [vmem:[%s311 + $0xd8] sm:$0xff]
        %v531 = vld [vmem:[%s311 + $0xe0] sm:$0xff]
        %v532 = vld [vmem:[%s311 + $0xf0] sm:$0xff]
        %v533 = vld [vmem:[%s311 + $0xf8] sm:$0xff]
        %v534 = vld [vmem:[%s311 + $0x108] sm:$0xff]
        %v535 = vld [vmem:[%s311 + $0x110] sm:$0xff]
        %v536 = vld [vmem:[%s311 + $0x120] sm:$0xff]
        %v537 = vld [vmem:[%s311 + $0x128] sm:$0xff]
        %v538 = vld [vmem:[%s311 + $0x138] sm:$0xff]
        %v539 = vld [vmem:[%s311 + $0x140] sm:$0xff]
        %v540 = vld [vmem:[%s311 + $0x150] sm:$0xff]
        %v541 = vld [vmem:[%s311 + $0x158] sm:$0xff]
        %v542 = vld [vmem:[%s311 + $0x168] sm:$0xff]
        %v543 = vld [vmem:[%s311 + $0x170] sm:$0xff]
        %v544 = vld [vmem:[%s311 + $0x1] sm:$0xff]
        %v545 = vld [vmem:[%s311 + $0x9] sm:$0xff]
        %v546 = vld [vmem:[%s311 + $0x19] sm:$0xff]
        %v547 = vld [vmem:[%s311 + $0x21] sm:$0xff]
        %v548 = vld [vmem:[%s311 + $0x31] sm:$0xff]
        %v549 = vld [vmem:[%s311 + $0x39] sm:$0xff]
        %v550 = vld [vmem:[%s311 + $0x49] sm:$0xff]
        %v551 = vld [vmem:[%s311 + $0x51] sm:$0xff]
        %v552 = vld [vmem:[%s311 + $0x61] sm:$0xff]
        %v553 = vld [vmem:[%s311 + $0x69] sm:$0xff]
        %v554 = vld [vmem:[%s311 + $0x79] sm:$0xff]
        %v555 = vld [vmem:[%s311 + $0x81] sm:$0xff]
        %v556 = vld [vmem:[%s311 + $0x91] sm:$0xff]
        %v557 = vld [vmem:[%s311 + $0x99] sm:$0xff]
        %v558 = vld [vmem:[%s311 + $0xa9] sm:$0xff]
        %v559 = vld [vmem:[%s311 + $0xb1] sm:$0xff]
        %v560 = vld [vmem:[%s311 + $0xc1] sm:$0xff]
        %v561 = vld [vmem:[%s311 + $0xc9] sm:$0xff]
        %v562 = vld [vmem:[%s311 + $0xd9] sm:$0xff]
        %v563 = vld [vmem:[%s311 + $0xe1] sm:$0xff]
        %v564 = vld [vmem:[%s311 + $0xf1] sm:$0xff]
        %v565 = vld [vmem:[%s311 + $0xf9] sm:$0xff]
        %v566 = vld [vmem:[%s311 + $0x109] sm:$0xff]
        %v567 = vld [vmem:[%s311 + $0x111] sm:$0xff]
        %v568 = vld [vmem:[%s311 + $0x121] sm:$0xff]
        %v569 = vld [vmem:[%s311 + $0x129] sm:$0xff]
        %v570 = vld [vmem:[%s311 + $0x139] sm:$0xff]
        %v571 = vld [vmem:[%s311 + $0x141] sm:$0xff]
        %v572 = vld [vmem:[%s311 + $0x151] sm:$0xff]
        %v573 = vld [vmem:[%s311 + $0x159] sm:$0xff]
        %v574 = vld [vmem:[%s311 + $0x169] sm:$0xff]
        %v575 = vld [vmem:[%s311 + $0x171] sm:$0xff]
        %v576 = vld [vmem:[%s311 + $0x2] sm:$0xff]
        %v577 = vld [vmem:[%s311 + $0xa] sm:$0xff]
        %v578 = vld [vmem:[%s311 + $0x1a] sm:$0xff]
        %v579 = vld [vmem:[%s311 + $0x22] sm:$0xff]
        %v580 = vld [vmem:[%s311 + $0x32] sm:$0xff]
        %v581 = vld [vmem:[%s311 + $0x3a] sm:$0xff]
        %v582 = vld [vmem:[%s311 + $0x4a] sm:$0xff]
        %v583 = vld [vmem:[%s311 + $0x52] sm:$0xff]
        %v584 = vld [vmem:[%s311 + $0x62] sm:$0xff]
        %v585 = vld [vmem:[%s311 + $0x6a] sm:$0xff]
        %v586 = vld [vmem:[%s311 + $0x7a] sm:$0xff]
        %v587 = vld [vmem:[%s311 + $0x82] sm:$0xff]
        %v588 = vld [vmem:[%s311 + $0x92] sm:$0xff]
        %v589 = vld [vmem:[%s311 + $0x9a] sm:$0xff]
        %v590 = vld [vmem:[%s311 + $0xaa] sm:$0xff]
        %v591 = vld [vmem:[%s311 + $0xb2] sm:$0xff]
        %v592 = vld [vmem:[%s311 + $0xc2] sm:$0xff]
        %v593 = vld [vmem:[%s311 + $0xca] sm:$0xff]
        %v594 = vld [vmem:[%s311 + $0xda] sm:$0xff]
        %v595 = vld [vmem:[%s311 + $0xe2] sm:$0xff]
        %v596 = vld [vmem:[%s311 + $0xf2] sm:$0xff]
        %v597 = vld [vmem:[%s311 + $0xfa] sm:$0xff]
        %v598 = vld [vmem:[%s311 + $0x10a] sm:$0xff]
        %v599 = vld [vmem:[%s311 + $0x112] sm:$0xff]
        %v600 = vld [vmem:[%s311 + $0x122] sm:$0xff]
        %v601 = vld [vmem:[%s311 + $0x12a] sm:$0xff]
        %v602 = vld [vmem:[%s311 + $0x13a] sm:$0xff]
        %v603 = vld [vmem:[%s311 + $0x142] sm:$0xff]
        %v604 = vld [vmem:[%s311 + $0x152] sm:$0xff]
        %v605 = vld [vmem:[%s311 + $0x15a] sm:$0xff]
        %v606 = vld [vmem:[%s311 + $0x16a] sm:$0xff]
        %v607 = vld [vmem:[%s311 + $0x172] sm:$0xff]
        %s608 = scalar_lea.vmem [#allocation2], 48
        %v609 = vld [vmem:[%s608] sm:$0xff]
        %v610 = vld [vmem:[%s608 + $0x8] sm:$0xff]
        %v611 = vld [vmem:[%s608 + $0x18] sm:$0xff]
        %v612 = vld [vmem:[%s608 + $0x20] sm:$0xff]
        %v613 = vld [vmem:[%s608 + $0x30] sm:$0xff]
        %v614 = vld [vmem:[%s608 + $0x38] sm:$0xff]
        %v615 = vld [vmem:[%s608 + $0x48] sm:$0xff]
        %v616 = vld [vmem:[%s608 + $0x50] sm:$0xff]
        %v617 = vld [vmem:[%s608 + $0x60] sm:$0xff]
        %v618 = vld [vmem:[%s608 + $0x68] sm:$0xff]
        %v619 = vld [vmem:[%s608 + $0x78] sm:$0xff]
        %v620 = vld [vmem:[%s608 + $0x80] sm:$0xff]
        %v621 = vld [vmem:[%s608 + $0x90] sm:$0xff]
        %v622 = vld [vmem:[%s608 + $0x98] sm:$0xff]
        %v623 = vld [vmem:[%s608 + $0xa8] sm:$0xff]
        %v624 = vld [vmem:[%s608 + $0xb0] sm:$0xff]
        %v625 = vld [vmem:[%s608 + $0xc0] sm:$0xff]
        %v626 = vld [vmem:[%s608 + $0xc8] sm:$0xff]
        %v627 = vld [vmem:[%s608 + $0xd8] sm:$0xff]
        %v628 = vld [vmem:[%s608 + $0xe0] sm:$0xff]
        %v629 = vld [vmem:[%s608 + $0xf0] sm:$0xff]
        %v630 = vld [vmem:[%s608 + $0xf8] sm:$0xff]
        %v631 = vld [vmem:[%s608 + $0x108] sm:$0xff]
        %v632 = vld [vmem:[%s608 + $0x110] sm:$0xff]
        %v633 = vld [vmem:[%s608 + $0x120] sm:$0xff]
        %v634 = vld [vmem:[%s608 + $0x128] sm:$0xff]
        %v635 = vld [vmem:[%s608 + $0x138] sm:$0xff]
        %v636 = vld [vmem:[%s608 + $0x140] sm:$0xff]
        %v637 = vld [vmem:[%s608 + $0x150] sm:$0xff]
        %v638 = vld [vmem:[%s608 + $0x158] sm:$0xff]
        %v639 = vld [vmem:[%s608 + $0x168] sm:$0xff]
        %v640 = vld [vmem:[%s608 + $0x170] sm:$0xff]
        %v641 = vld [vmem:[%s608 + $0x1] sm:$0xff]
        %v642 = vld [vmem:[%s608 + $0x9] sm:$0xff]
        %v643 = vld [vmem:[%s608 + $0x19] sm:$0xff]
        %v644 = vld [vmem:[%s608 + $0x21] sm:$0xff]
        %v645 = vld [vmem:[%s608 + $0x31] sm:$0xff]
        %v646 = vld [vmem:[%s608 + $0x39] sm:$0xff]
        %v647 = vld [vmem:[%s608 + $0x49] sm:$0xff]
        %v648 = vld [vmem:[%s608 + $0x51] sm:$0xff]
        %v649 = vld [vmem:[%s608 + $0x61] sm:$0xff]
        %v650 = vld [vmem:[%s608 + $0x69] sm:$0xff]
        %v651 = vld [vmem:[%s608 + $0x79] sm:$0xff]
        %v652 = vld [vmem:[%s608 + $0x81] sm:$0xff]
        %v653 = vld [vmem:[%s608 + $0x91] sm:$0xff]
        %v654 = vld [vmem:[%s608 + $0x99] sm:$0xff]
        %v655 = vld [vmem:[%s608 + $0xa9] sm:$0xff]
        %v656 = vld [vmem:[%s608 + $0xb1] sm:$0xff]
        %v657 = vld [vmem:[%s608 + $0xc1] sm:$0xff]
        %v658 = vld [vmem:[%s608 + $0xc9] sm:$0xff]
        %v659 = vld [vmem:[%s608 + $0xd9] sm:$0xff]
        %v660 = vld [vmem:[%s608 + $0xe1] sm:$0xff]
        %v661 = vld [vmem:[%s608 + $0xf1] sm:$0xff]
        %v662 = vld [vmem:[%s608 + $0xf9] sm:$0xff]
        %v663 = vld [vmem:[%s608 + $0x109] sm:$0xff]
        %v664 = vld [vmem:[%s608 + $0x111] sm:$0xff]
        %v665 = vld [vmem:[%s608 + $0x121] sm:$0xff]
        %v666 = vld [vmem:[%s608 + $0x129] sm:$0xff]
        %v667 = vld [vmem:[%s608 + $0x139] sm:$0xff]
        %v668 = vld [vmem:[%s608 + $0x141] sm:$0xff]
        %v669 = vld [vmem:[%s608 + $0x151] sm:$0xff]
        %v670 = vld [vmem:[%s608 + $0x159] sm:$0xff]
        %v671 = vld [vmem:[%s608 + $0x169] sm:$0xff]
        %v672 = vld [vmem:[%s608 + $0x171] sm:$0xff]
        %v673 = vld [vmem:[%s608 + $0x2] sm:$0xff]
        %v674 = vld [vmem:[%s608 + $0xa] sm:$0xff]
        %v675 = vld [vmem:[%s608 + $0x1a] sm:$0xff]
        %v676 = vld [vmem:[%s608 + $0x22] sm:$0xff]
        %v677 = vld [vmem:[%s608 + $0x32] sm:$0xff]
        %v678 = vld [vmem:[%s608 + $0x3a] sm:$0xff]
        %v679 = vld [vmem:[%s608 + $0x4a] sm:$0xff]
        %v680 = vld [vmem:[%s608 + $0x52] sm:$0xff]
        %v681 = vld [vmem:[%s608 + $0x62] sm:$0xff]
        %v682 = vld [vmem:[%s608 + $0x6a] sm:$0xff]
        %v683 = vld [vmem:[%s608 + $0x7a] sm:$0xff]
        %v684 = vld [vmem:[%s608 + $0x82] sm:$0xff]
        %v685 = vld [vmem:[%s608 + $0x92] sm:$0xff]
        %v686 = vld [vmem:[%s608 + $0x9a] sm:$0xff]
        %v687 = vld [vmem:[%s608 + $0xaa] sm:$0xff]
        %v688 = vld [vmem:[%s608 + $0xb2] sm:$0xff]
        %v689 = vld [vmem:[%s608 + $0xc2] sm:$0xff]
        %v690 = vld [vmem:[%s608 + $0xca] sm:$0xff]
        %v691 = vld [vmem:[%s608 + $0xda] sm:$0xff]
        %v692 = vld [vmem:[%s608 + $0xe2] sm:$0xff]
        %v693 = vld [vmem:[%s608 + $0xf2] sm:$0xff]
        %v694 = vld [vmem:[%s608 + $0xfa] sm:$0xff]
        %v695 = vld [vmem:[%s608 + $0x10a] sm:$0xff]
        %v696 = vld [vmem:[%s608 + $0x112] sm:$0xff]
        %v697 = vld [vmem:[%s608 + $0x122] sm:$0xff]
        %v698 = vld [vmem:[%s608 + $0x12a] sm:$0xff]
        %v699 = vld [vmem:[%s608 + $0x13a] sm:$0xff]
        %v700 = vld [vmem:[%s608 + $0x142] sm:$0xff]
        %v701 = vld [vmem:[%s608 + $0x152] sm:$0xff]
        %v702 = vld [vmem:[%s608 + $0x15a] sm:$0xff]
        %v703 = vld [vmem:[%s608 + $0x16a] sm:$0xff]
        %v704 = vld [vmem:[%s608 + $0x172] sm:$0xff]
        %737 = vrot.lane.b32.xlu0 %v448, 64
        %v738 = vpop.permute.xlu0 %737
        %739 = vrot.lane.b32.xlu0 %v449, 64
        %v740 = vpop.permute.xlu0 %739
        %741 = vrot.lane.b32.xlu0 %v450, 64
        %v742 = vpop.permute.xlu0 %741
        %743 = vrot.lane.b32.xlu0 %v451, 64
        %v744 = vpop.permute.xlu0 %743
        %745 = vrot.lane.b32.xlu0 %v452, 64
        %v746 = vpop.permute.xlu0 %745
        %747 = vrot.lane.b32.xlu0 %v453, 64
        %v748 = vpop.permute.xlu0 %747
        %749 = vrot.lane.b32.xlu0 %v454, 64
        %v750 = vpop.permute.xlu0 %749
        %751 = vrot.lane.b32.xlu0 %v455, 64
        %v752 = vpop.permute.xlu0 %751
        %753 = vrot.lane.b32.xlu0 %v456, 64
        %v754 = vpop.permute.xlu0 %753
        %755 = vrot.lane.b32.xlu0 %v457, 64
        %v756 = vpop.permute.xlu0 %755
        %757 = vrot.lane.b32.xlu0 %v458, 64
        %v758 = vpop.permute.xlu0 %757
        %759 = vrot.lane.b32.xlu0 %v459, 64
        %v760 = vpop.permute.xlu0 %759
        %761 = vrot.lane.b32.xlu0 %v460, 64
        %v762 = vpop.permute.xlu0 %761
        %763 = vrot.lane.b32.xlu0 %v461, 64
        %v764 = vpop.permute.xlu0 %763
        %765 = vrot.lane.b32.xlu0 %v462, 64
        %v766 = vpop.permute.xlu0 %765
        %767 = vrot.lane.b32.xlu0 %v463, 64
        %v768 = vpop.permute.xlu0 %767
        %769 = vrot.lane.b32.xlu0 %v464, 64
        %v770 = vpop.permute.xlu0 %769
        %771 = vrot.lane.b32.xlu0 %v465, 64
        %v772 = vpop.permute.xlu0 %771
        %773 = vrot.lane.b32.xlu0 %v466, 64
        %v774 = vpop.permute.xlu0 %773
        %775 = vrot.lane.b32.xlu0 %v467, 64
        %v776 = vpop.permute.xlu0 %775
        %777 = vrot.lane.b32.xlu0 %v468, 64
        %v778 = vpop.permute.xlu0 %777
        %779 = vrot.lane.b32.xlu0 %v469, 64
        %v780 = vpop.permute.xlu0 %779
        %781 = vrot.lane.b32.xlu0 %v470, 64
        %v782 = vpop.permute.xlu0 %781
        %783 = vrot.lane.b32.xlu0 %v471, 64
        %v784 = vpop.permute.xlu0 %783
        %785 = vrot.lane.b32.xlu0 %v472, 64
        %v786 = vpop.permute.xlu0 %785
        %787 = vrot.lane.b32.xlu0 %v473, 64
        %v788 = vpop.permute.xlu0 %787
        %789 = vrot.lane.b32.xlu0 %v474, 64
        %v790 = vpop.permute.xlu0 %789
        %791 = vrot.lane.b32.xlu0 %v475, 64
        %v792 = vpop.permute.xlu0 %791
        %793 = vrot.lane.b32.xlu0 %v476, 64
        %v794 = vpop.permute.xlu0 %793
        %795 = vrot.lane.b32.xlu0 %v477, 64
        %v796 = vpop.permute.xlu0 %795
        %797 = vrot.lane.b32.xlu0 %v478, 64
        %v798 = vpop.permute.xlu0 %797
        %799 = vrot.lane.b32.xlu0 %v479, 64
        %v800 = vpop.permute.xlu0 %799
        %865 = vrot.lane.b32.xlu0 %v512, 64
        %v866 = vpop.permute.xlu0 %865
        %867 = vrot.lane.b32.xlu0 %v513, 64
        %v868 = vpop.permute.xlu0 %867
        %869 = vrot.lane.b32.xlu0 %v514, 64
        %v870 = vpop.permute.xlu0 %869
        %871 = vrot.lane.b32.xlu0 %v515, 64
        %v872 = vpop.permute.xlu0 %871
        %873 = vrot.lane.b32.xlu0 %v516, 64
        %v874 = vpop.permute.xlu0 %873
        %875 = vrot.lane.b32.xlu0 %v517, 64
        %v876 = vpop.permute.xlu0 %875
        %877 = vrot.lane.b32.xlu0 %v518, 64
        %v878 = vpop.permute.xlu0 %877
        %879 = vrot.lane.b32.xlu0 %v519, 64
        %v880 = vpop.permute.xlu0 %879
        %881 = vrot.lane.b32.xlu0 %v520, 64
        %v882 = vpop.permute.xlu0 %881
        %883 = vrot.lane.b32.xlu0 %v521, 64
        %v884 = vpop.permute.xlu0 %883
        %885 = vrot.lane.b32.xlu0 %v522, 64
        %v886 = vpop.permute.xlu0 %885
        %887 = vrot.lane.b32.xlu0 %v523, 64
        %v888 = vpop.permute.xlu0 %887
        %889 = vrot.lane.b32.xlu0 %v524, 64
        %v890 = vpop.permute.xlu0 %889
        %891 = vrot.lane.b32.xlu0 %v525, 64
        %v892 = vpop.permute.xlu0 %891
        %893 = vrot.lane.b32.xlu0 %v526, 64
        %v894 = vpop.permute.xlu0 %893
        %895 = vrot.lane.b32.xlu0 %v527, 64
        %v896 = vpop.permute.xlu0 %895
        %897 = vrot.lane.b32.xlu0 %v528, 64
        %v898 = vpop.permute.xlu0 %897
        %899 = vrot.lane.b32.xlu0 %v529, 64
        %v900 = vpop.permute.xlu0 %899
        %901 = vrot.lane.b32.xlu0 %v530, 64
        %v902 = vpop.permute.xlu0 %901
        %903 = vrot.lane.b32.xlu0 %v531, 64
        %v904 = vpop.permute.xlu0 %903
        %905 = vrot.lane.b32.xlu0 %v532, 64
        %v906 = vpop.permute.xlu0 %905
        %907 = vrot.lane.b32.xlu0 %v533, 64
        %v908 = vpop.permute.xlu0 %907
        %909 = vrot.lane.b32.xlu0 %v534, 64
        %v910 = vpop.permute.xlu0 %909
        %911 = vrot.lane.b32.xlu0 %v535, 64
        %v912 = vpop.permute.xlu0 %911
        %913 = vrot.lane.b32.xlu0 %v536, 64
        %v914 = vpop.permute.xlu0 %913
        %915 = vrot.lane.b32.xlu0 %v537, 64
        %v916 = vpop.permute.xlu0 %915
        %917 = vrot.lane.b32.xlu0 %v538, 64
        %v918 = vpop.permute.xlu0 %917
        %919 = vrot.lane.b32.xlu0 %v539, 64
        %v920 = vpop.permute.xlu0 %919
        %921 = vrot.lane.b32.xlu0 %v540, 64
        %v922 = vpop.permute.xlu0 %921
        %923 = vrot.lane.b32.xlu0 %v541, 64
        %v924 = vpop.permute.xlu0 %923
        %925 = vrot.lane.b32.xlu0 %v542, 64
        %v926 = vpop.permute.xlu0 %925
        %927 = vrot.lane.b32.xlu0 %v543, 64
        %v928 = vpop.permute.xlu0 %927
        %993 = vrot.lane.b32.xlu0 %v576, 64
        %v994 = vpop.permute.xlu0 %993
        %995 = vrot.lane.b32.xlu0 %v577, 64
        %v996 = vpop.permute.xlu0 %995
        %997 = vrot.lane.b32.xlu0 %v578, 64
        %v998 = vpop.permute.xlu0 %997
        %999 = vrot.lane.b32.xlu0 %v579, 64
        %v1000 = vpop.permute.xlu0 %999
        %1001 = vrot.lane.b32.xlu0 %v580, 64
        %v1002 = vpop.permute.xlu0 %1001
        %1003 = vrot.lane.b32.xlu0 %v581, 64
        %v1004 = vpop.permute.xlu0 %1003
        %1005 = vrot.lane.b32.xlu0 %v582, 64
        %v1006 = vpop.permute.xlu0 %1005
        %1007 = vrot.lane.b32.xlu0 %v583, 64
        %v1008 = vpop.permute.xlu0 %1007
        %1009 = vrot.lane.b32.xlu0 %v584, 64
        %v1010 = vpop.permute.xlu0 %1009
        %1011 = vrot.lane.b32.xlu0 %v585, 64
        %v1012 = vpop.permute.xlu0 %1011
        %1013 = vrot.lane.b32.xlu0 %v586, 64
        %v1014 = vpop.permute.xlu0 %1013
        %1015 = vrot.lane.b32.xlu0 %v587, 64
        %v1016 = vpop.permute.xlu0 %1015
        %1017 = vrot.lane.b32.xlu0 %v588, 64
        %v1018 = vpop.permute.xlu0 %1017
        %1019 = vrot.lane.b32.xlu0 %v589, 64
        %v1020 = vpop.permute.xlu0 %1019
        %1021 = vrot.lane.b32.xlu0 %v590, 64
        %v1022 = vpop.permute.xlu0 %1021
        %1023 = vrot.lane.b32.xlu0 %v591, 64
        %v1024 = vpop.permute.xlu0 %1023
        %1025 = vrot.lane.b32.xlu0 %v592, 64
        %v1026 = vpop.permute.xlu0 %1025
        %1027 = vrot.lane.b32.xlu0 %v593, 64
        %v1028 = vpop.permute.xlu0 %1027
        %1029 = vrot.lane.b32.xlu0 %v594, 64
        %v1030 = vpop.permute.xlu0 %1029
        %1031 = vrot.lane.b32.xlu0 %v595, 64
        %v1032 = vpop.permute.xlu0 %1031
        %1033 = vrot.lane.b32.xlu0 %v596, 64
        %v1034 = vpop.permute.xlu0 %1033
        %1035 = vrot.lane.b32.xlu0 %v597, 64
        %v1036 = vpop.permute.xlu0 %1035
        %1037 = vrot.lane.b32.xlu0 %v598, 64
        %v1038 = vpop.permute.xlu0 %1037
        %1039 = vrot.lane.b32.xlu0 %v599, 64
        %v1040 = vpop.permute.xlu0 %1039
        %1041 = vrot.lane.b32.xlu0 %v600, 64
        %v1042 = vpop.permute.xlu0 %1041
        %1043 = vrot.lane.b32.xlu0 %v601, 64
        %v1044 = vpop.permute.xlu0 %1043
        %1045 = vrot.lane.b32.xlu0 %v602, 64
        %v1046 = vpop.permute.xlu0 %1045
        %1047 = vrot.lane.b32.xlu0 %v603, 64
        %v1048 = vpop.permute.xlu0 %1047
        %1049 = vrot.lane.b32.xlu0 %v604, 64
        %v1050 = vpop.permute.xlu0 %1049
        %1051 = vrot.lane.b32.xlu0 %v605, 64
        %v1052 = vpop.permute.xlu0 %1051
        %1053 = vrot.lane.b32.xlu0 %v606, 64
        %v1054 = vpop.permute.xlu0 %1053
        %1055 = vrot.lane.b32.xlu0 %v607, 64
        %v1056 = vpop.permute.xlu0 %1055
        %1121 = vrot.lane.b32.xlu0 %v641, 64
        %v1122 = vpop.permute.xlu0 %1121
        %1123 = vrot.lane.b32.xlu0 %v642, 64
        %v1124 = vpop.permute.xlu0 %1123
        %1125 = vrot.lane.b32.xlu0 %v643, 64
        %v1126 = vpop.permute.xlu0 %1125
        %1127 = vrot.lane.b32.xlu0 %v644, 64
        %v1128 = vpop.permute.xlu0 %1127
        %1129 = vrot.lane.b32.xlu0 %v645, 64
        %v1130 = vpop.permute.xlu0 %1129
        %1131 = vrot.lane.b32.xlu0 %v646, 64
        %v1132 = vpop.permute.xlu0 %1131
        %1133 = vrot.lane.b32.xlu0 %v647, 64
        %v1134 = vpop.permute.xlu0 %1133
        %1135 = vrot.lane.b32.xlu0 %v648, 64
        %v1136 = vpop.permute.xlu0 %1135
        %1137 = vrot.lane.b32.xlu0 %v649, 64
        %v1138 = vpop.permute.xlu0 %1137
        %1139 = vrot.lane.b32.xlu0 %v650, 64
        %v1140 = vpop.permute.xlu0 %1139
        %1141 = vrot.lane.b32.xlu0 %v651, 64
        %v1142 = vpop.permute.xlu0 %1141
        %1143 = vrot.lane.b32.xlu0 %v652, 64
        %v1144 = vpop.permute.xlu0 %1143
        %1145 = vrot.lane.b32.xlu0 %v653, 64
        %v1146 = vpop.permute.xlu0 %1145
        %1147 = vrot.lane.b32.xlu0 %v654, 64
        %v1148 = vpop.permute.xlu0 %1147
        %1149 = vrot.lane.b32.xlu0 %v655, 64
        %v1150 = vpop.permute.xlu0 %1149
        %1151 = vrot.lane.b32.xlu0 %v656, 64
        %v1152 = vpop.permute.xlu0 %1151
        %1153 = vrot.lane.b32.xlu0 %v657, 64
        %v1154 = vpop.permute.xlu0 %1153
        %1155 = vrot.lane.b32.xlu0 %v658, 64
        %v1156 = vpop.permute.xlu0 %1155
        %1157 = vrot.lane.b32.xlu0 %v659, 64
        %v1158 = vpop.permute.xlu0 %1157
        %1159 = vrot.lane.b32.xlu0 %v660, 64
        %v1160 = vpop.permute.xlu0 %1159
        %1161 = vrot.lane.b32.xlu0 %v661, 64
        %v1162 = vpop.permute.xlu0 %1161
        %1163 = vrot.lane.b32.xlu0 %v662, 64
        %v1164 = vpop.permute.xlu0 %1163
        %1165 = vrot.lane.b32.xlu0 %v663, 64
        %v1166 = vpop.permute.xlu0 %1165
        %1167 = vrot.lane.b32.xlu0 %v664, 64
        %v1168 = vpop.permute.xlu0 %1167
        %1169 = vrot.lane.b32.xlu0 %v665, 64
        %v1170 = vpop.permute.xlu0 %1169
        %1171 = vrot.lane.b32.xlu0 %v666, 64
        %v1172 = vpop.permute.xlu0 %1171
        %1173 = vrot.lane.b32.xlu0 %v667, 64
        %v1174 = vpop.permute.xlu0 %1173
        %1175 = vrot.lane.b32.xlu0 %v668, 64
        %v1176 = vpop.permute.xlu0 %1175
        %1177 = vrot.lane.b32.xlu0 %v669, 64
        %v1178 = vpop.permute.xlu0 %1177
        %1179 = vrot.lane.b32.xlu0 %v670, 64
        %v1180 = vpop.permute.xlu0 %1179
        %1181 = vrot.lane.b32.xlu0 %v671, 64
        %v1182 = vpop.permute.xlu0 %1181
        %1183 = vrot.lane.b32.xlu0 %v672, 64
        %v1184 = vpop.permute.xlu0 %1183
        %v1217 = vsel %vm169, %v416, %v738
        %v1218 = vsel %vm169, %v417, %v740
        %v1219 = vsel %vm169, %v418, %v742
        %v1220 = vsel %vm169, %v419, %v744
        %v1221 = vsel %vm169, %v420, %v746
        %v1222 = vsel %vm169, %v421, %v748
        %v1223 = vsel %vm169, %v422, %v750
        %v1224 = vsel %vm169, %v423, %v752
        %v1225 = vsel %vm169, %v424, %v754
        %v1226 = vsel %vm169, %v425, %v756
        %v1227 = vsel %vm169, %v426, %v758
        %v1228 = vsel %vm169, %v427, %v760
        %v1229 = vsel %vm169, %v428, %v762
        %v1230 = vsel %vm169, %v429, %v764
        %v1231 = vsel %vm169, %v430, %v766
        %v1232 = vsel %vm169, %v431, %v768
        %v1233 = vsel %vm169, %v432, %v770
        %v1234 = vsel %vm169, %v433, %v772
        %v1235 = vsel %vm169, %v434, %v774
        %v1236 = vsel %vm169, %v435, %v776
        %v1237 = vsel %vm169, %v436, %v778
        %v1238 = vsel %vm169, %v437, %v780
        %v1239 = vsel %vm169, %v438, %v782
        %v1240 = vsel %vm169, %v439, %v784
        %v1241 = vsel %vm169, %v440, %v786
        %v1242 = vsel %vm169, %v441, %v788
        %v1243 = vsel %vm169, %v442, %v790
        %v1244 = vsel %vm169, %v443, %v792
        %v1245 = vsel %vm169, %v444, %v794
        %v1246 = vsel %vm169, %v445, %v796
        %v1247 = vsel %vm169, %v446, %v798
        %v1248 = vsel %vm169, %v447, %v800
        %v1249 = vsel %vm169, %v480, %v866
        %v1250 = vsel %vm169, %v481, %v868
        %v1251 = vsel %vm169, %v482, %v870
        %v1252 = vsel %vm169, %v483, %v872
        %v1253 = vsel %vm169, %v484, %v874
        %v1254 = vsel %vm169, %v485, %v876
        %v1255 = vsel %vm169, %v486, %v878
        %v1256 = vsel %vm169, %v487, %v880
        %v1257 = vsel %vm169, %v488, %v882
        %v1258 = vsel %vm169, %v489, %v884
        %v1259 = vsel %vm169, %v490, %v886
        %v1260 = vsel %vm169, %v491, %v888
        %v1261 = vsel %vm169, %v492, %v890
        %v1262 = vsel %vm169, %v493, %v892
        %v1263 = vsel %vm169, %v494, %v894
        %v1264 = vsel %vm169, %v495, %v896
        %v1265 = vsel %vm169, %v496, %v898
        %v1266 = vsel %vm169, %v497, %v900
        %v1267 = vsel %vm169, %v498, %v902
        %v1268 = vsel %vm169, %v499, %v904
        %v1269 = vsel %vm169, %v500, %v906
        %v1270 = vsel %vm169, %v501, %v908
        %v1271 = vsel %vm169, %v502, %v910
        %v1272 = vsel %vm169, %v503, %v912
        %v1273 = vsel %vm169, %v504, %v914
        %v1274 = vsel %vm169, %v505, %v916
        %v1275 = vsel %vm169, %v506, %v918
        %v1276 = vsel %vm169, %v507, %v920
        %v1277 = vsel %vm169, %v508, %v922
        %v1278 = vsel %vm169, %v509, %v924
        %v1279 = vsel %vm169, %v510, %v926
        %v1280 = vsel %vm169, %v511, %v928
        %v1281 = vsel %vm169, %v544, %v994
        %v1282 = vsel %vm169, %v545, %v996
        %v1283 = vsel %vm169, %v546, %v998
        %v1284 = vsel %vm169, %v547, %v1000
        %v1285 = vsel %vm169, %v548, %v1002
        %v1286 = vsel %vm169, %v549, %v1004
        %v1287 = vsel %vm169, %v550, %v1006
        %v1288 = vsel %vm169, %v551, %v1008
        %v1289 = vsel %vm169, %v552, %v1010
        %v1290 = vsel %vm169, %v553, %v1012
        %v1291 = vsel %vm169, %v554, %v1014
        %v1292 = vsel %vm169, %v555, %v1016
        %v1293 = vsel %vm169, %v556, %v1018
        %v1294 = vsel %vm169, %v557, %v1020
        %v1295 = vsel %vm169, %v558, %v1022
        %v1296 = vsel %vm169, %v559, %v1024
        %v1297 = vsel %vm169, %v560, %v1026
        %v1298 = vsel %vm169, %v561, %v1028
        %v1299 = vsel %vm169, %v562, %v1030
        %v1300 = vsel %vm169, %v563, %v1032
        %v1301 = vsel %vm169, %v564, %v1034
        %v1302 = vsel %vm169, %v565, %v1036
        %v1303 = vsel %vm169, %v566, %v1038
        %v1304 = vsel %vm169, %v567, %v1040
        %v1305 = vsel %vm169, %v568, %v1042
        %v1306 = vsel %vm169, %v569, %v1044
        %v1307 = vsel %vm169, %v570, %v1046
        %v1308 = vsel %vm169, %v571, %v1048
        %v1309 = vsel %vm169, %v572, %v1050
        %v1310 = vsel %vm169, %v573, %v1052
        %v1311 = vsel %vm169, %v574, %v1054
        %v1312 = vsel %vm169, %v575, %v1056
        %v1313 = vsel %vm169, %v609, %v1122
        %v1314 = vsel %vm169, %v610, %v1124
        %v1315 = vsel %vm169, %v611, %v1126
        %v1316 = vsel %vm169, %v612, %v1128
        %v1317 = vsel %vm169, %v613, %v1130
        %v1318 = vsel %vm169, %v614, %v1132
        %v1319 = vsel %vm169, %v615, %v1134
        %v1320 = vsel %vm169, %v616, %v1136
        %v1321 = vsel %vm169, %v617, %v1138
        %v1322 = vsel %vm169, %v618, %v1140
        %v1323 = vsel %vm169, %v619, %v1142
        %v1324 = vsel %vm169, %v620, %v1144
        %v1325 = vsel %vm169, %v621, %v1146
        %v1326 = vsel %vm169, %v622, %v1148
        %v1327 = vsel %vm169, %v623, %v1150
        %v1328 = vsel %vm169, %v624, %v1152
        %v1329 = vsel %vm169, %v625, %v1154
        %v1330 = vsel %vm169, %v626, %v1156
        %v1331 = vsel %vm169, %v627, %v1158
        %v1332 = vsel %vm169, %v628, %v1160
        %v1333 = vsel %vm169, %v629, %v1162
        %v1334 = vsel %vm169, %v630, %v1164
        %v1335 = vsel %vm169, %v631, %v1166
        %v1336 = vsel %vm169, %v632, %v1168
        %v1337 = vsel %vm169, %v633, %v1170
        %v1338 = vsel %vm169, %v634, %v1172
        %v1339 = vsel %vm169, %v635, %v1174
        %v1340 = vsel %vm169, %v636, %v1176
        %v1341 = vsel %vm169, %v637, %v1178
        %v1342 = vsel %vm169, %v638, %v1180
        %v1343 = vsel %vm169, %v639, %v1182
        %v1344 = vsel %vm169, %v640, %v1184
        %v1346 = vsel %vm169, %v673, 0
        %v1349 = vsel %vm169, %v674, 0
        %v1352 = vsel %vm169, %v675, 0
        %v1355 = vsel %vm169, %v676, 0
        %v1358 = vsel %vm169, %v677, 0
        %v1361 = vsel %vm169, %v678, 0
        %v1364 = vsel %vm169, %v679, 0
        %v1367 = vsel %vm169, %v680, 0
        %v1370 = vsel %vm169, %v681, 0
        %v1373 = vsel %vm169, %v682, 0
        %v1376 = vsel %vm169, %v683, 0
        %v1379 = vsel %vm169, %v684, 0
        %v1382 = vsel %vm169, %v685, 0
        %v1385 = vsel %vm169, %v686, 0
        %v1388 = vsel %vm169, %v687, 0
        %v1391 = vsel %vm169, %v688, 0
        %v1394 = vsel %vm169, %v689, 0
        %v1397 = vsel %vm169, %v690, 0
        %v1400 = vsel %vm169, %v691, 0
        %v1403 = vsel %vm169, %v692, 0
        %v1406 = vsel %vm169, %v693, 0
        %v1409 = vsel %vm169, %v694, 0
        %v1412 = vsel %vm169, %v695, 0
        %v1415 = vsel %vm169, %v696, 0
        %v1418 = vsel %vm169, %v697, 0
        %v1421 = vsel %vm169, %v698, 0
        %v1424 = vsel %vm169, %v699, 0
        %v1427 = vsel %vm169, %v700, 0
        %v1430 = vsel %vm169, %v701, 0
        %v1433 = vsel %vm169, %v702, 0
        %v1436 = vsel %vm169, %v703, 0
        %v1439 = vsel %vm169, %v704, 0
        %1441 = vmatprep.subr.mxu0 0.0
        %1442 = vmatpush1.msra.mxu0 %v344
        %1443 = vmatprep.subr.mxu0 0.0
        %1444 = vmatpush1.msra.mxu0 %v345
        %1445 = vmatprep.subr.mxu0 0.0
        %1446 = vmatpush1.msra.mxu0 %v346
        %1447 = vmatprep.subr.mxu0 0.0
        %1448 = vmatpush1.msra.mxu0 %v347
        %1449 = vmatprep.subr.mxu0 0.0
        %1450 = vmatpush1.msra.mxu0 %v348
        %1451 = vmatprep.subr.mxu0 0.0
        %1452 = vmatpush1.msra.mxu0 %v349
        %1453 = vmatprep.subr.mxu0 0.0
        %1454 = vmatpush1.msra.mxu0 %v350
        %1455 = vmatprep.subr.mxu0 0.0
        %1456 = vmatpush1.msra.mxu0 %v351
        %1457 = vmatprep.subr.mxu0 0.0
        %1458 = vmatpush1.msra.mxu0 %v352
        %1459 = vmatprep.subr.mxu0 0.0
        %1460 = vmatpush1.msra.mxu0 %v353
        %1461 = vmatprep.subr.mxu0 0.0
        %1462 = vmatpush1.msra.mxu0 %v354
        %1463 = vmatprep.subr.mxu0 0.0
        %1464 = vmatpush1.msra.mxu0 %v355
        %1465 = vmatprep.subr.mxu0 0.0
        %1466 = vmatpush1.msra.mxu0 %v356
        %1467 = vmatprep.subr.mxu0 0.0
        %1468 = vmatpush1.msra.mxu0 %v357
        %1469 = vmatprep.subr.mxu0 0.0
        %1470 = vmatpush1.msra.mxu0 %v358
        %1471 = vmatprep.subr.mxu0 0.0
        %1472 = vmatpush1.msra.mxu0 %v359
        %1473 = vmatprep.subr.mxu0 0.0
        %1474 = vmatpush1.msra.mxu0 %v360
        %1475 = vmatprep.subr.mxu0 0.0
        %1476 = vmatpush1.msra.mxu0 %v361
        %1477 = vmatprep.subr.mxu0 0.0
        %1478 = vmatpush1.msra.mxu0 %v362
        %1479 = vmatprep.subr.mxu0 0.0
        %1480 = vmatpush1.msra.mxu0 %v363
        %1481 = vmatprep.subr.mxu0 0.0
        %1482 = vmatpush1.msra.mxu0 %v364
        %1483 = vmatprep.subr.mxu0 0.0
        %1484 = vmatpush1.msra.mxu0 %v365
        %1485 = vmatprep.subr.mxu0 0.0
        %1486 = vmatpush1.msra.mxu0 %v366
        %1487 = vmatprep.subr.mxu0 0.0
        %1488 = vmatpush1.msra.mxu0 %v367
        %1489 = vmatprep.subr.mxu0 0.0
        %1490 = vmatpush1.msra.mxu0 %v368
        %1491 = vmatprep.subr.mxu0 0.0
        %1492 = vmatpush1.msra.mxu0 %v369
        %1493 = vmatprep.subr.mxu0 0.0
        %1494 = vmatpush1.msra.mxu0 %v370
        %1495 = vmatprep.subr.mxu0 0.0
        %1496 = vmatpush1.msra.mxu0 %v371
        %1497 = vmatprep.subr.mxu0 0.0
        %1498 = vmatpush1.msra.mxu0 %v372
        %1499 = vmatprep.subr.mxu0 0.0
        %1500 = vmatpush1.msra.mxu0 %v373
        %1501 = vmatprep.subr.mxu0 0.0
        %1502 = vmatpush1.msra.mxu0 %v374
        %1503 = vmatprep.subr.mxu0 0.0
        %1504 = vmatpush1.msra.mxu0 %v375
        %1505 = vmatprep.mubr.f32.mxu0 %v1249
        %1506 = vmatmul.mubr.f32.gmra.mrb[0].mxu0 %v1217
        %v1507 = vpop.f32.mrb[0].mxu0
        %v1508 = vadd.f32 0.0, %v1507
        %v1509 = vpop.f32.mrb[0].mxu0
        %1510 = vmatprep.mubr.f32.mxu0 %v1250
        %1511 = vmatmul.mubr.f32.gmra.mrb[0].mxu0 %v1218
        %v1512 = vpop.f32.mrb[0].mxu0
        %v1513 = vadd.f32 0.0, %v1512
        %v1514 = vpop.f32.mrb[0].mxu0
        %1515 = vmatprep.mubr.f32.mxu0 %v1251
        %1516 = vmatmul.mubr.f32.gmra.mrb[0].mxu0 %v1219
        %v1517 = vpop.f32.mrb[0].mxu0
        %v1518 = vadd.f32 0.0, %v1517
        %v1519 = vpop.f32.mrb[0].mxu0
        %1520 = vmatprep.mubr.f32.mxu0 %v1252
        %1521 = vmatmul.mubr.f32.gmra.mrb[0].mxu0 %v1220
        %v1522 = vpop.f32.mrb[0].mxu0
        %v1523 = vadd.f32 0.0, %v1522
        %v1524 = vpop.f32.mrb[0].mxu0
        %1525 = vmatprep.mubr.f32.mxu0 %v1253
        %1526 = vmatmul.mubr.f32.gmra.mrb[0].mxu0 %v1221
        %v1527 = vpop.f32.mrb[0].mxu0
        %v1528 = vadd.f32 0.0, %v1527
        %v1529 = vpop.f32.mrb[0].mxu0
        %1530 = vmatprep.mubr.f32.mxu0 %v1254
        %1531 = vmatmul.mubr.f32.gmra.mrb[0].mxu0 %v1222
        %v1532 = vpop.f32.mrb[0].mxu0
        %v1533 = vadd.f32 0.0, %v1532
        %v1534 = vpop.f32.mrb[0].mxu0
        %1535 = vmatprep.mubr.f32.mxu0 %v1255
        %1536 = vmatmul.mubr.f32.gmra.mrb[0].mxu0 %v1223
        %v1537 = vpop.f32.mrb[0].mxu0
        %v1538 = vadd.f32 0.0, %v1537
        %v1539 = vpop.f32.mrb[0].mxu0
        %1540 = vmatprep.mubr.f32.mxu0 %v1256
        %1541 = vmatmul.mubr.f32.gmra.mrb[0].mxu0 %v1224
        %v1542 = vpop.f32.mrb[0].mxu0
        %v1543 = vadd.f32 0.0, %v1542
        %v1544 = vpop.f32.mrb[0].mxu0
        %1545 = vmatprep.mubr.f32.mxu0 %v1257
        %1546 = vmatmul.mubr.f32.gmra.mrb[0].mxu0 %v1225
        %v1547 = vpop.f32.mrb[0].mxu0
        %v1548 = vadd.f32 0.0, %v1547
        %v1549 = vpop.f32.mrb[0].mxu0
        %1550 = vmatprep.mubr.f32.mxu0 %v1258
        %1551 = vmatmul.mubr.f32.gmra.mrb[0].mxu0 %v1226
        %v1552 = vpop.f32.mrb[0].mxu0
        %v1553 = vadd.f32 0.0, %v1552
        %v1554 = vpop.f32.mrb[0].mxu0
        %1555 = vmatprep.mubr.f32.mxu0 %v1259
        %1556 = vmatmul.mubr.f32.gmra.mrb[0].mxu0 %v1227
        %v1557 = vpop.f32.mrb[0].mxu0
        %v1558 = vadd.f32 0.0, %v1557
        %v1559 = vpop.f32.mrb[0].mxu0
        %1560 = vmatprep.mubr.f32.mxu0 %v1260
        %1561 = vmatmul.mubr.f32.gmra.mrb[0].mxu0 %v1228
        %v1562 = vpop.f32.mrb[0].mxu0
        %v1563 = vadd.f32 0.0, %v1562
        %v1564 = vpop.f32.mrb[0].mxu0
        %1565 = vmatprep.mubr.f32.mxu0 %v1261
        %1566 = vmatmul.mubr.f32.gmra.mrb[0].mxu0 %v1229
        %v1567 = vpop.f32.mrb[0].mxu0
        %v1568 = vadd.f32 0.0, %v1567
        %v1569 = vpop.f32.mrb[0].mxu0
        %1570 = vmatprep.mubr.f32.mxu0 %v1262
        %1571 = vmatmul.mubr.f32.gmra.mrb[0].mxu0 %v1230
        %v1572 = vpop.f32.mrb[0].mxu0
        %v1573 = vadd.f32 0.0, %v1572
        %v1574 = vpop.f32.mrb[0].mxu0
        %1575 = vmatprep.mubr.f32.mxu0 %v1263
        %1576 = vmatmul.mubr.f32.gmra.mrb[0].mxu0 %v1231
        %v1577 = vpop.f32.mrb[0].mxu0
        %v1578 = vadd.f32 0.0, %v1577
        %v1579 = vpop.f32.mrb[0].mxu0
        %1580 = vmatprep.mubr.f32.mxu0 %v1264
        %1581 = vmatmul.mubr.f32.gmra.mrb[0].mxu0 %v1232
        %v1582 = vpop.f32.mrb[0].mxu0
        %v1583 = vadd.f32 0.0, %v1582
        %v1584 = vpop.f32.mrb[0].mxu0
        %1585 = vmatprep.mubr.f32.mxu0 %v1265
        %1586 = vmatmul.mubr.f32.gmra.mrb[0].mxu0 %v1233
        %v1587 = vpop.f32.mrb[0].mxu0
        %v1588 = vadd.f32 0.0, %v1587
        %v1589 = vpop.f32.mrb[0].mxu0
        %1590 = vmatprep.mubr.f32.mxu0 %v1266
        %1591 = vmatmul.mubr.f32.gmra.mrb[0].mxu0 %v1234
        %v1592 = vpop.f32.mrb[0].mxu0
        %v1593 = vadd.f32 0.0, %v1592
        %v1594 = vpop.f32.mrb[0].mxu0
        %1595 = vmatprep.mubr.f32.mxu0 %v1267
        %1596 = vmatmul.mubr.f32.gmra.mrb[0].mxu0 %v1235
        %v1597 = vpop.f32.mrb[0].mxu0
        %v1598 = vadd.f32 0.0, %v1597
        %v1599 = vpop.f32.mrb[0].mxu0
        %1600 = vmatprep.mubr.f32.mxu0 %v1268
        %1601 = vmatmul.mubr.f32.gmra.mrb[0].mxu0 %v1236
        %v1602 = vpop.f32.mrb[0].mxu0
        %v1603 = vadd.f32 0.0, %v1602
        %v1604 = vpop.f32.mrb[0].mxu0
        %1605 = vmatprep.mubr.f32.mxu0 %v1269
        %1606 = vmatmul.mubr.f32.gmra.mrb[0].mxu0 %v1237
        %v1607 = vpop.f32.mrb[0].mxu0
        %v1608 = vadd.f32 0.0, %v1607
        %v1609 = vpop.f32.mrb[0].mxu0
        %1610 = vmatprep.mubr.f32.mxu0 %v1270
        %1611 = vmatmul.mubr.f32.gmra.mrb[0].mxu0 %v1238
        %v1612 = vpop.f32.mrb[0].mxu0
        %v1613 = vadd.f32 0.0, %v1612
        %v1614 = vpop.f32.mrb[0].mxu0
        %1615 = vmatprep.mubr.f32.mxu0 %v1271
        %1616 = vmatmul.mubr.f32.gmra.mrb[0].mxu0 %v1239
        %v1617 = vpop.f32.mrb[0].mxu0
        %v1618 = vadd.f32 0.0, %v1617
        %v1619 = vpop.f32.mrb[0].mxu0
        %1620 = vmatprep.mubr.f32.mxu0 %v1272
        %1621 = vmatmul.mubr.f32.gmra.mrb[0].mxu0 %v1240
        %v1622 = vpop.f32.mrb[0].mxu0
        %v1623 = vadd.f32 0.0, %v1622
        %v1624 = vpop.f32.mrb[0].mxu0
        %1625 = vmatprep.mubr.f32.mxu0 %v1273
        %1626 = vmatmul.mubr.f32.gmra.mrb[0].mxu0 %v1241
        %v1627 = vpop.f32.mrb[0].mxu0
        %v1628 = vadd.f32 0.0, %v1627
        %v1629 = vpop.f32.mrb[0].mxu0
        %1630 = vmatprep.mubr.f32.mxu0 %v1274
        %1631 = vmatmul.mubr.f32.gmra.mrb[0].mxu0 %v1242
        %v1632 = vpop.f32.mrb[0].mxu0
        %v1633 = vadd.f32 0.0, %v1632
        %v1634 = vpop.f32.mrb[0].mxu0
        %1635 = vmatprep.mubr.f32.mxu0 %v1275
        %1636 = vmatmul.mubr.f32.gmra.mrb[0].mxu0 %v1243
        %v1637 = vpop.f32.mrb[0].mxu0
        %v1638 = vadd.f32 0.0, %v1637
        %v1639 = vpop.f32.mrb[0].mxu0
        %1640 = vmatprep.mubr.f32.mxu0 %v1276
        %1641 = vmatmul.mubr.f32.gmra.mrb[0].mxu0 %v1244
        %v1642 = vpop.f32.mrb[0].mxu0
        %v1643 = vadd.f32 0.0, %v1642
        %v1644 = vpop.f32.mrb[0].mxu0
        %1645 = vmatprep.mubr.f32.mxu0 %v1277
        %1646 = vmatmul.mubr.f32.gmra.mrb[0].mxu0 %v1245
        %v1647 = vpop.f32.mrb[0].mxu0
        %v1648 = vadd.f32 0.0, %v1647
        %v1649 = vpop.f32.mrb[0].mxu0
        %1650 = vmatprep.mubr.f32.mxu0 %v1278
        %1651 = vmatmul.mubr.f32.gmra.mrb[0].mxu0 %v1246
        %v1652 = vpop.f32.mrb[0].mxu0
        %v1653 = vadd.f32 0.0, %v1652
        %v1654 = vpop.f32.mrb[0].mxu0
        %1655 = vmatprep.mubr.f32.mxu0 %v1279
        %1656 = vmatmul.mubr.f32.gmra.mrb[0].mxu0 %v1247
        %v1657 = vpop.f32.mrb[0].mxu0
        %v1658 = vadd.f32 0.0, %v1657
        %v1659 = vpop.f32.mrb[0].mxu0
        %1660 = vmatprep.mubr.f32.mxu0 %v1280
        %1661 = vmatmul.mubr.f32.gmra.mrb[0].mxu0 %v1248
        %v1662 = vpop.f32.mrb[0].mxu0
        %v1663 = vadd.f32 0.0, %v1662
        %v1664 = vpop.f32.mrb[0].mxu0
        %1665 = vdwg.mxu0
        %1666 = vmatprep.subr.mxu0 0.0
        %1667 = vmatpush1.msra.mxu0 %v376
        %1668 = vmatprep.subr.mxu0 0.0
        %1669 = vmatpush1.msra.mxu0 %v377
        %1670 = vmatprep.subr.mxu0 0.0
        %1671 = vmatpush1.msra.mxu0 %v378
        %1672 = vmatprep.subr.mxu0 0.0
        %1673 = vmatpush1.msra.mxu0 %v379
        %1674 = vmatprep.subr.mxu0 0.0
        %1675 = vmatpush1.msra.mxu0 %v380
        %1676 = vmatprep.subr.mxu0 0.0
        %1677 = vmatpush1.msra.mxu0 %v381
        %1678 = vmatprep.subr.mxu0 0.0
        %1679 = vmatpush1.msra.mxu0 %v382
        %1680 = vmatprep.subr.mxu0 0.0
        %1681 = vmatpush1.msra.mxu0 %v383
        %1682 = vmatprep.subr.mxu0 0.0
        %1683 = vmatpush1.msra.mxu0 %v384
        %1684 = vmatprep.subr.mxu0 0.0
        %1685 = vmatpush1.msra.mxu0 %v385
        %1686 = vmatprep.subr.mxu0 0.0
        %1687 = vmatpush1.msra.mxu0 %v386
        %1688 = vmatprep.subr.mxu0 0.0
        %1689 = vmatpush1.msra.mxu0 %v387
        %1690 = vmatprep.subr.mxu0 0.0
        %1691 = vmatpush1.msra.mxu0 %v388
        %1692 = vmatprep.subr.mxu0 0.0
        %1693 = vmatpush1.msra.mxu0 %v389
        %1694 = vmatprep.subr.mxu0 0.0
        %1695 = vmatpush1.msra.mxu0 %v390
        %1696 = vmatprep.subr.mxu0 0.0
        %1697 = vmatpush1.msra.mxu0 %v391
        %1698 = vmatprep.subr.mxu0 0.0
        %1699 = vmatpush1.msra.mxu0 %v392
        %1700 = vmatprep.subr.mxu0 0.0
        %1701 = vmatpush1.msra.mxu0 %v393
        %1702 = vmatprep.subr.mxu0 0.0
        %1703 = vmatpush1.msra.mxu0 %v394
        %1704 = vmatprep.subr.mxu0 0.0
        %1705 = vmatpush1.msra.mxu0 %v395
        %1706 = vmatprep.subr.mxu0 0.0
        %1707 = vmatpush1.msra.mxu0 %v396
        %1708 = vmatprep.subr.mxu0 0.0
        %1709 = vmatpush1.msra.mxu0 %v397
        %1710 = vmatprep.subr.mxu0 0.0
        %1711 = vmatpush1.msra.mxu0 %v398
        %1712 = vmatprep.subr.mxu0 0.0
        %1713 = vmatpush1.msra.mxu0 %v399
        %1714 = vmatprep.subr.mxu0 0.0
        %1715 = vmatpush1.msra.mxu0 %v400
        %1716 = vmatprep.subr.mxu0 0.0
        %1717 = vmatpush1.msra.mxu0 %v401
        %1718 = vmatprep.subr.mxu0 0.0
        %1719 = vmatpush1.msra.mxu0 %v402
        %1720 = vmatprep.subr.mxu0 0.0
        %1721 = vmatpush1.msra.mxu0 %v403
        %1722 = vmatprep.subr.mxu0 0.0
        %1723 = vmatpush1.msra.mxu0 %v404
        %1724 = vmatprep.subr.mxu0 0.0
        %1725 = vmatpush1.msra.mxu0 %v405
        %1726 = vmatprep.subr.mxu0 0.0
        %1727 = vmatpush1.msra.mxu0 %v406
        %1728 = vmatprep.subr.mxu0 0.0
        %1729 = vmatpush1.msra.mxu0 %v407
        %1730 = vmatprep.mubr.f32.mxu0 %v1313
        %1731 = vmatmul.mubr.f32.gmra.mrb[0].mxu0 %v1281
        %v1732 = vpop.f32.mrb[0].mxu0
        %v1733 = vadd.f32 %v1508, %v1732
        %v1734 = vpop.f32.mrb[0].mxu0
        %1735 = vmatprep.mubr.f32.mxu0 %v1314
        %1736 = vmatmul.mubr.f32.gmra.mrb[0].mxu0 %v1282
        %v1737 = vpop.f32.mrb[0].mxu0
        %v1738 = vadd.f32 %v1513, %v1737
        %v1739 = vpop.f32.mrb[0].mxu0
        %1740 = vmatprep.mubr.f32.mxu0 %v1315
        %1741 = vmatmul.mubr.f32.gmra.mrb[0].mxu0 %v1283
        %v1742 = vpop.f32.mrb[0].mxu0
        %v1743 = vadd.f32 %v1518, %v1742
        %v1744 = vpop.f32.mrb[0].mxu0
        %1745 = vmatprep.mubr.f32.mxu0 %v1316
        %1746 = vmatmul.mubr.f32.gmra.mrb[0].mxu0 %v1284
        %v1747 = vpop.f32.mrb[0].mxu0
        %v1748 = vadd.f32 %v1523, %v1747
        %v1749 = vpop.f32.mrb[0].mxu0
        %1750 = vmatprep.mubr.f32.mxu0 %v1317
        %1751 = vmatmul.mubr.f32.gmra.mrb[0].mxu0 %v1285
        %v1752 = vpop.f32.mrb[0].mxu0
        %v1753 = vadd.f32 %v1528, %v1752
        %v1754 = vpop.f32.mrb[0].mxu0
        %1755 = vmatprep.mubr.f32.mxu0 %v1318
        %1756 = vmatmul.mubr.f32.gmra.mrb[0].mxu0 %v1286
        %v1757 = vpop.f32.mrb[0].mxu0
        %v1758 = vadd.f32 %v1533, %v1757
        %v1759 = vpop.f32.mrb[0].mxu0
        %1760 = vmatprep.mubr.f32.mxu0 %v1319
        %1761 = vmatmul.mubr.f32.gmra.mrb[0].mxu0 %v1287
        %v1762 = vpop.f32.mrb[0].mxu0
        %v1763 = vadd.f32 %v1538, %v1762
        %v1764 = vpop.f32.mrb[0].mxu0
        %1765 = vmatprep.mubr.f32.mxu0 %v1320
        %1766 = vmatmul.mubr.f32.gmra.mrb[0].mxu0 %v1288
        %v1767 = vpop.f32.mrb[0].mxu0
        %v1768 = vadd.f32 %v1543, %v1767
        %v1769 = vpop.f32.mrb[0].mxu0
        %1770 = vmatprep.mubr.f32.mxu0 %v1321
        %1771 = vmatmul.mubr.f32.gmra.mrb[0].mxu0 %v1289
        %v1772 = vpop.f32.mrb[0].mxu0
        %v1773 = vadd.f32 %v1548, %v1772
        %v1774 = vpop.f32.mrb[0].mxu0
        %1775 = vmatprep.mubr.f32.mxu0 %v1322
        %1776 = vmatmul.mubr.f32.gmra.mrb[0].mxu0 %v1290
        %v1777 = vpop.f32.mrb[0].mxu0
        %v1778 = vadd.f32 %v1553, %v1777
        %v1779 = vpop.f32.mrb[0].mxu0
        %1780 = vmatprep.mubr.f32.mxu0 %v1323
        %1781 = vmatmul.mubr.f32.gmra.mrb[0].mxu0 %v1291
        %v1782 = vpop.f32.mrb[0].mxu0
        %v1783 = vadd.f32 %v1558, %v1782
        %v1784 = vpop.f32.mrb[0].mxu0
        %1785 = vmatprep.mubr.f32.mxu0 %v1324
        %1786 = vmatmul.mubr.f32.gmra.mrb[0].mxu0 %v1292
        %v1787 = vpop.f32.mrb[0].mxu0
        %v1788 = vadd.f32 %v1563, %v1787
        %v1789 = vpop.f32.mrb[0].mxu0
        %1790 = vmatprep.mubr.f32.mxu0 %v1325
        %1791 = vmatmul.mubr.f32.gmra.mrb[0].mxu0 %v1293
        %v1792 = vpop.f32.mrb[0].mxu0
        %v1793 = vadd.f32 %v1568, %v1792
        %v1794 = vpop.f32.mrb[0].mxu0
        %1795 = vmatprep.mubr.f32.mxu0 %v1326
        %1796 = vmatmul.mubr.f32.gmra.mrb[0].mxu0 %v1294
        %v1797 = vpop.f32.mrb[0].mxu0
        %v1798 = vadd.f32 %v1573, %v1797
        %v1799 = vpop.f32.mrb[0].mxu0
        %1800 = vmatprep.mubr.f32.mxu0 %v1327
        %1801 = vmatmul.mubr.f32.gmra.mrb[0].mxu0 %v1295
        %v1802 = vpop.f32.mrb[0].mxu0
        %v1803 = vadd.f32 %v1578, %v1802
        %v1804 = vpop.f32.mrb[0].mxu0
        %1805 = vmatprep.mubr.f32.mxu0 %v1328
        %1806 = vmatmul.mubr.f32.gmra.mrb[0].mxu0 %v1296
        %v1807 = vpop.f32.mrb[0].mxu0
        %v1808 = vadd.f32 %v1583, %v1807
        %v1809 = vpop.f32.mrb[0].mxu0
        %1810 = vmatprep.mubr.f32.mxu0 %v1329
        %1811 = vmatmul.mubr.f32.gmra.mrb[0].mxu0 %v1297
        %v1812 = vpop.f32.mrb[0].mxu0
        %v1813 = vadd.f32 %v1588, %v1812
        %v1814 = vpop.f32.mrb[0].mxu0
        %1815 = vmatprep.mubr.f32.mxu0 %v1330
        %1816 = vmatmul.mubr.f32.gmra.mrb[0].mxu0 %v1298
        %v1817 = vpop.f32.mrb[0].mxu0
        %v1818 = vadd.f32 %v1593, %v1817
        %v1819 = vpop.f32.mrb[0].mxu0
        %1820 = vmatprep.mubr.f32.mxu0 %v1331
        %1821 = vmatmul.mubr.f32.gmra.mrb[0].mxu0 %v1299
        %v1822 = vpop.f32.mrb[0].mxu0
        %v1823 = vadd.f32 %v1598, %v1822
        %v1824 = vpop.f32.mrb[0].mxu0
        %1825 = vmatprep.mubr.f32.mxu0 %v1332
        %1826 = vmatmul.mubr.f32.gmra.mrb[0].mxu0 %v1300
        %v1827 = vpop.f32.mrb[0].mxu0
        %v1828 = vadd.f32 %v1603, %v1827
        %v1829 = vpop.f32.mrb[0].mxu0
        %1830 = vmatprep.mubr.f32.mxu0 %v1333
        %1831 = vmatmul.mubr.f32.gmra.mrb[0].mxu0 %v1301
        %v1832 = vpop.f32.mrb[0].mxu0
        %v1833 = vadd.f32 %v1608, %v1832
        %v1834 = vpop.f32.mrb[0].mxu0
        %1835 = vmatprep.mubr.f32.mxu0 %v1334
        %1836 = vmatmul.mubr.f32.gmra.mrb[0].mxu0 %v1302
        %v1837 = vpop.f32.mrb[0].mxu0
        %v1838 = vadd.f32 %v1613, %v1837
        %v1839 = vpop.f32.mrb[0].mxu0
        %1840 = vmatprep.mubr.f32.mxu0 %v1335
        %1841 = vmatmul.mubr.f32.gmra.mrb[0].mxu0 %v1303
        %v1842 = vpop.f32.mrb[0].mxu0
        %v1843 = vadd.f32 %v1618, %v1842
        %v1844 = vpop.f32.mrb[0].mxu0
        %1845 = vmatprep.mubr.f32.mxu0 %v1336
        %1846 = vmatmul.mubr.f32.gmra.mrb[0].mxu0 %v1304
        %v1847 = vpop.f32.mrb[0].mxu0
        %v1848 = vadd.f32 %v1623, %v1847
        %v1849 = vpop.f32.mrb[0].mxu0
        %1850 = vmatprep.mubr.f32.mxu0 %v1337
        %1851 = vmatmul.mubr.f32.gmra.mrb[0].mxu0 %v1305
        %v1852 = vpop.f32.mrb[0].mxu0
        %v1853 = vadd.f32 %v1628, %v1852
        %v1854 = vpop.f32.mrb[0].mxu0
        %1855 = vmatprep.mubr.f32.mxu0 %v1338
        %1856 = vmatmul.mubr.f32.gmra.mrb[0].mxu0 %v1306
        %v1857 = vpop.f32.mrb[0].mxu0
        %v1858 = vadd.f32 %v1633, %v1857
        %v1859 = vpop.f32.mrb[0].mxu0
        %1860 = vmatprep.mubr.f32.mxu0 %v1339
        %1861 = vmatmul.mubr.f32.gmra.mrb[0].mxu0 %v1307
        %v1862 = vpop.f32.mrb[0].mxu0
        %v1863 = vadd.f32 %v1638, %v1862
        %v1864 = vpop.f32.mrb[0].mxu0
        %1865 = vmatprep.mubr.f32.mxu0 %v1340
        %1866 = vmatmul.mubr.f32.gmra.mrb[0].mxu0 %v1308
        %v1867 = vpop.f32.mrb[0].mxu0
        %v1868 = vadd.f32 %v1643, %v1867
        %v1869 = vpop.f32.mrb[0].mxu0
        %1870 = vmatprep.mubr.f32.mxu0 %v1341
        %1871 = vmatmul.mubr.f32.gmra.mrb[0].mxu0 %v1309
        %v1872 = vpop.f32.mrb[0].mxu0
        %v1873 = vadd.f32 %v1648, %v1872
        %v1874 = vpop.f32.mrb[0].mxu0
        %1875 = vmatprep.mubr.f32.mxu0 %v1342
        %1876 = vmatmul.mubr.f32.gmra.mrb[0].mxu0 %v1310
        %v1877 = vpop.f32.mrb[0].mxu0
        %v1878 = vadd.f32 %v1653, %v1877
        %v1879 = vpop.f32.mrb[0].mxu0
        %1880 = vmatprep.mubr.f32.mxu0 %v1343
        %1881 = vmatmul.mubr.f32.gmra.mrb[0].mxu0 %v1311
        %v1882 = vpop.f32.mrb[0].mxu0
        %v1883 = vadd.f32 %v1658, %v1882
        %v1884 = vpop.f32.mrb[0].mxu0
        %1885 = vmatprep.mubr.f32.mxu0 %v1344
        %1886 = vmatmul.mubr.f32.gmra.mrb[0].mxu0 %v1312
        %v1887 = vpop.f32.mrb[0].mxu0
        %v1888 = vadd.f32 %v1663, %v1887
        %v1889 = vpop.f32.mrb[0].mxu0
        %1890 = vdwg.mxu0
        %1891 = vmatprep.subr.mxu0 0.0
        %1892 = vmatpush1.msra.mxu0 %v408
        %1893 = vmatprep.subr.mxu0 0.0
        %1894 = vmatpush1.msra.mxu0 %v409
        %1895 = vmatprep.subr.mxu0 0.0
        %1896 = vmatpush1.msra.mxu0 %v410
        %1897 = vmatprep.subr.mxu0 0.0
        %1898 = vmatpush1.msra.mxu0 %v411
        %1899 = vmatprep.subr.mxu0 0.0
        %1900 = vmatpush1.msra.mxu0 %v412
        %1901 = vmatprep.subr.mxu0 0.0
        %1902 = vmatpush1.msra.mxu0 %v413
        %1903 = vmatprep.subr.mxu0 0.0
        %1904 = vmatpush1.msra.mxu0 %v414
        %1905 = vmatprep.subr.mxu0 0.0
        %1906 = vmatpush1.msra.mxu0 %v415
        %1907 = vmatprep.subr.mxu0 0.0
        %1908 = vmatpush1.msra.mxu0 0.0
        %1909 = vmatprep.subr.mxu0 0.0
        %1910 = vmatpush1.msra.mxu0 0.0
        %1911 = vmatprep.subr.mxu0 0.0
        %1912 = vmatpush1.msra.mxu0 0.0
        %1913 = vmatprep.subr.mxu0 0.0
        %1914 = vmatpush1.msra.mxu0 0.0
        %1915 = vmatprep.subr.mxu0 0.0
        %1916 = vmatpush1.msra.mxu0 0.0
        %1917 = vmatprep.subr.mxu0 0.0
        %1918 = vmatpush1.msra.mxu0 0.0
        %1919 = vmatprep.subr.mxu0 0.0
        %1920 = vmatpush1.msra.mxu0 0.0
        %1921 = vmatprep.subr.mxu0 0.0
        %1922 = vmatpush1.msra.mxu0 0.0
        %1923 = vmatprep.subr.mxu0 0.0
        %1924 = vmatpush1.msra.mxu0 0.0
        %1925 = vmatprep.subr.mxu0 0.0
        %1926 = vmatpush1.msra.mxu0 0.0
        %1927 = vmatprep.subr.mxu0 0.0
        %1928 = vmatpush1.msra.mxu0 0.0
        %1929 = vmatprep.subr.mxu0 0.0
        %1930 = vmatpush1.msra.mxu0 0.0
        %1931 = vmatprep.subr.mxu0 0.0
        %1932 = vmatpush1.msra.mxu0 0.0
        %1933 = vmatprep.subr.mxu0 0.0
        %1934 = vmatpush1.msra.mxu0 0.0
        %1935 = vmatprep.subr.mxu0 0.0
        %1936 = vmatpush1.msra.mxu0 0.0
        %1937 = vmatprep.subr.mxu0 0.0
        %1938 = vmatpush1.msra.mxu0 0.0
        %1939 = vmatprep.subr.mxu0 0.0
        %1940 = vmatpush1.msra.mxu0 0.0
        %1941 = vmatprep.subr.mxu0 0.0
        %1942 = vmatpush1.msra.mxu0 0.0
        %1943 = vmatprep.subr.mxu0 0.0
        %1944 = vmatpush1.msra.mxu0 0.0
        %1945 = vmatprep.subr.mxu0 0.0
        %1946 = vmatpush1.msra.mxu0 0.0
        %1947 = vmatprep.subr.mxu0 0.0
        %1948 = vmatpush1.msra.mxu0 0.0
        %1949 = vmatprep.subr.mxu0 0.0
        %1950 = vmatpush1.msra.mxu0 0.0
        %1951 = vmatprep.subr.mxu0 0.0
        %1952 = vmatpush1.msra.mxu0 0.0
        %1953 = vmatprep.subr.mxu0 0.0
        %1954 = vmatpush1.msra.mxu0 0.0
        %1955 = vmatprep.mubr.f32.mxu0 0.0
        %1956 = vmatmul.mubr.f32.gmra.mrb[0].mxu0 %v1346
        %v1957 = vpop.f32.mrb[0].mxu0
        %v1958 = vadd.f32 %v1733, %v1957
        %v1959 = vpop.f32.mrb[0].mxu0
        %1960 = vmatprep.mubr.f32.mxu0 0.0
        %1961 = vmatmul.mubr.f32.gmra.mrb[0].mxu0 %v1349
        %v1962 = vpop.f32.mrb[0].mxu0
        %v1963 = vadd.f32 %v1738, %v1962
        %v1964 = vpop.f32.mrb[0].mxu0
        %1965 = vmatprep.mubr.f32.mxu0 0.0
        %1966 = vmatmul.mubr.f32.gmra.mrb[0].mxu0 %v1352
        %v1967 = vpop.f32.mrb[0].mxu0
        %v1968 = vadd.f32 %v1743, %v1967
        %v1969 = vpop.f32.mrb[0].mxu0
        %1970 = vmatprep.mubr.f32.mxu0 0.0
        %1971 = vmatmul.mubr.f32.gmra.mrb[0].mxu0 %v1355
        %v1972 = vpop.f32.mrb[0].mxu0
        %v1973 = vadd.f32 %v1748, %v1972
        %v1974 = vpop.f32.mrb[0].mxu0
        %1975 = vmatprep.mubr.f32.mxu0 0.0
        %1976 = vmatmul.mubr.f32.gmra.mrb[0].mxu0 %v1358
        %v1977 = vpop.f32.mrb[0].mxu0
        %v1978 = vadd.f32 %v1753, %v1977
        %v1979 = vpop.f32.mrb[0].mxu0
        %1980 = vmatprep.mubr.f32.mxu0 0.0
        %1981 = vmatmul.mubr.f32.gmra.mrb[0].mxu0 %v1361
        %v1982 = vpop.f32.mrb[0].mxu0
        %v1983 = vadd.f32 %v1758, %v1982
        %v1984 = vpop.f32.mrb[0].mxu0
        %1985 = vmatprep.mubr.f32.mxu0 0.0
        %1986 = vmatmul.mubr.f32.gmra.mrb[0].mxu0 %v1364
        %v1987 = vpop.f32.mrb[0].mxu0
        %v1988 = vadd.f32 %v1763, %v1987
        %v1989 = vpop.f32.mrb[0].mxu0
        %1990 = vmatprep.mubr.f32.mxu0 0.0
        %1991 = vmatmul.mubr.f32.gmra.mrb[0].mxu0 %v1367
        %v1992 = vpop.f32.mrb[0].mxu0
        %v1993 = vadd.f32 %v1768, %v1992
        %v1994 = vpop.f32.mrb[0].mxu0
        %1995 = vmatprep.mubr.f32.mxu0 0.0
        %1996 = vmatmul.mubr.f32.gmra.mrb[0].mxu0 %v1370
        %v1997 = vpop.f32.mrb[0].mxu0
        %v1998 = vadd.f32 %v1773, %v1997
        %v1999 = vpop.f32.mrb[0].mxu0
        %2000 = vmatprep.mubr.f32.mxu0 0.0
        %2001 = vmatmul.mubr.f32.gmra.mrb[0].mxu0 %v1373
        %v2002 = vpop.f32.mrb[0].mxu0
        %v2003 = vadd.f32 %v1778, %v2002
        %v2004 = vpop.f32.mrb[0].mxu0
        %2005 = vmatprep.mubr.f32.mxu0 0.0
        %2006 = vmatmul.mubr.f32.gmra.mrb[0].mxu0 %v1376
        %v2007 = vpop.f32.mrb[0].mxu0
        %v2008 = vadd.f32 %v1783, %v2007
        %v2009 = vpop.f32.mrb[0].mxu0
        %2010 = vmatprep.mubr.f32.mxu0 0.0
        %2011 = vmatmul.mubr.f32.gmra.mrb[0].mxu0 %v1379
        %v2012 = vpop.f32.mrb[0].mxu0
        %v2013 = vadd.f32 %v1788, %v2012
        %v2014 = vpop.f32.mrb[0].mxu0
        %2015 = vmatprep.mubr.f32.mxu0 0.0
        %2016 = vmatmul.mubr.f32.gmra.mrb[0].mxu0 %v1382
        %v2017 = vpop.f32.mrb[0].mxu0
        %v2018 = vadd.f32 %v1793, %v2017
        %v2019 = vpop.f32.mrb[0].mxu0
        %2020 = vmatprep.mubr.f32.mxu0 0.0
        %2021 = vmatmul.mubr.f32.gmra.mrb[0].mxu0 %v1385
        %v2022 = vpop.f32.mrb[0].mxu0
        %v2023 = vadd.f32 %v1798, %v2022
        %v2024 = vpop.f32.mrb[0].mxu0
        %2025 = vmatprep.mubr.f32.mxu0 0.0
        %2026 = vmatmul.mubr.f32.gmra.mrb[0].mxu0 %v1388
        %v2027 = vpop.f32.mrb[0].mxu0
        %v2028 = vadd.f32 %v1803, %v2027
        %v2029 = vpop.f32.mrb[0].mxu0
        %2030 = vmatprep.mubr.f32.mxu0 0.0
        %2031 = vmatmul.mubr.f32.gmra.mrb[0].mxu0 %v1391
        %v2032 = vpop.f32.mrb[0].mxu0
        %v2033 = vadd.f32 %v1808, %v2032
        %v2034 = vpop.f32.mrb[0].mxu0
        %2035 = vmatprep.mubr.f32.mxu0 0.0
        %2036 = vmatmul.mubr.f32.gmra.mrb[0].mxu0 %v1394
        %v2037 = vpop.f32.mrb[0].mxu0
        %v2038 = vadd.f32 %v1813, %v2037
        %v2039 = vpop.f32.mrb[0].mxu0
        %2040 = vmatprep.mubr.f32.mxu0 0.0
        %2041 = vmatmul.mubr.f32.gmra.mrb[0].mxu0 %v1397
        %v2042 = vpop.f32.mrb[0].mxu0
        %v2043 = vadd.f32 %v1818, %v2042
        %v2044 = vpop.f32.mrb[0].mxu0
        %2045 = vmatprep.mubr.f32.mxu0 0.0
        %2046 = vmatmul.mubr.f32.gmra.mrb[0].mxu0 %v1400
        %v2047 = vpop.f32.mrb[0].mxu0
        %v2048 = vadd.f32 %v1823, %v2047
        %v2049 = vpop.f32.mrb[0].mxu0
        %2050 = vmatprep.mubr.f32.mxu0 0.0
        %2051 = vmatmul.mubr.f32.gmra.mrb[0].mxu0 %v1403
        %v2052 = vpop.f32.mrb[0].mxu0
        %v2053 = vadd.f32 %v1828, %v2052
        %v2054 = vpop.f32.mrb[0].mxu0
        %2055 = vmatprep.mubr.f32.mxu0 0.0
        %2056 = vmatmul.mubr.f32.gmra.mrb[0].mxu0 %v1406
        %v2057 = vpop.f32.mrb[0].mxu0
        %v2058 = vadd.f32 %v1833, %v2057
        %v2059 = vpop.f32.mrb[0].mxu0
        %2060 = vmatprep.mubr.f32.mxu0 0.0
        %2061 = vmatmul.mubr.f32.gmra.mrb[0].mxu0 %v1409
        %v2062 = vpop.f32.mrb[0].mxu0
        %v2063 = vadd.f32 %v1838, %v2062
        %v2064 = vpop.f32.mrb[0].mxu0
        %2065 = vmatprep.mubr.f32.mxu0 0.0
        %2066 = vmatmul.mubr.f32.gmra.mrb[0].mxu0 %v1412
        %v2067 = vpop.f32.mrb[0].mxu0
        %v2068 = vadd.f32 %v1843, %v2067
        %v2069 = vpop.f32.mrb[0].mxu0
        %2070 = vmatprep.mubr.f32.mxu0 0.0
        %2071 = vmatmul.mubr.f32.gmra.mrb[0].mxu0 %v1415
        %v2072 = vpop.f32.mrb[0].mxu0
        %v2073 = vadd.f32 %v1848, %v2072
        %v2074 = vpop.f32.mrb[0].mxu0
        %2075 = vmatprep.mubr.f32.mxu0 0.0
        %2076 = vmatmul.mubr.f32.gmra.mrb[0].mxu0 %v1418
        %v2077 = vpop.f32.mrb[0].mxu0
        %v2078 = vadd.f32 %v1853, %v2077
        %v2079 = vpop.f32.mrb[0].mxu0
        %2080 = vmatprep.mubr.f32.mxu0 0.0
        %2081 = vmatmul.mubr.f32.gmra.mrb[0].mxu0 %v1421
        %v2082 = vpop.f32.mrb[0].mxu0
        %v2083 = vadd.f32 %v1858, %v2082
        %v2084 = vpop.f32.mrb[0].mxu0
        %2085 = vmatprep.mubr.f32.mxu0 0.0
        %2086 = vmatmul.mubr.f32.gmra.mrb[0].mxu0 %v1424
        %v2087 = vpop.f32.mrb[0].mxu0
        %v2088 = vadd.f32 %v1863, %v2087
        %v2089 = vpop.f32.mrb[0].mxu0
        %2090 = vmatprep.mubr.f32.mxu0 0.0
        %2091 = vmatmul.mubr.f32.gmra.mrb[0].mxu0 %v1427
        %v2092 = vpop.f32.mrb[0].mxu0
        %v2093 = vadd.f32 %v1868, %v2092
        %v2094 = vpop.f32.mrb[0].mxu0
        %2095 = vmatprep.mubr.f32.mxu0 0.0
        %2096 = vmatmul.mubr.f32.gmra.mrb[0].mxu0 %v1430
        %v2097 = vpop.f32.mrb[0].mxu0
        %v2098 = vadd.f32 %v1873, %v2097
        %v2099 = vpop.f32.mrb[0].mxu0
        %2100 = vmatprep.mubr.f32.mxu0 0.0
        %2101 = vmatmul.mubr.f32.gmra.mrb[0].mxu0 %v1433
        %v2102 = vpop.f32.mrb[0].mxu0
        %v2103 = vadd.f32 %v1878, %v2102
        %v2104 = vpop.f32.mrb[0].mxu0
        %2105 = vmatprep.mubr.f32.mxu0 0.0
        %2106 = vmatmul.mubr.f32.gmra.mrb[0].mxu0 %v1436
        %v2107 = vpop.f32.mrb[0].mxu0
        %v2108 = vadd.f32 %v1883, %v2107
        %v2109 = vpop.f32.mrb[0].mxu0
        %2110 = vmatprep.mubr.f32.mxu0 0.0
        %2111 = vmatmul.mubr.f32.gmra.mrb[0].mxu0 %v1439
        %v2112 = vpop.f32.mrb[0].mxu0
        %v2113 = vadd.f32 %v1888, %v2112
        %v2114 = vpop.f32.mrb[0].mxu0
        %2115 = vdwg.mxu0
        %vm2116 = vcmp.gt.f32.partialorder %v1958, 0.0
        %vm2117 = vcmp.gt.f32.partialorder %v1963, 0.0
        %vm2118 = vcmp.gt.f32.partialorder %v1968, 0.0
        %vm2119 = vcmp.gt.f32.partialorder %v1973, 0.0
        %vm2120 = vcmp.gt.f32.partialorder %v1978, 0.0
        %vm2121 = vcmp.gt.f32.partialorder %v1983, 0.0
        %vm2122 = vcmp.gt.f32.partialorder %v1988, 0.0
        %vm2123 = vcmp.gt.f32.partialorder %v1993, 0.0
        %vm2124 = vcmp.gt.f32.partialorder %v1998, 0.0
        %vm2125 = vcmp.gt.f32.partialorder %v2003, 0.0
        %vm2126 = vcmp.gt.f32.partialorder %v2008, 0.0
        %vm2127 = vcmp.gt.f32.partialorder %v2013, 0.0
        %vm2128 = vcmp.gt.f32.partialorder %v2018, 0.0
        %vm2129 = vcmp.gt.f32.partialorder %v2023, 0.0
        %vm2130 = vcmp.gt.f32.partialorder %v2028, 0.0
        %vm2131 = vcmp.gt.f32.partialorder %v2033, 0.0
        %vm2132 = vcmp.gt.f32.partialorder %v2038, 0.0
        %vm2133 = vcmp.gt.f32.partialorder %v2043, 0.0
        %vm2134 = vcmp.gt.f32.partialorder %v2048, 0.0
        %vm2135 = vcmp.gt.f32.partialorder %v2053, 0.0
        %vm2136 = vcmp.gt.f32.partialorder %v2058, 0.0
        %vm2137 = vcmp.gt.f32.partialorder %v2063, 0.0
        %vm2138 = vcmp.gt.f32.partialorder %v2068, 0.0
        %vm2139 = vcmp.gt.f32.partialorder %v2073, 0.0
        %vm2140 = vcmp.gt.f32.partialorder %v2078, 0.0
        %vm2141 = vcmp.gt.f32.partialorder %v2083, 0.0
        %vm2142 = vcmp.gt.f32.partialorder %v2088, 0.0
        %vm2143 = vcmp.gt.f32.partialorder %v2093, 0.0
        %vm2144 = vcmp.gt.f32.partialorder %v2098, 0.0
        %vm2145 = vcmp.gt.f32.partialorder %v2103, 0.0
        %vm2146 = vcmp.gt.f32.partialorder %v2108, 0.0
        %vm2147 = vcmp.gt.f32.partialorder %v2113, 0.0
        %v2148 = vmul.f32 %v1958, 0.2
        %v2149 = vmul.f32 %v1963, 0.2
        %v2150 = vmul.f32 %v1968, 0.2
        %v2151 = vmul.f32 %v1973, 0.2
        %v2152 = vmul.f32 %v1978, 0.2
        %v2153 = vmul.f32 %v1983, 0.2
        %v2154 = vmul.f32 %v1988, 0.2
        %v2155 = vmul.f32 %v1993, 0.2
        %v2156 = vmul.f32 %v1998, 0.2
        %v2157 = vmul.f32 %v2003, 0.2
        %v2158 = vmul.f32 %v2008, 0.2
        %v2159 = vmul.f32 %v2013, 0.2
        %v2160 = vmul.f32 %v2018, 0.2
        %v2161 = vmul.f32 %v2023, 0.2
        %v2162 = vmul.f32 %v2028, 0.2
        %v2163 = vmul.f32 %v2033, 0.2
        %v2164 = vmul.f32 %v2038, 0.2
        %v2165 = vmul.f32 %v2043, 0.2
        %v2166 = vmul.f32 %v2048, 0.2
        %v2167 = vmul.f32 %v2053, 0.2
        %v2168 = vmul.f32 %v2058, 0.2
        %v2169 = vmul.f32 %v2063, 0.2
        %v2170 = vmul.f32 %v2068, 0.2
        %v2171 = vmul.f32 %v2073, 0.2
        %v2172 = vmul.f32 %v2078, 0.2
        %v2173 = vmul.f32 %v2083, 0.2
        %v2174 = vmul.f32 %v2088, 0.2
        %v2175 = vmul.f32 %v2093, 0.2
        %v2176 = vmul.f32 %v2098, 0.2
        %v2177 = vmul.f32 %v2103, 0.2
        %v2178 = vmul.f32 %v2108, 0.2
        %v2179 = vmul.f32 %v2113, 0.2
        %v2180 = vsel %vm2116, %v1958, %v2148
        %v2181 = vsel %vm2117, %v1963, %v2149
        %v2182 = vsel %vm2118, %v1968, %v2150
        %v2183 = vsel %vm2119, %v1973, %v2151
        %v2184 = vsel %vm2120, %v1978, %v2152
        %v2185 = vsel %vm2121, %v1983, %v2153
        %v2186 = vsel %vm2122, %v1988, %v2154
        %v2187 = vsel %vm2123, %v1993, %v2155
        %v2188 = vsel %vm2124, %v1998, %v2156
        %v2189 = vsel %vm2125, %v2003, %v2157
        %v2190 = vsel %vm2126, %v2008, %v2158
        %v2191 = vsel %vm2127, %v2013, %v2159
        %v2192 = vsel %vm2128, %v2018, %v2160
        %v2193 = vsel %vm2129, %v2023, %v2161
        %v2194 = vsel %vm2130, %v2028, %v2162
        %v2195 = vsel %vm2131, %v2033, %v2163
        %v2196 = vsel %vm2132, %v2038, %v2164
        %v2197 = vsel %vm2133, %v2043, %v2165
        %v2198 = vsel %vm2134, %v2048, %v2166
        %v2199 = vsel %vm2135, %v2053, %v2167
        %v2200 = vsel %vm2136, %v2058, %v2168
        %v2201 = vsel %vm2137, %v2063, %v2169
        %v2202 = vsel %vm2138, %v2068, %v2170
        %v2203 = vsel %vm2139, %v2073, %v2171
        %v2204 = vsel %vm2140, %v2078, %v2172
        %v2205 = vsel %vm2141, %v2083, %v2173
        %v2206 = vsel %vm2142, %v2088, %v2174
        %v2207 = vsel %vm2143, %v2093, %v2175
        %v2208 = vsel %vm2144, %v2098, %v2176
        %v2209 = vsel %vm2145, %v2103, %v2177
        %v2210 = vsel %vm2146, %v2108, %v2178
        %v2211 = vsel %vm2147, %v2113, %v2179
        %s2212 = scalar_lea.vmem [#allocation3], 24
        %2213 = vst.msk [vmem:[%s2212 + $0x1] sm:$0xff] %vm169, %v2180
        %2214 = vst.msk [vmem:[%s2212 + $0x9] sm:$0xff] %vm169, %v2181
        %2215 = vst.msk [vmem:[%s2212 + $0x19] sm:$0xff] %vm169, %v2182
        %2216 = vst.msk [vmem:[%s2212 + $0x21] sm:$0xff] %vm169, %v2183
        %2217 = vst.msk [vmem:[%s2212 + $0x31] sm:$0xff] %vm169, %v2184
        %2218 = vst.msk [vmem:[%s2212 + $0x39] sm:$0xff] %vm169, %v2185
        %2219 = vst.msk [vmem:[%s2212 + $0x49] sm:$0xff] %vm169, %v2186
        %2220 = vst.msk [vmem:[%s2212 + $0x51] sm:$0xff] %vm169, %v2187
        %2221 = vst.msk [vmem:[%s2212 + $0x61] sm:$0xff] %vm169, %v2188
        %2222 = vst.msk [vmem:[%s2212 + $0x69] sm:$0xff] %vm169, %v2189
        %2223 = vst.msk [vmem:[%s2212 + $0x79] sm:$0xff] %vm169, %v2190
        %2224 = vst.msk [vmem:[%s2212 + $0x81] sm:$0xff] %vm169, %v2191
        %2225 = vst.msk [vmem:[%s2212 + $0x91] sm:$0xff] %vm169, %v2192
        %2226 = vst.msk [vmem:[%s2212 + $0x99] sm:$0xff] %vm169, %v2193
        %2227 = vst.msk [vmem:[%s2212 + $0xa9] sm:$0xff] %vm169, %v2194
        %2228 = vst.msk [vmem:[%s2212 + $0xb1] sm:$0xff] %vm169, %v2195
        %2229 = vst.msk [vmem:[%s2212 + $0xc1] sm:$0xff] %vm169, %v2196
        %2230 = vst.msk [vmem:[%s2212 + $0xc9] sm:$0xff] %vm169, %v2197
        %2231 = vst.msk [vmem:[%s2212 + $0xd9] sm:$0xff] %vm169, %v2198
        %2232 = vst.msk [vmem:[%s2212 + $0xe1] sm:$0xff] %vm169, %v2199
        %2233 = vst.msk [vmem:[%s2212 + $0xf1] sm:$0xff] %vm169, %v2200
        %2234 = vst.msk [vmem:[%s2212 + $0xf9] sm:$0xff] %vm169, %v2201
        %2235 = vst.msk [vmem:[%s2212 + $0x109] sm:$0xff] %vm169, %v2202
        %2236 = vst.msk [vmem:[%s2212 + $0x111] sm:$0xff] %vm169, %v2203
        %2237 = vst.msk [vmem:[%s2212 + $0x121] sm:$0xff] %vm169, %v2204
        %2238 = vst.msk [vmem:[%s2212 + $0x129] sm:$0xff] %vm169, %v2205
        %2239 = vst.msk [vmem:[%s2212 + $0x139] sm:$0xff] %vm169, %v2206
        %2240 = vst.msk [vmem:[%s2212 + $0x141] sm:$0xff] %vm169, %v2207
        %2241 = vst.msk [vmem:[%s2212 + $0x151] sm:$0xff] %vm169, %v2208
        %2242 = vst.msk [vmem:[%s2212 + $0x159] sm:$0xff] %vm169, %v2209
        %2243 = vst.msk [vmem:[%s2212 + $0x169] sm:$0xff] %vm169, %v2210
        %2244 = vst.msk [vmem:[%s2212 + $0x171] sm:$0xff] %vm169, %v2211
        %v2245 = vld [vmem:[%s2] sm:$0xff]
        %v2246 = vld [vmem:[%s2 + $0x8] sm:$0xff]
        %v2247 = vld [vmem:[%s2 + $0x10] sm:$0xff]
        %v2248 = vld [vmem:[%s2 + $0x18] sm:$0xff]
        %v2249 = vld [vmem:[%s2 + $0x20] sm:$0xff]
        %v2250 = vld [vmem:[%s2 + $0x28] sm:$0xff]
        %v2251 = vld [vmem:[%s2 + $0x30] sm:$0xff]
        %v2252 = vld [vmem:[%s2 + $0x38] sm:$0xff]
        %v2253 = vld [vmem:[%s2 + $0x40] sm:$0xff]
        %v2254 = vld [vmem:[%s2 + $0x48] sm:$0xff]
        %v2255 = vld [vmem:[%s2 + $0x50] sm:$0xff]
        %v2256 = vld [vmem:[%s2 + $0x58] sm:$0xff]
        %v2257 = vld [vmem:[%s2 + $0x60] sm:$0xff]
        %v2258 = vld [vmem:[%s2 + $0x68] sm:$0xff]
        %v2259 = vld [vmem:[%s2 + $0x70] sm:$0xff]
        %v2260 = vld [vmem:[%s2 + $0x78] sm:$0xff]
        %v2261 = vld [vmem:[%s2 + $0x80] sm:$0xff]
        %v2262 = vld [vmem:[%s2 + $0x88] sm:$0xff]
        %v2263 = vld [vmem:[%s2 + $0x90] sm:$0xff]
        %v2264 = vld [vmem:[%s2 + $0x98] sm:$0xff]
        %v2265 = vld [vmem:[%s2 + $0xa0] sm:$0xff]
        %v2266 = vld [vmem:[%s2 + $0xa8] sm:$0xff]
        %v2267 = vld [vmem:[%s2 + $0xb0] sm:$0xff]
        %v2268 = vld [vmem:[%s2 + $0xb8] sm:$0xff]
        %v2269 = vld [vmem:[%s2 + $0xc0] sm:$0xff]
        %v2270 = vld [vmem:[%s2 + $0xc8] sm:$0xff]
        %v2271 = vld [vmem:[%s2 + $0xd0] sm:$0xff]
        %v2272 = vld [vmem:[%s2 + $0xd8] sm:$0xff]
        %v2273 = vld [vmem:[%s2 + $0xe0] sm:$0xff]
        %v2274 = vld [vmem:[%s2 + $0xe8] sm:$0xff]
        %v2275 = vld [vmem:[%s2 + $0xf0] sm:$0xff]
        %v2276 = vld [vmem:[%s2 + $0xf8] sm:$0xff]
        %v2277 = vld [vmem:[%s2 + $0x100] sm:$0xff]
        %v2278 = vld [vmem:[%s2 + $0x108] sm:$0xff]
        %v2279 = vld [vmem:[%s2 + $0x110] sm:$0xff]
        %v2280 = vld [vmem:[%s2 + $0x118] sm:$0xff]
        %v2281 = vld [vmem:[%s2 + $0x120] sm:$0xff]
        %v2282 = vld [vmem:[%s2 + $0x128] sm:$0xff]
        %v2283 = vld [vmem:[%s2 + $0x130] sm:$0xff]
        %v2284 = vld [vmem:[%s2 + $0x138] sm:$0xff]
        %v2285 = vld [vmem:[%s2 + $0x140] sm:$0xff]
        %v2286 = vld [vmem:[%s2 + $0x148] sm:$0xff]
        %v2287 = vld [vmem:[%s2 + $0x150] sm:$0xff]
        %v2288 = vld [vmem:[%s2 + $0x158] sm:$0xff]
        %v2289 = vld [vmem:[%s2 + $0x160] sm:$0xff]
        %v2290 = vld [vmem:[%s2 + $0x168] sm:$0xff]
        %v2291 = vld [vmem:[%s2 + $0x170] sm:$0xff]
        %v2292 = vld [vmem:[%s2 + $0x178] sm:$0xff]
        %v2293 = vld [vmem:[%s2 + $0x180] sm:$0xff]
        %v2294 = vld [vmem:[%s2 + $0x188] sm:$0xff]
        %v2295 = vld [vmem:[%s2 + $0x190] sm:$0xff]
        %v2296 = vld [vmem:[%s2 + $0x198] sm:$0xff]
        %v2297 = vld [vmem:[%s2 + $0x1a0] sm:$0xff]
        %v2298 = vld [vmem:[%s2 + $0x1a8] sm:$0xff]
        %v2299 = vld [vmem:[%s2 + $0x1b0] sm:$0xff]
        %v2300 = vld [vmem:[%s2 + $0x1b8] sm:$0xff]
        %v2301 = vld [vmem:[%s2 + $0x1c0] sm:$0xff]
        %v2302 = vld [vmem:[%s2 + $0x1c8] sm:$0xff]
        %v2303 = vld [vmem:[%s2 + $0x1d0] sm:$0xff]
        %v2304 = vld [vmem:[%s2 + $0x1d8] sm:$0xff]
        %v2305 = vld [vmem:[%s2 + $0x1e0] sm:$0xff]
        %v2306 = vld [vmem:[%s2 + $0x1e8] sm:$0xff]
        %v2307 = vld [vmem:[%s2 + $0x1f0] sm:$0xff]
        %v2308 = vld [vmem:[%s2 + $0x1f8] sm:$0xff]
        %v2309 = vld [vmem:[%s2 + $0x200] sm:$0xff]
        %v2310 = vld [vmem:[%s2 + $0x208] sm:$0xff]
        %v2311 = vld [vmem:[%s2 + $0x210] sm:$0xff]
        %v2312 = vld [vmem:[%s2 + $0x218] sm:$0xff]
        %v2313 = vld [vmem:[%s2 + $0x220] sm:$0xff]
        %v2314 = vld [vmem:[%s2 + $0x228] sm:$0xff]
        %v2315 = vld [vmem:[%s2 + $0x230] sm:$0xff]
        %v2316 = vld [vmem:[%s2 + $0x238] sm:$0xff]
        %v2317 = vld [vmem:[#allocation3] sm:$0xff]
        %v2318 = vld [vmem:[#allocation3 + $0x8] sm:$0xff]
        %v2319 = vld [vmem:[#allocation3 + $0x18] sm:$0xff]
        %v2320 = vld [vmem:[#allocation3 + $0x20] sm:$0xff]
        %v2321 = vld [vmem:[#allocation3 + $0x30] sm:$0xff]
        %v2322 = vld [vmem:[#allocation3 + $0x38] sm:$0xff]
        %v2323 = vld [vmem:[#allocation3 + $0x48] sm:$0xff]
        %v2324 = vld [vmem:[#allocation3 + $0x50] sm:$0xff]
        %v2325 = vld [vmem:[#allocation3 + $0x60] sm:$0xff]
        %v2326 = vld [vmem:[#allocation3 + $0x68] sm:$0xff]
        %v2327 = vld [vmem:[#allocation3 + $0x78] sm:$0xff]
        %v2328 = vld [vmem:[#allocation3 + $0x80] sm:$0xff]
        %v2329 = vld [vmem:[#allocation3 + $0x90] sm:$0xff]
        %v2330 = vld [vmem:[#allocation3 + $0x98] sm:$0xff]
        %v2331 = vld [vmem:[#allocation3 + $0xa8] sm:$0xff]
        %v2332 = vld [vmem:[#allocation3 + $0xb0] sm:$0xff]
        %v2333 = vld [vmem:[#allocation3 + $0xc0] sm:$0xff]
        %v2334 = vld [vmem:[#allocation3 + $0xc8] sm:$0xff]
        %v2335 = vld [vmem:[#allocation3 + $0xd8] sm:$0xff]
        %v2336 = vld [vmem:[#allocation3 + $0xe0] sm:$0xff]
        %v2337 = vld [vmem:[#allocation3 + $0xf0] sm:$0xff]
        %v2338 = vld [vmem:[#allocation3 + $0xf8] sm:$0xff]
        %v2339 = vld [vmem:[#allocation3 + $0x108] sm:$0xff]
        %v2340 = vld [vmem:[#allocation3 + $0x110] sm:$0xff]
        %v2341 = vld [vmem:[#allocation3 + $0x120] sm:$0xff]
        %v2342 = vld [vmem:[#allocation3 + $0x128] sm:$0xff]
        %v2343 = vld [vmem:[#allocation3 + $0x138] sm:$0xff]
        %v2344 = vld [vmem:[#allocation3 + $0x140] sm:$0xff]
        %v2345 = vld [vmem:[#allocation3 + $0x150] sm:$0xff]
        %v2346 = vld [vmem:[#allocation3 + $0x158] sm:$0xff]
        %v2347 = vld [vmem:[#allocation3 + $0x168] sm:$0xff]
        %v2348 = vld [vmem:[#allocation3 + $0x170] sm:$0xff]
        %v2349 = vld [vmem:[#allocation3 + $0x1] sm:$0xff]
        %v2350 = vld [vmem:[#allocation3 + $0x9] sm:$0xff]
        %v2351 = vld [vmem:[#allocation3 + $0x19] sm:$0xff]
        %v2352 = vld [vmem:[#allocation3 + $0x21] sm:$0xff]
        %v2353 = vld [vmem:[#allocation3 + $0x31] sm:$0xff]
        %v2354 = vld [vmem:[#allocation3 + $0x39] sm:$0xff]
        %v2355 = vld [vmem:[#allocation3 + $0x49] sm:$0xff]
        %v2356 = vld [vmem:[#allocation3 + $0x51] sm:$0xff]
        %v2357 = vld [vmem:[#allocation3 + $0x61] sm:$0xff]
        %v2358 = vld [vmem:[#allocation3 + $0x69] sm:$0xff]
        %v2359 = vld [vmem:[#allocation3 + $0x79] sm:$0xff]
        %v2360 = vld [vmem:[#allocation3 + $0x81] sm:$0xff]
        %v2361 = vld [vmem:[#allocation3 + $0x91] sm:$0xff]
        %v2362 = vld [vmem:[#allocation3 + $0x99] sm:$0xff]
        %v2363 = vld [vmem:[#allocation3 + $0xa9] sm:$0xff]
        %v2364 = vld [vmem:[#allocation3 + $0xb1] sm:$0xff]
        %v2365 = vld [vmem:[#allocation3 + $0xc1] sm:$0xff]
        %v2366 = vld [vmem:[#allocation3 + $0xc9] sm:$0xff]
        %v2367 = vld [vmem:[#allocation3 + $0xd9] sm:$0xff]
        %v2368 = vld [vmem:[#allocation3 + $0xe1] sm:$0xff]
        %v2369 = vld [vmem:[#allocation3 + $0xf1] sm:$0xff]
        %v2370 = vld [vmem:[#allocation3 + $0xf9] sm:$0xff]
        %v2371 = vld [vmem:[#allocation3 + $0x109] sm:$0xff]
        %v2372 = vld [vmem:[#allocation3 + $0x111] sm:$0xff]
        %v2373 = vld [vmem:[#allocation3 + $0x121] sm:$0xff]
        %v2374 = vld [vmem:[#allocation3 + $0x129] sm:$0xff]
        %v2375 = vld [vmem:[#allocation3 + $0x139] sm:$0xff]
        %v2376 = vld [vmem:[#allocation3 + $0x141] sm:$0xff]
        %v2377 = vld [vmem:[#allocation3 + $0x151] sm:$0xff]
        %v2378 = vld [vmem:[#allocation3 + $0x159] sm:$0xff]
        %v2379 = vld [vmem:[#allocation3 + $0x169] sm:$0xff]
        %v2380 = vld [vmem:[#allocation3 + $0x171] sm:$0xff]
        %v2381 = vld [vmem:[#allocation3 + $0x2] sm:$0xff]
        %v2382 = vld [vmem:[#allocation3 + $0xa] sm:$0xff]
        %v2383 = vld [vmem:[#allocation3 + $0x1a] sm:$0xff]
        %v2384 = vld [vmem:[#allocation3 + $0x22] sm:$0xff]
        %v2385 = vld [vmem:[#allocation3 + $0x32] sm:$0xff]
        %v2386 = vld [vmem:[#allocation3 + $0x3a] sm:$0xff]
        %v2387 = vld [vmem:[#allocation3 + $0x4a] sm:$0xff]
        %v2388 = vld [vmem:[#allocation3 + $0x52] sm:$0xff]
        %v2389 = vld [vmem:[#allocation3 + $0x62] sm:$0xff]
        %v2390 = vld [vmem:[#allocation3 + $0x6a] sm:$0xff]
        %v2391 = vld [vmem:[#allocation3 + $0x7a] sm:$0xff]
        %v2392 = vld [vmem:[#allocation3 + $0x82] sm:$0xff]
        %v2393 = vld [vmem:[#allocation3 + $0x92] sm:$0xff]
        %v2394 = vld [vmem:[#allocation3 + $0x9a] sm:$0xff]
        %v2395 = vld [vmem:[#allocation3 + $0xaa] sm:$0xff]
        %v2396 = vld [vmem:[#allocation3 + $0xb2] sm:$0xff]
        %v2397 = vld [vmem:[#allocation3 + $0xc2] sm:$0xff]
        %v2398 = vld [vmem:[#allocation3 + $0xca] sm:$0xff]
        %v2399 = vld [vmem:[#allocation3 + $0xda] sm:$0xff]
        %v2400 = vld [vmem:[#allocation3 + $0xe2] sm:$0xff]
        %v2401 = vld [vmem:[#allocation3 + $0xf2] sm:$0xff]
        %v2402 = vld [vmem:[#allocation3 + $0xfa] sm:$0xff]
        %v2403 = vld [vmem:[#allocation3 + $0x10a] sm:$0xff]
        %v2404 = vld [vmem:[#allocation3 + $0x112] sm:$0xff]
        %v2405 = vld [vmem:[#allocation3 + $0x122] sm:$0xff]
        %v2406 = vld [vmem:[#allocation3 + $0x12a] sm:$0xff]
        %v2407 = vld [vmem:[#allocation3 + $0x13a] sm:$0xff]
        %v2408 = vld [vmem:[#allocation3 + $0x142] sm:$0xff]
        %v2409 = vld [vmem:[#allocation3 + $0x152] sm:$0xff]
        %v2410 = vld [vmem:[#allocation3 + $0x15a] sm:$0xff]
        %v2411 = vld [vmem:[#allocation3 + $0x16a] sm:$0xff]
        %v2412 = vld [vmem:[#allocation3 + $0x172] sm:$0xff]
        %v2413 = vld [vmem:[%s2212] sm:$0xff]
        %v2414 = vld [vmem:[%s2212 + $0x8] sm:$0xff]
        %v2415 = vld [vmem:[%s2212 + $0x18] sm:$0xff]
        %v2416 = vld [vmem:[%s2212 + $0x20] sm:$0xff]
        %v2417 = vld [vmem:[%s2212 + $0x30] sm:$0xff]
        %v2418 = vld [vmem:[%s2212 + $0x38] sm:$0xff]
        %v2419 = vld [vmem:[%s2212 + $0x48] sm:$0xff]
        %v2420 = vld [vmem:[%s2212 + $0x50] sm:$0xff]
        %v2421 = vld [vmem:[%s2212 + $0x60] sm:$0xff]
        %v2422 = vld [vmem:[%s2212 + $0x68] sm:$0xff]
        %v2423 = vld [vmem:[%s2212 + $0x78] sm:$0xff]
        %v2424 = vld [vmem:[%s2212 + $0x80] sm:$0xff]
        %v2425 = vld [vmem:[%s2212 + $0x90] sm:$0xff]
        %v2426 = vld [vmem:[%s2212 + $0x98] sm:$0xff]
        %v2427 = vld [vmem:[%s2212 + $0xa8] sm:$0xff]
        %v2428 = vld [vmem:[%s2212 + $0xb0] sm:$0xff]
        %v2429 = vld [vmem:[%s2212 + $0xc0] sm:$0xff]
        %v2430 = vld [vmem:[%s2212 + $0xc8] sm:$0xff]
        %v2431 = vld [vmem:[%s2212 + $0xd8] sm:$0xff]
        %v2432 = vld [vmem:[%s2212 + $0xe0] sm:$0xff]
        %v2433 = vld [vmem:[%s2212 + $0xf0] sm:$0xff]
        %v2434 = vld [vmem:[%s2212 + $0xf8] sm:$0xff]
        %v2435 = vld [vmem:[%s2212 + $0x108] sm:$0xff]
        %v2436 = vld [vmem:[%s2212 + $0x110] sm:$0xff]
        %v2437 = vld [vmem:[%s2212 + $0x120] sm:$0xff]
        %v2438 = vld [vmem:[%s2212 + $0x128] sm:$0xff]
        %v2439 = vld [vmem:[%s2212 + $0x138] sm:$0xff]
        %v2440 = vld [vmem:[%s2212 + $0x140] sm:$0xff]
        %v2441 = vld [vmem:[%s2212 + $0x150] sm:$0xff]
        %v2442 = vld [vmem:[%s2212 + $0x158] sm:$0xff]
        %v2443 = vld [vmem:[%s2212 + $0x168] sm:$0xff]
        %v2444 = vld [vmem:[%s2212 + $0x170] sm:$0xff]
        %v2445 = vld [vmem:[%s2212 + $0x1] sm:$0xff]
        %v2446 = vld [vmem:[%s2212 + $0x9] sm:$0xff]
        %v2447 = vld [vmem:[%s2212 + $0x19] sm:$0xff]
        %v2448 = vld [vmem:[%s2212 + $0x21] sm:$0xff]
        %v2449 = vld [vmem:[%s2212 + $0x31] sm:$0xff]
        %v2450 = vld [vmem:[%s2212 + $0x39] sm:$0xff]
        %v2451 = vld [vmem:[%s2212 + $0x49] sm:$0xff]
        %v2452 = vld [vmem:[%s2212 + $0x51] sm:$0xff]
        %v2453 = vld [vmem:[%s2212 + $0x61] sm:$0xff]
        %v2454 = vld [vmem:[%s2212 + $0x69] sm:$0xff]
        %v2455 = vld [vmem:[%s2212 + $0x79] sm:$0xff]
        %v2456 = vld [vmem:[%s2212 + $0x81] sm:$0xff]
        %v2457 = vld [vmem:[%s2212 + $0x91] sm:$0xff]
        %v2458 = vld [vmem:[%s2212 + $0x99] sm:$0xff]
        %v2459 = vld [vmem:[%s2212 + $0xa9] sm:$0xff]
        %v2460 = vld [vmem:[%s2212 + $0xb1] sm:$0xff]
        %v2461 = vld [vmem:[%s2212 + $0xc1] sm:$0xff]
        %v2462 = vld [vmem:[%s2212 + $0xc9] sm:$0xff]
        %v2463 = vld [vmem:[%s2212 + $0xd9] sm:$0xff]
        %v2464 = vld [vmem:[%s2212 + $0xe1] sm:$0xff]
        %v2465 = vld [vmem:[%s2212 + $0xf1] sm:$0xff]
        %v2466 = vld [vmem:[%s2212 + $0xf9] sm:$0xff]
        %v2467 = vld [vmem:[%s2212 + $0x109] sm:$0xff]
        %v2468 = vld [vmem:[%s2212 + $0x111] sm:$0xff]
        %v2469 = vld [vmem:[%s2212 + $0x121] sm:$0xff]
        %v2470 = vld [vmem:[%s2212 + $0x129] sm:$0xff]
        %v2471 = vld [vmem:[%s2212 + $0x139] sm:$0xff]
        %v2472 = vld [vmem:[%s2212 + $0x141] sm:$0xff]
        %v2473 = vld [vmem:[%s2212 + $0x151] sm:$0xff]
        %v2474 = vld [vmem:[%s2212 + $0x159] sm:$0xff]
        %v2475 = vld [vmem:[%s2212 + $0x169] sm:$0xff]
        %v2476 = vld [vmem:[%s2212 + $0x171] sm:$0xff]
        %v2477 = vld [vmem:[%s2212 + $0x2] sm:$0xff]
        %v2478 = vld [vmem:[%s2212 + $0xa] sm:$0xff]
        %v2479 = vld [vmem:[%s2212 + $0x1a] sm:$0xff]
        %v2480 = vld [vmem:[%s2212 + $0x22] sm:$0xff]
        %v2481 = vld [vmem:[%s2212 + $0x32] sm:$0xff]
        %v2482 = vld [vmem:[%s2212 + $0x3a] sm:$0xff]
        %v2483 = vld [vmem:[%s2212 + $0x4a] sm:$0xff]
        %v2484 = vld [vmem:[%s2212 + $0x52] sm:$0xff]
        %v2485 = vld [vmem:[%s2212 + $0x62] sm:$0xff]
        %v2486 = vld [vmem:[%s2212 + $0x6a] sm:$0xff]
        %v2487 = vld [vmem:[%s2212 + $0x7a] sm:$0xff]
        %v2488 = vld [vmem:[%s2212 + $0x82] sm:$0xff]
        %v2489 = vld [vmem:[%s2212 + $0x92] sm:$0xff]
        %v2490 = vld [vmem:[%s2212 + $0x9a] sm:$0xff]
        %v2491 = vld [vmem:[%s2212 + $0xaa] sm:$0xff]
        %v2492 = vld [vmem:[%s2212 + $0xb2] sm:$0xff]
        %v2493 = vld [vmem:[%s2212 + $0xc2] sm:$0xff]
        %v2494 = vld [vmem:[%s2212 + $0xca] sm:$0xff]
        %v2495 = vld [vmem:[%s2212 + $0xda] sm:$0xff]
        %v2496 = vld [vmem:[%s2212 + $0xe2] sm:$0xff]
        %v2497 = vld [vmem:[%s2212 + $0xf2] sm:$0xff]
        %v2498 = vld [vmem:[%s2212 + $0xfa] sm:$0xff]
        %v2499 = vld [vmem:[%s2212 + $0x10a] sm:$0xff]
        %v2500 = vld [vmem:[%s2212 + $0x112] sm:$0xff]
        %v2501 = vld [vmem:[%s2212 + $0x122] sm:$0xff]
        %v2502 = vld [vmem:[%s2212 + $0x12a] sm:$0xff]
        %v2503 = vld [vmem:[%s2212 + $0x13a] sm:$0xff]
        %v2504 = vld [vmem:[%s2212 + $0x142] sm:$0xff]
        %v2505 = vld [vmem:[%s2212 + $0x152] sm:$0xff]
        %v2506 = vld [vmem:[%s2212 + $0x15a] sm:$0xff]
        %v2507 = vld [vmem:[%s2212 + $0x16a] sm:$0xff]
        %v2508 = vld [vmem:[%s2212 + $0x172] sm:$0xff]
        %s2509 = scalar_lea.vmem [#allocation3], 48
        %v2510 = vld [vmem:[%s2509] sm:$0xff]
        %v2511 = vld [vmem:[%s2509 + $0x8] sm:$0xff]
        %v2512 = vld [vmem:[%s2509 + $0x18] sm:$0xff]
        %v2513 = vld [vmem:[%s2509 + $0x20] sm:$0xff]
        %v2514 = vld [vmem:[%s2509 + $0x30] sm:$0xff]
        %v2515 = vld [vmem:[%s2509 + $0x38] sm:$0xff]
        %v2516 = vld [vmem:[%s2509 + $0x48] sm:$0xff]
        %v2517 = vld [vmem:[%s2509 + $0x50] sm:$0xff]
        %v2518 = vld [vmem:[%s2509 + $0x60] sm:$0xff]
        %v2519 = vld [vmem:[%s2509 + $0x68] sm:$0xff]
        %v2520 = vld [vmem:[%s2509 + $0x78] sm:$0xff]
        %v2521 = vld [vmem:[%s2509 + $0x80] sm:$0xff]
        %v2522 = vld [vmem:[%s2509 + $0x90] sm:$0xff]
        %v2523 = vld [vmem:[%s2509 + $0x98] sm:$0xff]
        %v2524 = vld [vmem:[%s2509 + $0xa8] sm:$0xff]
        %v2525 = vld [vmem:[%s2509 + $0xb0] sm:$0xff]
        %v2526 = vld [vmem:[%s2509 + $0xc0] sm:$0xff]
        %v2527 = vld [vmem:[%s2509 + $0xc8] sm:$0xff]
        %v2528 = vld [vmem:[%s2509 + $0xd8] sm:$0xff]
        %v2529 = vld [vmem:[%s2509 + $0xe0] sm:$0xff]
        %v2530 = vld [vmem:[%s2509 + $0xf0] sm:$0xff]
        %v2531 = vld [vmem:[%s2509 + $0xf8] sm:$0xff]
        %v2532 = vld [vmem:[%s2509 + $0x108] sm:$0xff]
        %v2533 = vld [vmem:[%s2509 + $0x110] sm:$0xff]
        %v2534 = vld [vmem:[%s2509 + $0x120] sm:$0xff]
        %v2535 = vld [vmem:[%s2509 + $0x128] sm:$0xff]
        %v2536 = vld [vmem:[%s2509 + $0x138] sm:$0xff]
        %v2537 = vld [vmem:[%s2509 + $0x140] sm:$0xff]
        %v2538 = vld [vmem:[%s2509 + $0x150] sm:$0xff]
        %v2539 = vld [vmem:[%s2509 + $0x158] sm:$0xff]
        %v2540 = vld [vmem:[%s2509 + $0x168] sm:$0xff]
        %v2541 = vld [vmem:[%s2509 + $0x170] sm:$0xff]
        %v2542 = vld [vmem:[%s2509 + $0x1] sm:$0xff]
        %v2543 = vld [vmem:[%s2509 + $0x9] sm:$0xff]
        %v2544 = vld [vmem:[%s2509 + $0x19] sm:$0xff]
        %v2545 = vld [vmem:[%s2509 + $0x21] sm:$0xff]
        %v2546 = vld [vmem:[%s2509 + $0x31] sm:$0xff]
        %v2547 = vld [vmem:[%s2509 + $0x39] sm:$0xff]
        %v2548 = vld [vmem:[%s2509 + $0x49] sm:$0xff]
        %v2549 = vld [vmem:[%s2509 + $0x51] sm:$0xff]
        %v2550 = vld [vmem:[%s2509 + $0x61] sm:$0xff]
        %v2551 = vld [vmem:[%s2509 + $0x69] sm:$0xff]
        %v2552 = vld [vmem:[%s2509 + $0x79] sm:$0xff]
        %v2553 = vld [vmem:[%s2509 + $0x81] sm:$0xff]
        %v2554 = vld [vmem:[%s2509 + $0x91] sm:$0xff]
        %v2555 = vld [vmem:[%s2509 + $0x99] sm:$0xff]
        %v2556 = vld [vmem:[%s2509 + $0xa9] sm:$0xff]
        %v2557 = vld [vmem:[%s2509 + $0xb1] sm:$0xff]
        %v2558 = vld [vmem:[%s2509 + $0xc1] sm:$0xff]
        %v2559 = vld [vmem:[%s2509 + $0xc9] sm:$0xff]
        %v2560 = vld [vmem:[%s2509 + $0xd9] sm:$0xff]
        %v2561 = vld [vmem:[%s2509 + $0xe1] sm:$0xff]
        %v2562 = vld [vmem:[%s2509 + $0xf1] sm:$0xff]
        %v2563 = vld [vmem:[%s2509 + $0xf9] sm:$0xff]
        %v2564 = vld [vmem:[%s2509 + $0x109] sm:$0xff]
        %v2565 = vld [vmem:[%s2509 + $0x111] sm:$0xff]
        %v2566 = vld [vmem:[%s2509 + $0x121] sm:$0xff]
        %v2567 = vld [vmem:[%s2509 + $0x129] sm:$0xff]
        %v2568 = vld [vmem:[%s2509 + $0x139] sm:$0xff]
        %v2569 = vld [vmem:[%s2509 + $0x141] sm:$0xff]
        %v2570 = vld [vmem:[%s2509 + $0x151] sm:$0xff]
        %v2571 = vld [vmem:[%s2509 + $0x159] sm:$0xff]
        %v2572 = vld [vmem:[%s2509 + $0x169] sm:$0xff]
        %v2573 = vld [vmem:[%s2509 + $0x171] sm:$0xff]
        %v2574 = vld [vmem:[%s2509 + $0x2] sm:$0xff]
        %v2575 = vld [vmem:[%s2509 + $0xa] sm:$0xff]
        %v2576 = vld [vmem:[%s2509 + $0x1a] sm:$0xff]
        %v2577 = vld [vmem:[%s2509 + $0x22] sm:$0xff]
        %v2578 = vld [vmem:[%s2509 + $0x32] sm:$0xff]
        %v2579 = vld [vmem:[%s2509 + $0x3a] sm:$0xff]
        %v2580 = vld [vmem:[%s2509 + $0x4a] sm:$0xff]
        %v2581 = vld [vmem:[%s2509 + $0x52] sm:$0xff]
        %v2582 = vld [vmem:[%s2509 + $0x62] sm:$0xff]
        %v2583 = vld [vmem:[%s2509 + $0x6a] sm:$0xff]
        %v2584 = vld [vmem:[%s2509 + $0x7a] sm:$0xff]
        %v2585 = vld [vmem:[%s2509 + $0x82] sm:$0xff]
        %v2586 = vld [vmem:[%s2509 + $0x92] sm:$0xff]
        %v2587 = vld [vmem:[%s2509 + $0x9a] sm:$0xff]
        %v2588 = vld [vmem:[%s2509 + $0xaa] sm:$0xff]
        %v2589 = vld [vmem:[%s2509 + $0xb2] sm:$0xff]
        %v2590 = vld [vmem:[%s2509 + $0xc2] sm:$0xff]
        %v2591 = vld [vmem:[%s2509 + $0xca] sm:$0xff]
        %v2592 = vld [vmem:[%s2509 + $0xda] sm:$0xff]
        %v2593 = vld [vmem:[%s2509 + $0xe2] sm:$0xff]
        %v2594 = vld [vmem:[%s2509 + $0xf2] sm:$0xff]
        %v2595 = vld [vmem:[%s2509 + $0xfa] sm:$0xff]
        %v2596 = vld [vmem:[%s2509 + $0x10a] sm:$0xff]
        %v2597 = vld [vmem:[%s2509 + $0x112] sm:$0xff]
        %v2598 = vld [vmem:[%s2509 + $0x122] sm:$0xff]
        %v2599 = vld [vmem:[%s2509 + $0x12a] sm:$0xff]
        %v2600 = vld [vmem:[%s2509 + $0x13a] sm:$0xff]
        %v2601 = vld [vmem:[%s2509 + $0x142] sm:$0xff]
        %v2602 = vld [vmem:[%s2509 + $0x152] sm:$0xff]
        %v2603 = vld [vmem:[%s2509 + $0x15a] sm:$0xff]
        %v2604 = vld [vmem:[%s2509 + $0x16a] sm:$0xff]
        %v2605 = vld [vmem:[%s2509 + $0x172] sm:$0xff]
        %2638 = vrot.lane.b32.xlu0 %v2349, 64
        %v2639 = vpop.permute.xlu0 %2638
        %2640 = vrot.lane.b32.xlu0 %v2350, 64
        %v2641 = vpop.permute.xlu0 %2640
        %2642 = vrot.lane.b32.xlu0 %v2351, 64
        %v2643 = vpop.permute.xlu0 %2642
        %2644 = vrot.lane.b32.xlu0 %v2352, 64
        %v2645 = vpop.permute.xlu0 %2644
        %2646 = vrot.lane.b32.xlu0 %v2353, 64
        %v2647 = vpop.permute.xlu0 %2646
        %2648 = vrot.lane.b32.xlu0 %v2354, 64
        %v2649 = vpop.permute.xlu0 %2648
        %2650 = vrot.lane.b32.xlu0 %v2355, 64
        %v2651 = vpop.permute.xlu0 %2650
        %2652 = vrot.lane.b32.xlu0 %v2356, 64
        %v2653 = vpop.permute.xlu0 %2652
        %2654 = vrot.lane.b32.xlu0 %v2357, 64
        %v2655 = vpop.permute.xlu0 %2654
        %2656 = vrot.lane.b32.xlu0 %v2358, 64
        %v2657 = vpop.permute.xlu0 %2656
        %2658 = vrot.lane.b32.xlu0 %v2359, 64
        %v2659 = vpop.permute.xlu0 %2658
        %2660 = vrot.lane.b32.xlu0 %v2360, 64
        %v2661 = vpop.permute.xlu0 %2660
        %2662 = vrot.lane.b32.xlu0 %v2361, 64
        %v2663 = vpop.permute.xlu0 %2662
        %2664 = vrot.lane.b32.xlu0 %v2362, 64
        %v2665 = vpop.permute.xlu0 %2664
        %2666 = vrot.lane.b32.xlu0 %v2363, 64
        %v2667 = vpop.permute.xlu0 %2666
        %2668 = vrot.lane.b32.xlu0 %v2364, 64
        %v2669 = vpop.permute.xlu0 %2668
        %2670 = vrot.lane.b32.xlu0 %v2365, 64
        %v2671 = vpop.permute.xlu0 %2670
        %2672 = vrot.lane.b32.xlu0 %v2366, 64
        %v2673 = vpop.permute.xlu0 %2672
        %2674 = vrot.lane.b32.xlu0 %v2367, 64
        %v2675 = vpop.permute.xlu0 %2674
        %2676 = vrot.lane.b32.xlu0 %v2368, 64
        %v2677 = vpop.permute.xlu0 %2676
        %2678 = vrot.lane.b32.xlu0 %v2369, 64
        %v2679 = vpop.permute.xlu0 %2678
        %2680 = vrot.lane.b32.xlu0 %v2370, 64
        %v2681 = vpop.permute.xlu0 %2680
        %2682 = vrot.lane.b32.xlu0 %v2371, 64
        %v2683 = vpop.permute.xlu0 %2682
        %2684 = vrot.lane.b32.xlu0 %v2372, 64
        %v2685 = vpop.permute.xlu0 %2684
        %2686 = vrot.lane.b32.xlu0 %v2373, 64
        %v2687 = vpop.permute.xlu0 %2686
        %2688 = vrot.lane.b32.xlu0 %v2374, 64
        %v2689 = vpop.permute.xlu0 %2688
        %2690 = vrot.lane.b32.xlu0 %v2375, 64
        %v2691 = vpop.permute.xlu0 %2690
        %2692 = vrot.lane.b32.xlu0 %v2376, 64
        %v2693 = vpop.permute.xlu0 %2692
        %2694 = vrot.lane.b32.xlu0 %v2377, 64
        %v2695 = vpop.permute.xlu0 %2694
        %2696 = vrot.lane.b32.xlu0 %v2378, 64
        %v2697 = vpop.permute.xlu0 %2696
        %2698 = vrot.lane.b32.xlu0 %v2379, 64
        %v2699 = vpop.permute.xlu0 %2698
        %2700 = vrot.lane.b32.xlu0 %v2380, 64
        %v2701 = vpop.permute.xlu0 %2700
        %2766 = vrot.lane.b32.xlu0 %v2413, 64
        %v2767 = vpop.permute.xlu0 %2766
        %2768 = vrot.lane.b32.xlu0 %v2414, 64
        %v2769 = vpop.permute.xlu0 %2768
        %2770 = vrot.lane.b32.xlu0 %v2415, 64
        %v2771 = vpop.permute.xlu0 %2770
        %2772 = vrot.lane.b32.xlu0 %v2416, 64
        %v2773 = vpop.permute.xlu0 %2772
        %2774 = vrot.lane.b32.xlu0 %v2417, 64
        %v2775 = vpop.permute.xlu0 %2774
        %2776 = vrot.lane.b32.xlu0 %v2418, 64
        %v2777 = vpop.permute.xlu0 %2776
        %2778 = vrot.lane.b32.xlu0 %v2419, 64
        %v2779 = vpop.permute.xlu0 %2778
        %2780 = vrot.lane.b32.xlu0 %v2420, 64
        %v2781 = vpop.permute.xlu0 %2780
        %2782 = vrot.lane.b32.xlu0 %v2421, 64
        %v2783 = vpop.permute.xlu0 %2782
        %2784 = vrot.lane.b32.xlu0 %v2422, 64
        %v2785 = vpop.permute.xlu0 %2784
        %2786 = vrot.lane.b32.xlu0 %v2423, 64
        %v2787 = vpop.permute.xlu0 %2786
        %2788 = vrot.lane.b32.xlu0 %v2424, 64
        %v2789 = vpop.permute.xlu0 %2788
        %2790 = vrot.lane.b32.xlu0 %v2425, 64
        %v2791 = vpop.permute.xlu0 %2790
        %2792 = vrot.lane.b32.xlu0 %v2426, 64
        %v2793 = vpop.permute.xlu0 %2792
        %2794 = vrot.lane.b32.xlu0 %v2427, 64
        %v2795 = vpop.permute.xlu0 %2794
        %2796 = vrot.lane.b32.xlu0 %v2428, 64
        %v2797 = vpop.permute.xlu0 %2796
        %2798 = vrot.lane.b32.xlu0 %v2429, 64
        %v2799 = vpop.permute.xlu0 %2798
        %2800 = vrot.lane.b32.xlu0 %v2430, 64
        %v2801 = vpop.permute.xlu0 %2800
        %2802 = vrot.lane.b32.xlu0 %v2431, 64
        %v2803 = vpop.permute.xlu0 %2802
        %2804 = vrot.lane.b32.xlu0 %v2432, 64
        %v2805 = vpop.permute.xlu0 %2804
        %2806 = vrot.lane.b32.xlu0 %v2433, 64
        %v2807 = vpop.permute.xlu0 %2806
        %2808 = vrot.lane.b32.xlu0 %v2434, 64
        %v2809 = vpop.permute.xlu0 %2808
        %2810 = vrot.lane.b32.xlu0 %v2435, 64
        %v2811 = vpop.permute.xlu0 %2810
        %2812 = vrot.lane.b32.xlu0 %v2436, 64
        %v2813 = vpop.permute.xlu0 %2812
        %2814 = vrot.lane.b32.xlu0 %v2437, 64
        %v2815 = vpop.permute.xlu0 %2814
        %2816 = vrot.lane.b32.xlu0 %v2438, 64
        %v2817 = vpop.permute.xlu0 %2816
        %2818 = vrot.lane.b32.xlu0 %v2439, 64
        %v2819 = vpop.permute.xlu0 %2818
        %2820 = vrot.lane.b32.xlu0 %v2440, 64
        %v2821 = vpop.permute.xlu0 %2820
        %2822 = vrot.lane.b32.xlu0 %v2441, 64
        %v2823 = vpop.permute.xlu0 %2822
        %2824 = vrot.lane.b32.xlu0 %v2442, 64
        %v2825 = vpop.permute.xlu0 %2824
        %2826 = vrot.lane.b32.xlu0 %v2443, 64
        %v2827 = vpop.permute.xlu0 %2826
        %2828 = vrot.lane.b32.xlu0 %v2444, 64
        %v2829 = vpop.permute.xlu0 %2828
        %2894 = vrot.lane.b32.xlu0 %v2477, 64
        %v2895 = vpop.permute.xlu0 %2894
        %2896 = vrot.lane.b32.xlu0 %v2478, 64
        %v2897 = vpop.permute.xlu0 %2896
        %2898 = vrot.lane.b32.xlu0 %v2479, 64
        %v2899 = vpop.permute.xlu0 %2898
        %2900 = vrot.lane.b32.xlu0 %v2480, 64
        %v2901 = vpop.permute.xlu0 %2900
        %2902 = vrot.lane.b32.xlu0 %v2481, 64
        %v2903 = vpop.permute.xlu0 %2902
        %2904 = vrot.lane.b32.xlu0 %v2482, 64
        %v2905 = vpop.permute.xlu0 %2904
        %2906 = vrot.lane.b32.xlu0 %v2483, 64
        %v2907 = vpop.permute.xlu0 %2906
        %2908 = vrot.lane.b32.xlu0 %v2484, 64
        %v2909 = vpop.permute.xlu0 %2908
        %2910 = vrot.lane.b32.xlu0 %v2485, 64
        %v2911 = vpop.permute.xlu0 %2910
        %2912 = vrot.lane.b32.xlu0 %v2486, 64
        %v2913 = vpop.permute.xlu0 %2912
        %2914 = vrot.lane.b32.xlu0 %v2487, 64
        %v2915 = vpop.permute.xlu0 %2914
        %2916 = vrot.lane.b32.xlu0 %v2488, 64
        %v2917 = vpop.permute.xlu0 %2916
        %2918 = vrot.lane.b32.xlu0 %v2489, 64
        %v2919 = vpop.permute.xlu0 %2918
        %2920 = vrot.lane.b32.xlu0 %v2490, 64
        %v2921 = vpop.permute.xlu0 %2920
        %2922 = vrot.lane.b32.xlu0 %v2491, 64
        %v2923 = vpop.permute.xlu0 %2922
        %2924 = vrot.lane.b32.xlu0 %v2492, 64
        %v2925 = vpop.permute.xlu0 %2924
        %2926 = vrot.lane.b32.xlu0 %v2493, 64
        %v2927 = vpop.permute.xlu0 %2926
        %2928 = vrot.lane.b32.xlu0 %v2494, 64
        %v2929 = vpop.permute.xlu0 %2928
        %2930 = vrot.lane.b32.xlu0 %v2495, 64
        %v2931 = vpop.permute.xlu0 %2930
        %2932 = vrot.lane.b32.xlu0 %v2496, 64
        %v2933 = vpop.permute.xlu0 %2932
        %2934 = vrot.lane.b32.xlu0 %v2497, 64
        %v2935 = vpop.permute.xlu0 %2934
        %2936 = vrot.lane.b32.xlu0 %v2498, 64
        %v2937 = vpop.permute.xlu0 %2936
        %2938 = vrot.lane.b32.xlu0 %v2499, 64
        %v2939 = vpop.permute.xlu0 %2938
        %2940 = vrot.lane.b32.xlu0 %v2500, 64
        %v2941 = vpop.permute.xlu0 %2940
        %2942 = vrot.lane.b32.xlu0 %v2501, 64
        %v2943 = vpop.permute.xlu0 %2942
        %2944 = vrot.lane.b32.xlu0 %v2502, 64
        %v2945 = vpop.permute.xlu0 %2944
        %2946 = vrot.lane.b32.xlu0 %v2503, 64
        %v2947 = vpop.permute.xlu0 %2946
        %2948 = vrot.lane.b32.xlu0 %v2504, 64
        %v2949 = vpop.permute.xlu0 %2948
        %2950 = vrot.lane.b32.xlu0 %v2505, 64
        %v2951 = vpop.permute.xlu0 %2950
        %2952 = vrot.lane.b32.xlu0 %v2506, 64
        %v2953 = vpop.permute.xlu0 %2952
        %2954 = vrot.lane.b32.xlu0 %v2507, 64
        %v2955 = vpop.permute.xlu0 %2954
        %2956 = vrot.lane.b32.xlu0 %v2508, 64
        %v2957 = vpop.permute.xlu0 %2956
        %3022 = vrot.lane.b32.xlu0 %v2542, 64
        %v3023 = vpop.permute.xlu0 %3022
        %3024 = vrot.lane.b32.xlu0 %v2543, 64
        %v3025 = vpop.permute.xlu0 %3024
        %3026 = vrot.lane.b32.xlu0 %v2544, 64
        %v3027 = vpop.permute.xlu0 %3026
        %3028 = vrot.lane.b32.xlu0 %v2545, 64
        %v3029 = vpop.permute.xlu0 %3028
        %3030 = vrot.lane.b32.xlu0 %v2546, 64
        %v3031 = vpop.permute.xlu0 %3030
        %3032 = vrot.lane.b32.xlu0 %v2547, 64
        %v3033 = vpop.permute.xlu0 %3032
        %3034 = vrot.lane.b32.xlu0 %v2548, 64
        %v3035 = vpop.permute.xlu0 %3034
        %3036 = vrot.lane.b32.xlu0 %v2549, 64
        %v3037 = vpop.permute.xlu0 %3036
        %3038 = vrot.lane.b32.xlu0 %v2550, 64
        %v3039 = vpop.permute.xlu0 %3038
        %3040 = vrot.lane.b32.xlu0 %v2551, 64
        %v3041 = vpop.permute.xlu0 %3040
        %3042 = vrot.lane.b32.xlu0 %v2552, 64
        %v3043 = vpop.permute.xlu0 %3042
        %3044 = vrot.lane.b32.xlu0 %v2553, 64
        %v3045 = vpop.permute.xlu0 %3044
        %3046 = vrot.lane.b32.xlu0 %v2554, 64
        %v3047 = vpop.permute.xlu0 %3046
        %3048 = vrot.lane.b32.xlu0 %v2555, 64
        %v3049 = vpop.permute.xlu0 %3048
        %3050 = vrot.lane.b32.xlu0 %v2556, 64
        %v3051 = vpop.permute.xlu0 %3050
        %3052 = vrot.lane.b32.xlu0 %v2557, 64
        %v3053 = vpop.permute.xlu0 %3052
        %3054 = vrot.lane.b32.xlu0 %v2558, 64
        %v3055 = vpop.permute.xlu0 %3054
        %3056 = vrot.lane.b32.xlu0 %v2559, 64
        %v3057 = vpop.permute.xlu0 %3056
        %3058 = vrot.lane.b32.xlu0 %v2560, 64
        %v3059 = vpop.permute.xlu0 %3058
        %3060 = vrot.lane.b32.xlu0 %v2561, 64
        %v3061 = vpop.permute.xlu0 %3060
        %3062 = vrot.lane.b32.xlu0 %v2562, 64
        %v3063 = vpop.permute.xlu0 %3062
        %3064 = vrot.lane.b32.xlu0 %v2563, 64
        %v3065 = vpop.permute.xlu0 %3064
        %3066 = vrot.lane.b32.xlu0 %v2564, 64
        %v3067 = vpop.permute.xlu0 %3066
        %3068 = vrot.lane.b32.xlu0 %v2565, 64
        %v3069 = vpop.permute.xlu0 %3068
        %3070 = vrot.lane.b32.xlu0 %v2566, 64
        %v3071 = vpop.permute.xlu0 %3070
        %3072 = vrot.lane.b32.xlu0 %v2567, 64
        %v3073 = vpop.permute.xlu0 %3072
        %3074 = vrot.lane.b32.xlu0 %v2568, 64
        %v3075 = vpop.permute.xlu0 %3074
        %3076 = vrot.lane.b32.xlu0 %v2569, 64
        %v3077 = vpop.permute.xlu0 %3076
        %3078 = vrot.lane.b32.xlu0 %v2570, 64
        %v3079 = vpop.permute.xlu0 %3078
        %3080 = vrot.lane.b32.xlu0 %v2571, 64
        %v3081 = vpop.permute.xlu0 %3080
        %3082 = vrot.lane.b32.xlu0 %v2572, 64
        %v3083 = vpop.permute.xlu0 %3082
        %3084 = vrot.lane.b32.xlu0 %v2573, 64
        %v3085 = vpop.permute.xlu0 %3084
        %v3118 = vsel %vm169, %v2317, %v2639
        %v3119 = vsel %vm169, %v2318, %v2641
        %v3120 = vsel %vm169, %v2319, %v2643
        %v3121 = vsel %vm169, %v2320, %v2645
        %v3122 = vsel %vm169, %v2321, %v2647
        %v3123 = vsel %vm169, %v2322, %v2649
        %v3124 = vsel %vm169, %v2323, %v2651
        %v3125 = vsel %vm169, %v2324, %v2653
        %v3126 = vsel %vm169, %v2325, %v2655
        %v3127 = vsel %vm169, %v2326, %v2657
        %v3128 = vsel %vm169, %v2327, %v2659
        %v3129 = vsel %vm169, %v2328, %v2661
        %v3130 = vsel %vm169, %v2329, %v2663
        %v3131 = vsel %vm169, %v2330, %v2665
        %v3132 = vsel %vm169, %v2331, %v2667
        %v3133 = vsel %vm169, %v2332, %v2669
        %v3134 = vsel %vm169, %v2333, %v2671
        %v3135 = vsel %vm169, %v2334, %v2673
        %v3136 = vsel %vm169, %v2335, %v2675
        %v3137 = vsel %vm169, %v2336, %v2677
        %v3138 = vsel %vm169, %v2337, %v2679
        %v3139 = vsel %vm169, %v2338, %v2681
        %v3140 = vsel %vm169, %v2339, %v2683
        %v3141 = vsel %vm169, %v2340, %v2685
        %v3142 = vsel %vm169, %v2341, %v2687
        %v3143 = vsel %vm169, %v2342, %v2689
        %v3144 = vsel %vm169, %v2343, %v2691
        %v3145 = vsel %vm169, %v2344, %v2693
        %v3146 = vsel %vm169, %v2345, %v2695
        %v3147 = vsel %vm169, %v2346, %v2697
        %v3148 = vsel %vm169, %v2347, %v2699
        %v3149 = vsel %vm169, %v2348, %v2701
        %v3150 = vsel %vm169, %v2381, %v2767
        %v3151 = vsel %vm169, %v2382, %v2769
        %v3152 = vsel %vm169, %v2383, %v2771
        %v3153 = vsel %vm169, %v2384, %v2773
        %v3154 = vsel %vm169, %v2385, %v2775
        %v3155 = vsel %vm169, %v2386, %v2777
        %v3156 = vsel %vm169, %v2387, %v2779
        %v3157 = vsel %vm169, %v2388, %v2781
        %v3158 = vsel %vm169, %v2389, %v2783
        %v3159 = vsel %vm169, %v2390, %v2785
        %v3160 = vsel %vm169, %v2391, %v2787
        %v3161 = vsel %vm169, %v2392, %v2789
        %v3162 = vsel %vm169, %v2393, %v2791
        %v3163 = vsel %vm169, %v2394, %v2793
        %v3164 = vsel %vm169, %v2395, %v2795
        %v3165 = vsel %vm169, %v2396, %v2797
        %v3166 = vsel %vm169, %v2397, %v2799
        %v3167 = vsel %vm169, %v2398, %v2801
        %v3168 = vsel %vm169, %v2399, %v2803
        %v3169 = vsel %vm169, %v2400, %v2805
        %v3170 = vsel %vm169, %v2401, %v2807
        %v3171 = vsel %vm169, %v2402, %v2809
        %v3172 = vsel %vm169, %v2403, %v2811
        %v3173 = vsel %vm169, %v2404, %v2813
        %v3174 = vsel %vm169, %v2405, %v2815
        %v3175 = vsel %vm169, %v2406, %v2817
        %v3176 = vsel %vm169, %v2407, %v2819
        %v3177 = vsel %vm169, %v2408, %v2821
        %v3178 = vsel %vm169, %v2409, %v2823
        %v3179 = vsel %vm169, %v2410, %v2825
        %v3180 = vsel %vm169, %v2411, %v2827
        %v3181 = vsel %vm169, %v2412, %v2829
        %v3182 = vsel %vm169, %v2445, %v2895
        %v3183 = vsel %vm169, %v2446, %v2897
        %v3184 = vsel %vm169, %v2447, %v2899
        %v3185 = vsel %vm169, %v2448, %v2901
        %v3186 = vsel %vm169, %v2449, %v2903
        %v3187 = vsel %vm169, %v2450, %v2905
        %v3188 = vsel %vm169, %v2451, %v2907
        %v3189 = vsel %vm169, %v2452, %v2909
        %v3190 = vsel %vm169, %v2453, %v2911
        %v3191 = vsel %vm169, %v2454, %v2913
        %v3192 = vsel %vm169, %v2455, %v2915
        %v3193 = vsel %vm169, %v2456, %v2917
        %v3194 = vsel %vm169, %v2457, %v2919
        %v3195 = vsel %vm169, %v2458, %v2921
        %v3196 = vsel %vm169, %v2459, %v2923
        %v3197 = vsel %vm169, %v2460, %v2925
        %v3198 = vsel %vm169, %v2461, %v2927
        %v3199 = vsel %vm169, %v2462, %v2929
        %v3200 = vsel %vm169, %v2463, %v2931
        %v3201 = vsel %vm169, %v2464, %v2933
        %v3202 = vsel %vm169, %v2465, %v2935
        %v3203 = vsel %vm169, %v2466, %v2937
        %v3204 = vsel %vm169, %v2467, %v2939
        %v3205 = vsel %vm169, %v2468, %v2941
        %v3206 = vsel %vm169, %v2469, %v2943
        %v3207 = vsel %vm169, %v2470, %v2945
        %v3208 = vsel %vm169, %v2471, %v2947
        %v3209 = vsel %vm169, %v2472, %v2949
        %v3210 = vsel %vm169, %v2473, %v2951
        %v3211 = vsel %vm169, %v2474, %v2953
        %v3212 = vsel %vm169, %v2475, %v2955
        %v3213 = vsel %vm169, %v2476, %v2957
        %v3214 = vsel %vm169, %v2510, %v3023
        %v3215 = vsel %vm169, %v2511, %v3025
        %v3216 = vsel %vm169, %v2512, %v3027
        %v3217 = vsel %vm169, %v2513, %v3029
        %v3218 = vsel %vm169, %v2514, %v3031
        %v3219 = vsel %vm169, %v2515, %v3033
        %v3220 = vsel %vm169, %v2516, %v3035
        %v3221 = vsel %vm169, %v2517, %v3037
        %v3222 = vsel %vm169, %v2518, %v3039
        %v3223 = vsel %vm169, %v2519, %v3041
        %v3224 = vsel %vm169, %v2520, %v3043
        %v3225 = vsel %vm169, %v2521, %v3045
        %v3226 = vsel %vm169, %v2522, %v3047
        %v3227 = vsel %vm169, %v2523, %v3049
        %v3228 = vsel %vm169, %v2524, %v3051
        %v3229 = vsel %vm169, %v2525, %v3053
        %v3230 = vsel %vm169, %v2526, %v3055
        %v3231 = vsel %vm169, %v2527, %v3057
        %v3232 = vsel %vm169, %v2528, %v3059
        %v3233 = vsel %vm169, %v2529, %v3061
        %v3234 = vsel %vm169, %v2530, %v3063
        %v3235 = vsel %vm169, %v2531, %v3065
        %v3236 = vsel %vm169, %v2532, %v3067
        %v3237 = vsel %vm169, %v2533, %v3069
        %v3238 = vsel %vm169, %v2534, %v3071
        %v3239 = vsel %vm169, %v2535, %v3073
        %v3240 = vsel %vm169, %v2536, %v3075
        %v3241 = vsel %vm169, %v2537, %v3077
        %v3242 = vsel %vm169, %v2538, %v3079
        %v3243 = vsel %vm169, %v2539, %v3081
        %v3244 = vsel %vm169, %v2540, %v3083
        %v3245 = vsel %vm169, %v2541, %v3085
        %v3247 = vsel %vm169, %v2574, 0
        %v3250 = vsel %vm169, %v2575, 0
        %v3253 = vsel %vm169, %v2576, 0
        %v3256 = vsel %vm169, %v2577, 0
        %v3259 = vsel %vm169, %v2578, 0
        %v3262 = vsel %vm169, %v2579, 0
        %v3265 = vsel %vm169, %v2580, 0
        %v3268 = vsel %vm169, %v2581, 0
        %v3271 = vsel %vm169, %v2582, 0
        %v3274 = vsel %vm169, %v2583, 0
        %v3277 = vsel %vm169, %v2584, 0
        %v3280 = vsel %vm169, %v2585, 0
        %v3283 = vsel %vm169, %v2586, 0
        %v3286 = vsel %vm169, %v2587, 0
        %v3289 = vsel %vm169, %v2588, 0
        %v3292 = vsel %vm169, %v2589, 0
        %v3295 = vsel %vm169, %v2590, 0
        %v3298 = vsel %vm169, %v2591, 0
        %v3301 = vsel %vm169, %v2592, 0
        %v3304 = vsel %vm169, %v2593, 0
        %v3307 = vsel %vm169, %v2594, 0
        %v3310 = vsel %vm169, %v2595, 0
        %v3313 = vsel %vm169, %v2596, 0
        %v3316 = vsel %vm169, %v2597, 0
        %v3319 = vsel %vm169, %v2598, 0
        %v3322 = vsel %vm169, %v2599, 0
        %v3325 = vsel %vm169, %v2600, 0
        %v3328 = vsel %vm169, %v2601, 0
        %v3331 = vsel %vm169, %v2602, 0
        %v3334 = vsel %vm169, %v2603, 0
        %v3337 = vsel %vm169, %v2604, 0
        %v3340 = vsel %vm169, %v2605, 0
        %3342 = vmatprep.subr.mxu0 0.0
        %3343 = vmatpush1.msra.mxu0 %v2245
        %3344 = vmatprep.subr.mxu0 0.0
        %3345 = vmatpush1.msra.mxu0 %v2246
        %3346 = vmatprep.subr.mxu0 0.0
        %3347 = vmatpush1.msra.mxu0 %v2247
        %3348 = vmatprep.subr.mxu0 0.0
        %3349 = vmatpush1.msra.mxu0 %v2248
        %3350 = vmatprep.subr.mxu0 0.0
        %3351 = vmatpush1.msra.mxu0 %v2249
        %3352 = vmatprep.subr.mxu0 0.0
        %3353 = vmatpush1.msra.mxu0 %v2250
        %3354 = vmatprep.subr.mxu0 0.0
        %3355 = vmatpush1.msra.mxu0 %v2251
        %3356 = vmatprep.subr.mxu0 0.0
        %3357 = vmatpush1.msra.mxu0 %v2252
        %3358 = vmatprep.subr.mxu0 0.0
        %3359 = vmatpush1.msra.mxu0 %v2253
        %3360 = vmatprep.subr.mxu0 0.0
        %3361 = vmatpush1.msra.mxu0 %v2254
        %3362 = vmatprep.subr.mxu0 0.0
        %3363 = vmatpush1.msra.mxu0 %v2255
        %3364 = vmatprep.subr.mxu0 0.0
        %3365 = vmatpush1.msra.mxu0 %v2256
        %3366 = vmatprep.subr.mxu0 0.0
        %3367 = vmatpush1.msra.mxu0 %v2257
        %3368 = vmatprep.subr.mxu0 0.0
        %3369 = vmatpush1.msra.mxu0 %v2258
        %3370 = vmatprep.subr.mxu0 0.0
        %3371 = vmatpush1.msra.mxu0 %v2259
        %3372 = vmatprep.subr.mxu0 0.0
        %3373 = vmatpush1.msra.mxu0 %v2260
        %3374 = vmatprep.subr.mxu0 0.0
        %3375 = vmatpush1.msra.mxu0 %v2261
        %3376 = vmatprep.subr.mxu0 0.0
        %3377 = vmatpush1.msra.mxu0 %v2262
        %3378 = vmatprep.subr.mxu0 0.0
        %3379 = vmatpush1.msra.mxu0 %v2263
        %3380 = vmatprep.subr.mxu0 0.0
        %3381 = vmatpush1.msra.mxu0 %v2264
        %3382 = vmatprep.subr.mxu0 0.0
        %3383 = vmatpush1.msra.mxu0 %v2265
        %3384 = vmatprep.subr.mxu0 0.0
        %3385 = vmatpush1.msra.mxu0 %v2266
        %3386 = vmatprep.subr.mxu0 0.0
        %3387 = vmatpush1.msra.mxu0 %v2267
        %3388 = vmatprep.subr.mxu0 0.0
        %3389 = vmatpush1.msra.mxu0 %v2268
        %3390 = vmatprep.subr.mxu0 0.0
        %3391 = vmatpush1.msra.mxu0 %v2269
        %3392 = vmatprep.subr.mxu0 0.0
        %3393 = vmatpush1.msra.mxu0 %v2270
        %3394 = vmatprep.subr.mxu0 0.0
        %3395 = vmatpush1.msra.mxu0 %v2271
        %3396 = vmatprep.subr.mxu0 0.0
        %3397 = vmatpush1.msra.mxu0 %v2272
        %3398 = vmatprep.subr.mxu0 0.0
        %3399 = vmatpush1.msra.mxu0 %v2273
        %3400 = vmatprep.subr.mxu0 0.0
        %3401 = vmatpush1.msra.mxu0 %v2274
        %3402 = vmatprep.subr.mxu0 0.0
        %3403 = vmatpush1.msra.mxu0 %v2275
        %3404 = vmatprep.subr.mxu0 0.0
        %3405 = vmatpush1.msra.mxu0 %v2276
        %3406 = vmatprep.mubr.f32.mxu0 %v3150
        %3407 = vmatmul.mubr.f32.gmra.mrb[0].mxu0 %v3118
        %v3408 = vpop.f32.mrb[0].mxu0
        %v3409 = vadd.f32 %v279, %v3408
        %v3410 = vpop.f32.mrb[0].mxu0
        %3411 = vmatprep.mubr.f32.mxu0 %v3151
        %3412 = vmatmul.mubr.f32.gmra.mrb[0].mxu0 %v3119
        %v3413 = vpop.f32.mrb[0].mxu0
        %v3414 = vadd.f32 %v280, %v3413
        %v3415 = vpop.f32.mrb[0].mxu0
        %3416 = vmatprep.mubr.f32.mxu0 %v3152
        %3417 = vmatmul.mubr.f32.gmra.mrb[0].mxu0 %v3120
        %v3418 = vpop.f32.mrb[0].mxu0
        %v3419 = vadd.f32 %v281, %v3418
        %v3420 = vpop.f32.mrb[0].mxu0
        %3421 = vmatprep.mubr.f32.mxu0 %v3153
        %3422 = vmatmul.mubr.f32.gmra.mrb[0].mxu0 %v3121
        %v3423 = vpop.f32.mrb[0].mxu0
        %v3424 = vadd.f32 %v282, %v3423
        %v3425 = vpop.f32.mrb[0].mxu0
        %3426 = vmatprep.mubr.f32.mxu0 %v3154
        %3427 = vmatmul.mubr.f32.gmra.mrb[0].mxu0 %v3122
        %v3428 = vpop.f32.mrb[0].mxu0
        %v3429 = vadd.f32 %v283, %v3428
        %v3430 = vpop.f32.mrb[0].mxu0
        %3431 = vmatprep.mubr.f32.mxu0 %v3155
        %3432 = vmatmul.mubr.f32.gmra.mrb[0].mxu0 %v3123
        %v3433 = vpop.f32.mrb[0].mxu0
        %v3434 = vadd.f32 %v284, %v3433
        %v3435 = vpop.f32.mrb[0].mxu0
        %3436 = vmatprep.mubr.f32.mxu0 %v3156
        %3437 = vmatmul.mubr.f32.gmra.mrb[0].mxu0 %v3124
        %v3438 = vpop.f32.mrb[0].mxu0
        %v3439 = vadd.f32 %v285, %v3438
        %v3440 = vpop.f32.mrb[0].mxu0
        %3441 = vmatprep.mubr.f32.mxu0 %v3157
        %3442 = vmatmul.mubr.f32.gmra.mrb[0].mxu0 %v3125
        %v3443 = vpop.f32.mrb[0].mxu0
        %v3444 = vadd.f32 %v286, %v3443
        %v3445 = vpop.f32.mrb[0].mxu0
        %3446 = vmatprep.mubr.f32.mxu0 %v3158
        %3447 = vmatmul.mubr.f32.gmra.mrb[0].mxu0 %v3126
        %v3448 = vpop.f32.mrb[0].mxu0
        %v3449 = vadd.f32 %v287, %v3448
        %v3450 = vpop.f32.mrb[0].mxu0
        %3451 = vmatprep.mubr.f32.mxu0 %v3159
        %3452 = vmatmul.mubr.f32.gmra.mrb[0].mxu0 %v3127
        %v3453 = vpop.f32.mrb[0].mxu0
        %v3454 = vadd.f32 %v288, %v3453
        %v3455 = vpop.f32.mrb[0].mxu0
        %3456 = vmatprep.mubr.f32.mxu0 %v3160
        %3457 = vmatmul.mubr.f32.gmra.mrb[0].mxu0 %v3128
        %v3458 = vpop.f32.mrb[0].mxu0
        %v3459 = vadd.f32 %v289, %v3458
        %v3460 = vpop.f32.mrb[0].mxu0
        %3461 = vmatprep.mubr.f32.mxu0 %v3161
        %3462 = vmatmul.mubr.f32.gmra.mrb[0].mxu0 %v3129
        %v3463 = vpop.f32.mrb[0].mxu0
        %v3464 = vadd.f32 %v290, %v3463
        %v3465 = vpop.f32.mrb[0].mxu0
        %3466 = vmatprep.mubr.f32.mxu0 %v3162
        %3467 = vmatmul.mubr.f32.gmra.mrb[0].mxu0 %v3130
        %v3468 = vpop.f32.mrb[0].mxu0
        %v3469 = vadd.f32 %v291, %v3468
        %v3470 = vpop.f32.mrb[0].mxu0
        %3471 = vmatprep.mubr.f32.mxu0 %v3163
        %3472 = vmatmul.mubr.f32.gmra.mrb[0].mxu0 %v3131
        %v3473 = vpop.f32.mrb[0].mxu0
        %v3474 = vadd.f32 %v292, %v3473
        %v3475 = vpop.f32.mrb[0].mxu0
        %3476 = vmatprep.mubr.f32.mxu0 %v3164
        %3477 = vmatmul.mubr.f32.gmra.mrb[0].mxu0 %v3132
        %v3478 = vpop.f32.mrb[0].mxu0
        %v3479 = vadd.f32 %v293, %v3478
        %v3480 = vpop.f32.mrb[0].mxu0
        %3481 = vmatprep.mubr.f32.mxu0 %v3165
        %3482 = vmatmul.mubr.f32.gmra.mrb[0].mxu0 %v3133
        %v3483 = vpop.f32.mrb[0].mxu0
        %v3484 = vadd.f32 %v294, %v3483
        %v3485 = vpop.f32.mrb[0].mxu0
        %3486 = vmatprep.mubr.f32.mxu0 %v3166
        %3487 = vmatmul.mubr.f32.gmra.mrb[0].mxu0 %v3134
        %v3488 = vpop.f32.mrb[0].mxu0
        %v3489 = vadd.f32 %v295, %v3488
        %v3490 = vpop.f32.mrb[0].mxu0
        %3491 = vmatprep.mubr.f32.mxu0 %v3167
        %3492 = vmatmul.mubr.f32.gmra.mrb[0].mxu0 %v3135
        %v3493 = vpop.f32.mrb[0].mxu0
        %v3494 = vadd.f32 %v296, %v3493
        %v3495 = vpop.f32.mrb[0].mxu0
        %3496 = vmatprep.mubr.f32.mxu0 %v3168
        %3497 = vmatmul.mubr.f32.gmra.mrb[0].mxu0 %v3136
        %v3498 = vpop.f32.mrb[0].mxu0
        %v3499 = vadd.f32 %v297, %v3498
        %v3500 = vpop.f32.mrb[0].mxu0
        %3501 = vmatprep.mubr.f32.mxu0 %v3169
        %3502 = vmatmul.mubr.f32.gmra.mrb[0].mxu0 %v3137
        %v3503 = vpop.f32.mrb[0].mxu0
        %v3504 = vadd.f32 %v298, %v3503
        %v3505 = vpop.f32.mrb[0].mxu0
        %3506 = vmatprep.mubr.f32.mxu0 %v3170
        %3507 = vmatmul.mubr.f32.gmra.mrb[0].mxu0 %v3138
        %v3508 = vpop.f32.mrb[0].mxu0
        %v3509 = vadd.f32 %v299, %v3508
        %v3510 = vpop.f32.mrb[0].mxu0
        %3511 = vmatprep.mubr.f32.mxu0 %v3171
        %3512 = vmatmul.mubr.f32.gmra.mrb[0].mxu0 %v3139
        %v3513 = vpop.f32.mrb[0].mxu0
        %v3514 = vadd.f32 %v300, %v3513
        %v3515 = vpop.f32.mrb[0].mxu0
        %3516 = vmatprep.mubr.f32.mxu0 %v3172
        %3517 = vmatmul.mubr.f32.gmra.mrb[0].mxu0 %v3140
        %v3518 = vpop.f32.mrb[0].mxu0
        %v3519 = vadd.f32 %v301, %v3518
        %v3520 = vpop.f32.mrb[0].mxu0
        %3521 = vmatprep.mubr.f32.mxu0 %v3173
        %3522 = vmatmul.mubr.f32.gmra.mrb[0].mxu0 %v3141
        %v3523 = vpop.f32.mrb[0].mxu0
        %v3524 = vadd.f32 %v302, %v3523
        %v3525 = vpop.f32.mrb[0].mxu0
        %3526 = vmatprep.mubr.f32.mxu0 %v3174
        %3527 = vmatmul.mubr.f32.gmra.mrb[0].mxu0 %v3142
        %v3528 = vpop.f32.mrb[0].mxu0
        %v3529 = vadd.f32 %v303, %v3528
        %v3530 = vpop.f32.mrb[0].mxu0
        %3531 = vmatprep.mubr.f32.mxu0 %v3175
        %3532 = vmatmul.mubr.f32.gmra.mrb[0].mxu0 %v3143
        %v3533 = vpop.f32.mrb[0].mxu0
        %v3534 = vadd.f32 %v304, %v3533
        %v3535 = vpop.f32.mrb[0].mxu0
        %3536 = vmatprep.mubr.f32.mxu0 %v3176
        %3537 = vmatmul.mubr.f32.gmra.mrb[0].mxu0 %v3144
        %v3538 = vpop.f32.mrb[0].mxu0
        %v3539 = vadd.f32 %v305, %v3538
        %v3540 = vpop.f32.mrb[0].mxu0
        %3541 = vmatprep.mubr.f32.mxu0 %v3177
        %3542 = vmatmul.mubr.f32.gmra.mrb[0].mxu0 %v3145
        %v3543 = vpop.f32.mrb[0].mxu0
        %v3544 = vadd.f32 %v306, %v3543
        %v3545 = vpop.f32.mrb[0].mxu0
        %3546 = vmatprep.mubr.f32.mxu0 %v3178
        %3547 = vmatmul.mubr.f32.gmra.mrb[0].mxu0 %v3146
        %v3548 = vpop.f32.mrb[0].mxu0
        %v3549 = vadd.f32 %v307, %v3548
        %v3550 = vpop.f32.mrb[0].mxu0
        %3551 = vmatprep.mubr.f32.mxu0 %v3179
        %3552 = vmatmul.mubr.f32.gmra.mrb[0].mxu0 %v3147
        %v3553 = vpop.f32.mrb[0].mxu0
        %v3554 = vadd.f32 %v308, %v3553
        %v3555 = vpop.f32.mrb[0].mxu0
        %3556 = vmatprep.mubr.f32.mxu0 %v3180
        %3557 = vmatmul.mubr.f32.gmra.mrb[0].mxu0 %v3148
        %v3558 = vpop.f32.mrb[0].mxu0
        %v3559 = vadd.f32 %v309, %v3558
        %v3560 = vpop.f32.mrb[0].mxu0
        %3561 = vmatprep.mubr.f32.mxu0 %v3181
        %3562 = vmatmul.mubr.f32.gmra.mrb[0].mxu0 %v3149
        %v3563 = vpop.f32.mrb[0].mxu0
        %v3564 = vadd.f32 %v310, %v3563
        %v3565 = vpop.f32.mrb[0].mxu0
        %3566 = vdwg.mxu0
        %3567 = vmatprep.subr.mxu0 0.0
        %3568 = vmatpush1.msra.mxu0 %v2277
        %3569 = vmatprep.subr.mxu0 0.0
        %3570 = vmatpush1.msra.mxu0 %v2278
        %3571 = vmatprep.subr.mxu0 0.0
        %3572 = vmatpush1.msra.mxu0 %v2279
        %3573 = vmatprep.subr.mxu0 0.0
        %3574 = vmatpush1.msra.mxu0 %v2280
        %3575 = vmatprep.subr.mxu0 0.0
        %3576 = vmatpush1.msra.mxu0 %v2281
        %3577 = vmatprep.subr.mxu0 0.0
        %3578 = vmatpush1.msra.mxu0 %v2282
        %3579 = vmatprep.subr.mxu0 0.0
        %3580 = vmatpush1.msra.mxu0 %v2283
        %3581 = vmatprep.subr.mxu0 0.0
        %3582 = vmatpush1.msra.mxu0 %v2284
        %3583 = vmatprep.subr.mxu0 0.0
        %3584 = vmatpush1.msra.mxu0 %v2285
        %3585 = vmatprep.subr.mxu0 0.0
        %3586 = vmatpush1.msra.mxu0 %v2286
        %3587 = vmatprep.subr.mxu0 0.0
        %3588 = vmatpush1.msra.mxu0 %v2287
        %3589 = vmatprep.subr.mxu0 0.0
        %3590 = vmatpush1.msra.mxu0 %v2288
        %3591 = vmatprep.subr.mxu0 0.0
        %3592 = vmatpush1.msra.mxu0 %v2289
        %3593 = vmatprep.subr.mxu0 0.0
        %3594 = vmatpush1.msra.mxu0 %v2290
        %3595 = vmatprep.subr.mxu0 0.0
        %3596 = vmatpush1.msra.mxu0 %v2291
        %3597 = vmatprep.subr.mxu0 0.0
        %3598 = vmatpush1.msra.mxu0 %v2292
        %3599 = vmatprep.subr.mxu0 0.0
        %3600 = vmatpush1.msra.mxu0 %v2293
        %3601 = vmatprep.subr.mxu0 0.0
        %3602 = vmatpush1.msra.mxu0 %v2294
        %3603 = vmatprep.subr.mxu0 0.0
        %3604 = vmatpush1.msra.mxu0 %v2295
        %3605 = vmatprep.subr.mxu0 0.0
        %3606 = vmatpush1.msra.mxu0 %v2296
        %3607 = vmatprep.subr.mxu0 0.0
        %3608 = vmatpush1.msra.mxu0 %v2297
        %3609 = vmatprep.subr.mxu0 0.0
        %3610 = vmatpush1.msra.mxu0 %v2298
        %3611 = vmatprep.subr.mxu0 0.0
        %3612 = vmatpush1.msra.mxu0 %v2299
        %3613 = vmatprep.subr.mxu0 0.0
        %3614 = vmatpush1.msra.mxu0 %v2300
        %3615 = vmatprep.subr.mxu0 0.0
        %3616 = vmatpush1.msra.mxu0 %v2301
        %3617 = vmatprep.subr.mxu0 0.0
        %3618 = vmatpush1.msra.mxu0 %v2302
        %3619 = vmatprep.subr.mxu0 0.0
        %3620 = vmatpush1.msra.mxu0 %v2303
        %3621 = vmatprep.subr.mxu0 0.0
        %3622 = vmatpush1.msra.mxu0 %v2304
        %3623 = vmatprep.subr.mxu0 0.0
        %3624 = vmatpush1.msra.mxu0 %v2305
        %3625 = vmatprep.subr.mxu0 0.0
        %3626 = vmatpush1.msra.mxu0 %v2306
        %3627 = vmatprep.subr.mxu0 0.0
        %3628 = vmatpush1.msra.mxu0 %v2307
        %3629 = vmatprep.subr.mxu0 0.0
        %3630 = vmatpush1.msra.mxu0 %v2308
        %3631 = vmatprep.mubr.f32.mxu0 %v3214
        %3632 = vmatmul.mubr.f32.gmra.mrb[0].mxu0 %v3182
        %v3633 = vpop.f32.mrb[0].mxu0
        %v3634 = vadd.f32 %v3409, %v3633
        %v3635 = vpop.f32.mrb[0].mxu0
        %3636 = vmatprep.mubr.f32.mxu0 %v3215
        %3637 = vmatmul.mubr.f32.gmra.mrb[0].mxu0 %v3183
        %v3638 = vpop.f32.mrb[0].mxu0
        %v3639 = vadd.f32 %v3414, %v3638
        %v3640 = vpop.f32.mrb[0].mxu0
        %3641 = vmatprep.mubr.f32.mxu0 %v3216
        %3642 = vmatmul.mubr.f32.gmra.mrb[0].mxu0 %v3184
        %v3643 = vpop.f32.mrb[0].mxu0
        %v3644 = vadd.f32 %v3419, %v3643
        %v3645 = vpop.f32.mrb[0].mxu0
        %3646 = vmatprep.mubr.f32.mxu0 %v3217
        %3647 = vmatmul.mubr.f32.gmra.mrb[0].mxu0 %v3185
        %v3648 = vpop.f32.mrb[0].mxu0
        %v3649 = vadd.f32 %v3424, %v3648
        %v3650 = vpop.f32.mrb[0].mxu0
        %3651 = vmatprep.mubr.f32.mxu0 %v3218
        %3652 = vmatmul.mubr.f32.gmra.mrb[0].mxu0 %v3186
        %v3653 = vpop.f32.mrb[0].mxu0
        %v3654 = vadd.f32 %v3429, %v3653
        %v3655 = vpop.f32.mrb[0].mxu0
        %3656 = vmatprep.mubr.f32.mxu0 %v3219
        %3657 = vmatmul.mubr.f32.gmra.mrb[0].mxu0 %v3187
        %v3658 = vpop.f32.mrb[0].mxu0
        %v3659 = vadd.f32 %v3434, %v3658
        %v3660 = vpop.f32.mrb[0].mxu0
        %3661 = vmatprep.mubr.f32.mxu0 %v3220
        %3662 = vmatmul.mubr.f32.gmra.mrb[0].mxu0 %v3188
        %v3663 = vpop.f32.mrb[0].mxu0
        %v3664 = vadd.f32 %v3439, %v3663
        %v3665 = vpop.f32.mrb[0].mxu0
        %3666 = vmatprep.mubr.f32.mxu0 %v3221
        %3667 = vmatmul.mubr.f32.gmra.mrb[0].mxu0 %v3189
        %v3668 = vpop.f32.mrb[0].mxu0
        %v3669 = vadd.f32 %v3444, %v3668
        %v3670 = vpop.f32.mrb[0].mxu0
        %3671 = vmatprep.mubr.f32.mxu0 %v3222
        %3672 = vmatmul.mubr.f32.gmra.mrb[0].mxu0 %v3190
        %v3673 = vpop.f32.mrb[0].mxu0
        %v3674 = vadd.f32 %v3449, %v3673
        %v3675 = vpop.f32.mrb[0].mxu0
        %3676 = vmatprep.mubr.f32.mxu0 %v3223
        %3677 = vmatmul.mubr.f32.gmra.mrb[0].mxu0 %v3191
        %v3678 = vpop.f32.mrb[0].mxu0
        %v3679 = vadd.f32 %v3454, %v3678
        %v3680 = vpop.f32.mrb[0].mxu0
        %3681 = vmatprep.mubr.f32.mxu0 %v3224
        %3682 = vmatmul.mubr.f32.gmra.mrb[0].mxu0 %v3192
        %v3683 = vpop.f32.mrb[0].mxu0
        %v3684 = vadd.f32 %v3459, %v3683
        %v3685 = vpop.f32.mrb[0].mxu0
        %3686 = vmatprep.mubr.f32.mxu0 %v3225
        %3687 = vmatmul.mubr.f32.gmra.mrb[0].mxu0 %v3193
        %v3688 = vpop.f32.mrb[0].mxu0
        %v3689 = vadd.f32 %v3464, %v3688
        %v3690 = vpop.f32.mrb[0].mxu0
        %3691 = vmatprep.mubr.f32.mxu0 %v3226
        %3692 = vmatmul.mubr.f32.gmra.mrb[0].mxu0 %v3194
        %v3693 = vpop.f32.mrb[0].mxu0
        %v3694 = vadd.f32 %v3469, %v3693
        %v3695 = vpop.f32.mrb[0].mxu0
        %3696 = vmatprep.mubr.f32.mxu0 %v3227
        %3697 = vmatmul.mubr.f32.gmra.mrb[0].mxu0 %v3195
        %v3698 = vpop.f32.mrb[0].mxu0
        %v3699 = vadd.f32 %v3474, %v3698
        %v3700 = vpop.f32.mrb[0].mxu0
        %3701 = vmatprep.mubr.f32.mxu0 %v3228
        %3702 = vmatmul.mubr.f32.gmra.mrb[0].mxu0 %v3196
        %v3703 = vpop.f32.mrb[0].mxu0
        %v3704 = vadd.f32 %v3479, %v3703
        %v3705 = vpop.f32.mrb[0].mxu0
        %3706 = vmatprep.mubr.f32.mxu0 %v3229
        %3707 = vmatmul.mubr.f32.gmra.mrb[0].mxu0 %v3197
        %v3708 = vpop.f32.mrb[0].mxu0
        %v3709 = vadd.f32 %v3484, %v3708
        %v3710 = vpop.f32.mrb[0].mxu0
        %3711 = vmatprep.mubr.f32.mxu0 %v3230
        %3712 = vmatmul.mubr.f32.gmra.mrb[0].mxu0 %v3198
        %v3713 = vpop.f32.mrb[0].mxu0
        %v3714 = vadd.f32 %v3489, %v3713
        %v3715 = vpop.f32.mrb[0].mxu0
        %3716 = vmatprep.mubr.f32.mxu0 %v3231
        %3717 = vmatmul.mubr.f32.gmra.mrb[0].mxu0 %v3199
        %v3718 = vpop.f32.mrb[0].mxu0
        %v3719 = vadd.f32 %v3494, %v3718
        %v3720 = vpop.f32.mrb[0].mxu0
        %3721 = vmatprep.mubr.f32.mxu0 %v3232
        %3722 = vmatmul.mubr.f32.gmra.mrb[0].mxu0 %v3200
        %v3723 = vpop.f32.mrb[0].mxu0
        %v3724 = vadd.f32 %v3499, %v3723
        %v3725 = vpop.f32.mrb[0].mxu0
        %3726 = vmatprep.mubr.f32.mxu0 %v3233
        %3727 = vmatmul.mubr.f32.gmra.mrb[0].mxu0 %v3201
        %v3728 = vpop.f32.mrb[0].mxu0
        %v3729 = vadd.f32 %v3504, %v3728
        %v3730 = vpop.f32.mrb[0].mxu0
        %3731 = vmatprep.mubr.f32.mxu0 %v3234
        %3732 = vmatmul.mubr.f32.gmra.mrb[0].mxu0 %v3202
        %v3733 = vpop.f32.mrb[0].mxu0
        %v3734 = vadd.f32 %v3509, %v3733
        %v3735 = vpop.f32.mrb[0].mxu0
        %3736 = vmatprep.mubr.f32.mxu0 %v3235
        %3737 = vmatmul.mubr.f32.gmra.mrb[0].mxu0 %v3203
        %v3738 = vpop.f32.mrb[0].mxu0
        %v3739 = vadd.f32 %v3514, %v3738
        %v3740 = vpop.f32.mrb[0].mxu0
        %3741 = vmatprep.mubr.f32.mxu0 %v3236
        %3742 = vmatmul.mubr.f32.gmra.mrb[0].mxu0 %v3204
        %v3743 = vpop.f32.mrb[0].mxu0
        %v3744 = vadd.f32 %v3519, %v3743
        %v3745 = vpop.f32.mrb[0].mxu0
        %3746 = vmatprep.mubr.f32.mxu0 %v3237
        %3747 = vmatmul.mubr.f32.gmra.mrb[0].mxu0 %v3205
        %v3748 = vpop.f32.mrb[0].mxu0
        %v3749 = vadd.f32 %v3524, %v3748
        %v3750 = vpop.f32.mrb[0].mxu0
        %3751 = vmatprep.mubr.f32.mxu0 %v3238
        %3752 = vmatmul.mubr.f32.gmra.mrb[0].mxu0 %v3206
        %v3753 = vpop.f32.mrb[0].mxu0
        %v3754 = vadd.f32 %v3529, %v3753
        %v3755 = vpop.f32.mrb[0].mxu0
        %3756 = vmatprep.mubr.f32.mxu0 %v3239
        %3757 = vmatmul.mubr.f32.gmra.mrb[0].mxu0 %v3207
        %v3758 = vpop.f32.mrb[0].mxu0
        %v3759 = vadd.f32 %v3534, %v3758
        %v3760 = vpop.f32.mrb[0].mxu0
        %3761 = vmatprep.mubr.f32.mxu0 %v3240
        %3762 = vmatmul.mubr.f32.gmra.mrb[0].mxu0 %v3208
        %v3763 = vpop.f32.mrb[0].mxu0
        %v3764 = vadd.f32 %v3539, %v3763
        %v3765 = vpop.f32.mrb[0].mxu0
        %3766 = vmatprep.mubr.f32.mxu0 %v3241
        %3767 = vmatmul.mubr.f32.gmra.mrb[0].mxu0 %v3209
        %v3768 = vpop.f32.mrb[0].mxu0
        %v3769 = vadd.f32 %v3544, %v3768
        %v3770 = vpop.f32.mrb[0].mxu0
        %3771 = vmatprep.mubr.f32.mxu0 %v3242
        %3772 = vmatmul.mubr.f32.gmra.mrb[0].mxu0 %v3210
        %v3773 = vpop.f32.mrb[0].mxu0
        %v3774 = vadd.f32 %v3549, %v3773
        %v3775 = vpop.f32.mrb[0].mxu0
        %3776 = vmatprep.mubr.f32.mxu0 %v3243
        %3777 = vmatmul.mubr.f32.gmra.mrb[0].mxu0 %v3211
        %v3778 = vpop.f32.mrb[0].mxu0
        %v3779 = vadd.f32 %v3554, %v3778
        %v3780 = vpop.f32.mrb[0].mxu0
        %3781 = vmatprep.mubr.f32.mxu0 %v3244
        %3782 = vmatmul.mubr.f32.gmra.mrb[0].mxu0 %v3212
        %v3783 = vpop.f32.mrb[0].mxu0
        %v3784 = vadd.f32 %v3559, %v3783
        %v3785 = vpop.f32.mrb[0].mxu0
        %3786 = vmatprep.mubr.f32.mxu0 %v3245
        %3787 = vmatmul.mubr.f32.gmra.mrb[0].mxu0 %v3213
        %v3788 = vpop.f32.mrb[0].mxu0
        %v3789 = vadd.f32 %v3564, %v3788
        %v3790 = vpop.f32.mrb[0].mxu0
        %3791 = vdwg.mxu0
        %3792 = vmatprep.subr.mxu0 0.0
        %3793 = vmatpush1.msra.mxu0 %v2309
        %3794 = vmatprep.subr.mxu0 0.0
        %3795 = vmatpush1.msra.mxu0 %v2310
        %3796 = vmatprep.subr.mxu0 0.0
        %3797 = vmatpush1.msra.mxu0 %v2311
        %3798 = vmatprep.subr.mxu0 0.0
        %3799 = vmatpush1.msra.mxu0 %v2312
        %3800 = vmatprep.subr.mxu0 0.0
        %3801 = vmatpush1.msra.mxu0 %v2313
        %3802 = vmatprep.subr.mxu0 0.0
        %3803 = vmatpush1.msra.mxu0 %v2314
        %3804 = vmatprep.subr.mxu0 0.0
        %3805 = vmatpush1.msra.mxu0 %v2315
        %3806 = vmatprep.subr.mxu0 0.0
        %3807 = vmatpush1.msra.mxu0 %v2316
        %3808 = vmatprep.subr.mxu0 0.0
        %3809 = vmatpush1.msra.mxu0 0.0
        %3810 = vmatprep.subr.mxu0 0.0
        %3811 = vmatpush1.msra.mxu0 0.0
        %3812 = vmatprep.subr.mxu0 0.0
        %3813 = vmatpush1.msra.mxu0 0.0
        %3814 = vmatprep.subr.mxu0 0.0
        %3815 = vmatpush1.msra.mxu0 0.0
        %3816 = vmatprep.subr.mxu0 0.0
        %3817 = vmatpush1.msra.mxu0 0.0
        %3818 = vmatprep.subr.mxu0 0.0
        %3819 = vmatpush1.msra.mxu0 0.0
        %3820 = vmatprep.subr.mxu0 0.0
        %3821 = vmatpush1.msra.mxu0 0.0
        %3822 = vmatprep.subr.mxu0 0.0
        %3823 = vmatpush1.msra.mxu0 0.0
        %3824 = vmatprep.subr.mxu0 0.0
        %3825 = vmatpush1.msra.mxu0 0.0
        %3826 = vmatprep.subr.mxu0 0.0
        %3827 = vmatpush1.msra.mxu0 0.0
        %3828 = vmatprep.subr.mxu0 0.0
        %3829 = vmatpush1.msra.mxu0 0.0
        %3830 = vmatprep.subr.mxu0 0.0
        %3831 = vmatpush1.msra.mxu0 0.0
        %3832 = vmatprep.subr.mxu0 0.0
        %3833 = vmatpush1.msra.mxu0 0.0
        %3834 = vmatprep.subr.mxu0 0.0
        %3835 = vmatpush1.msra.mxu0 0.0
        %3836 = vmatprep.subr.mxu0 0.0
        %3837 = vmatpush1.msra.mxu0 0.0
        %3838 = vmatprep.subr.mxu0 0.0
        %3839 = vmatpush1.msra.mxu0 0.0
        %3840 = vmatprep.subr.mxu0 0.0
        %3841 = vmatpush1.msra.mxu0 0.0
        %3842 = vmatprep.subr.mxu0 0.0
        %3843 = vmatpush1.msra.mxu0 0.0
        %3844 = vmatprep.subr.mxu0 0.0
        %3845 = vmatpush1.msra.mxu0 0.0
        %3846 = vmatprep.subr.mxu0 0.0
        %3847 = vmatpush1.msra.mxu0 0.0
        %3848 = vmatprep.subr.mxu0 0.0
        %3849 = vmatpush1.msra.mxu0 0.0
        %3850 = vmatprep.subr.mxu0 0.0
        %3851 = vmatpush1.msra.mxu0 0.0
        %3852 = vmatprep.subr.mxu0 0.0
        %3853 = vmatpush1.msra.mxu0 0.0
        %3854 = vmatprep.subr.mxu0 0.0
        %3855 = vmatpush1.msra.mxu0 0.0
        %3856 = vmatprep.mubr.f32.mxu0 0.0
        %3857 = vmatmul.mubr.f32.gmra.mrb[0].mxu0 %v3247
        %v3858 = vpop.f32.mrb[0].mxu0
        %v3859 = vadd.f32 %v3634, %v3858
        %v3860 = vpop.f32.mrb[0].mxu0
        %3861 = vmatprep.mubr.f32.mxu0 0.0
        %3862 = vmatmul.mubr.f32.gmra.mrb[0].mxu0 %v3250
        %v3863 = vpop.f32.mrb[0].mxu0
        %v3864 = vadd.f32 %v3639, %v3863
        %v3865 = vpop.f32.mrb[0].mxu0
        %3866 = vmatprep.mubr.f32.mxu0 0.0
        %3867 = vmatmul.mubr.f32.gmra.mrb[0].mxu0 %v3253
        %v3868 = vpop.f32.mrb[0].mxu0
        %v3869 = vadd.f32 %v3644, %v3868
        %v3870 = vpop.f32.mrb[0].mxu0
        %3871 = vmatprep.mubr.f32.mxu0 0.0
        %3872 = vmatmul.mubr.f32.gmra.mrb[0].mxu0 %v3256
        %v3873 = vpop.f32.mrb[0].mxu0
        %v3874 = vadd.f32 %v3649, %v3873
        %v3875 = vpop.f32.mrb[0].mxu0
        %3876 = vmatprep.mubr.f32.mxu0 0.0
        %3877 = vmatmul.mubr.f32.gmra.mrb[0].mxu0 %v3259
        %v3878 = vpop.f32.mrb[0].mxu0
        %v3879 = vadd.f32 %v3654, %v3878
        %v3880 = vpop.f32.mrb[0].mxu0
        %3881 = vmatprep.mubr.f32.mxu0 0.0
        %3882 = vmatmul.mubr.f32.gmra.mrb[0].mxu0 %v3262
        %v3883 = vpop.f32.mrb[0].mxu0
        %v3884 = vadd.f32 %v3659, %v3883
        %v3885 = vpop.f32.mrb[0].mxu0
        %3886 = vmatprep.mubr.f32.mxu0 0.0
        %3887 = vmatmul.mubr.f32.gmra.mrb[0].mxu0 %v3265
        %v3888 = vpop.f32.mrb[0].mxu0
        %v3889 = vadd.f32 %v3664, %v3888
        %v3890 = vpop.f32.mrb[0].mxu0
        %3891 = vmatprep.mubr.f32.mxu0 0.0
        %3892 = vmatmul.mubr.f32.gmra.mrb[0].mxu0 %v3268
        %v3893 = vpop.f32.mrb[0].mxu0
        %v3894 = vadd.f32 %v3669, %v3893
        %v3895 = vpop.f32.mrb[0].mxu0
        %3896 = vmatprep.mubr.f32.mxu0 0.0
        %3897 = vmatmul.mubr.f32.gmra.mrb[0].mxu0 %v3271
        %v3898 = vpop.f32.mrb[0].mxu0
        %v3899 = vadd.f32 %v3674, %v3898
        %v3900 = vpop.f32.mrb[0].mxu0
        %3901 = vmatprep.mubr.f32.mxu0 0.0
        %3902 = vmatmul.mubr.f32.gmra.mrb[0].mxu0 %v3274
        %v3903 = vpop.f32.mrb[0].mxu0
        %v3904 = vadd.f32 %v3679, %v3903
        %v3905 = vpop.f32.mrb[0].mxu0
        %3906 = vmatprep.mubr.f32.mxu0 0.0
        %3907 = vmatmul.mubr.f32.gmra.mrb[0].mxu0 %v3277
        %v3908 = vpop.f32.mrb[0].mxu0
        %v3909 = vadd.f32 %v3684, %v3908
        %v3910 = vpop.f32.mrb[0].mxu0
        %3911 = vmatprep.mubr.f32.mxu0 0.0
        %3912 = vmatmul.mubr.f32.gmra.mrb[0].mxu0 %v3280
        %v3913 = vpop.f32.mrb[0].mxu0
        %v3914 = vadd.f32 %v3689, %v3913
        %v3915 = vpop.f32.mrb[0].mxu0
        %3916 = vmatprep.mubr.f32.mxu0 0.0
        %3917 = vmatmul.mubr.f32.gmra.mrb[0].mxu0 %v3283
        %v3918 = vpop.f32.mrb[0].mxu0
        %v3919 = vadd.f32 %v3694, %v3918
        %v3920 = vpop.f32.mrb[0].mxu0
        %3921 = vmatprep.mubr.f32.mxu0 0.0
        %3922 = vmatmul.mubr.f32.gmra.mrb[0].mxu0 %v3286
        %v3923 = vpop.f32.mrb[0].mxu0
        %v3924 = vadd.f32 %v3699, %v3923
        %v3925 = vpop.f32.mrb[0].mxu0
        %3926 = vmatprep.mubr.f32.mxu0 0.0
        %3927 = vmatmul.mubr.f32.gmra.mrb[0].mxu0 %v3289
        %v3928 = vpop.f32.mrb[0].mxu0
        %v3929 = vadd.f32 %v3704, %v3928
        %v3930 = vpop.f32.mrb[0].mxu0
        %3931 = vmatprep.mubr.f32.mxu0 0.0
        %3932 = vmatmul.mubr.f32.gmra.mrb[0].mxu0 %v3292
        %v3933 = vpop.f32.mrb[0].mxu0
        %v3934 = vadd.f32 %v3709, %v3933
        %v3935 = vpop.f32.mrb[0].mxu0
        %3936 = vmatprep.mubr.f32.mxu0 0.0
        %3937 = vmatmul.mubr.f32.gmra.mrb[0].mxu0 %v3295
        %v3938 = vpop.f32.mrb[0].mxu0
        %v3939 = vadd.f32 %v3714, %v3938
        %v3940 = vpop.f32.mrb[0].mxu0
        %3941 = vmatprep.mubr.f32.mxu0 0.0
        %3942 = vmatmul.mubr.f32.gmra.mrb[0].mxu0 %v3298
        %v3943 = vpop.f32.mrb[0].mxu0
        %v3944 = vadd.f32 %v3719, %v3943
        %v3945 = vpop.f32.mrb[0].mxu0
        %3946 = vmatprep.mubr.f32.mxu0 0.0
        %3947 = vmatmul.mubr.f32.gmra.mrb[0].mxu0 %v3301
        %v3948 = vpop.f32.mrb[0].mxu0
        %v3949 = vadd.f32 %v3724, %v3948
        %v3950 = vpop.f32.mrb[0].mxu0
        %3951 = vmatprep.mubr.f32.mxu0 0.0
        %3952 = vmatmul.mubr.f32.gmra.mrb[0].mxu0 %v3304
        %v3953 = vpop.f32.mrb[0].mxu0
        %v3954 = vadd.f32 %v3729, %v3953
        %v3955 = vpop.f32.mrb[0].mxu0
        %3956 = vmatprep.mubr.f32.mxu0 0.0
        %3957 = vmatmul.mubr.f32.gmra.mrb[0].mxu0 %v3307
        %v3958 = vpop.f32.mrb[0].mxu0
        %v3959 = vadd.f32 %v3734, %v3958
        %v3960 = vpop.f32.mrb[0].mxu0
        %3961 = vmatprep.mubr.f32.mxu0 0.0
        %3962 = vmatmul.mubr.f32.gmra.mrb[0].mxu0 %v3310
        %v3963 = vpop.f32.mrb[0].mxu0
        %v3964 = vadd.f32 %v3739, %v3963
        %v3965 = vpop.f32.mrb[0].mxu0
        %3966 = vmatprep.mubr.f32.mxu0 0.0
        %3967 = vmatmul.mubr.f32.gmra.mrb[0].mxu0 %v3313
        %v3968 = vpop.f32.mrb[0].mxu0
        %v3969 = vadd.f32 %v3744, %v3968
        %v3970 = vpop.f32.mrb[0].mxu0
        %3971 = vmatprep.mubr.f32.mxu0 0.0
        %3972 = vmatmul.mubr.f32.gmra.mrb[0].mxu0 %v3316
        %v3973 = vpop.f32.mrb[0].mxu0
        %v3974 = vadd.f32 %v3749, %v3973
        %v3975 = vpop.f32.mrb[0].mxu0
        %3976 = vmatprep.mubr.f32.mxu0 0.0
        %3977 = vmatmul.mubr.f32.gmra.mrb[0].mxu0 %v3319
        %v3978 = vpop.f32.mrb[0].mxu0
        %v3979 = vadd.f32 %v3754, %v3978
        %v3980 = vpop.f32.mrb[0].mxu0
        %3981 = vmatprep.mubr.f32.mxu0 0.0
        %3982 = vmatmul.mubr.f32.gmra.mrb[0].mxu0 %v3322
        %v3983 = vpop.f32.mrb[0].mxu0
        %v3984 = vadd.f32 %v3759, %v3983
        %v3985 = vpop.f32.mrb[0].mxu0
        %3986 = vmatprep.mubr.f32.mxu0 0.0
        %3987 = vmatmul.mubr.f32.gmra.mrb[0].mxu0 %v3325
        %v3988 = vpop.f32.mrb[0].mxu0
        %v3989 = vadd.f32 %v3764, %v3988
        %v3990 = vpop.f32.mrb[0].mxu0
        %3991 = vmatprep.mubr.f32.mxu0 0.0
        %3992 = vmatmul.mubr.f32.gmra.mrb[0].mxu0 %v3328
        %v3993 = vpop.f32.mrb[0].mxu0
        %v3994 = vadd.f32 %v3769, %v3993
        %v3995 = vpop.f32.mrb[0].mxu0
        %3996 = vmatprep.mubr.f32.mxu0 0.0
        %3997 = vmatmul.mubr.f32.gmra.mrb[0].mxu0 %v3331
        %v3998 = vpop.f32.mrb[0].mxu0
        %v3999 = vadd.f32 %v3774, %v3998
        %v4000 = vpop.f32.mrb[0].mxu0
        %4001 = vmatprep.mubr.f32.mxu0 0.0
        %4002 = vmatmul.mubr.f32.gmra.mrb[0].mxu0 %v3334
        %v4003 = vpop.f32.mrb[0].mxu0
        %v4004 = vadd.f32 %v3779, %v4003
        %v4005 = vpop.f32.mrb[0].mxu0
        %4006 = vmatprep.mubr.f32.mxu0 0.0
        %4007 = vmatmul.mubr.f32.gmra.mrb[0].mxu0 %v3337
        %v4008 = vpop.f32.mrb[0].mxu0
        %v4009 = vadd.f32 %v3784, %v4008
        %v4010 = vpop.f32.mrb[0].mxu0
        %4011 = vmatprep.mubr.f32.mxu0 0.0
        %4012 = vmatmul.mubr.f32.gmra.mrb[0].mxu0 %v3340
        %v4013 = vpop.f32.mrb[0].mxu0
        %v4014 = vadd.f32 %v3789, %v4013
        %v4015 = vpop.f32.mrb[0].mxu0
        %4016 = vdwg.mxu0
        %4017 = vst.msk [vmem:[%s163] sm:$0xff] %vm169, %v3859
        %4018 = vst.msk [vmem:[%s163 + $0x8] sm:$0xff] %vm169, %v3864
        %4019 = vst.msk [vmem:[%s163 + $0x10] sm:$0xff] %vm169, %v3869
        %4020 = vst.msk [vmem:[%s163 + $0x18] sm:$0xff] %vm169, %v3874
        %4021 = vst.msk [vmem:[%s163 + $0x20] sm:$0xff] %vm169, %v3879
        %4022 = vst.msk [vmem:[%s163 + $0x28] sm:$0xff] %vm169, %v3884
        %4023 = vst.msk [vmem:[%s163 + $0x30] sm:$0xff] %vm169, %v3889
        %4024 = vst.msk [vmem:[%s163 + $0x38] sm:$0xff] %vm169, %v3894
        %4025 = vst.msk [vmem:[%s163 + $0x40] sm:$0xff] %vm169, %v3899
        %4026 = vst.msk [vmem:[%s163 + $0x48] sm:$0xff] %vm169, %v3904
        %4027 = vst.msk [vmem:[%s163 + $0x50] sm:$0xff] %vm169, %v3909
        %4028 = vst.msk [vmem:[%s163 + $0x58] sm:$0xff] %vm169, %v3914
        %4029 = vst.msk [vmem:[%s163 + $0x60] sm:$0xff] %vm169, %v3919
        %4030 = vst.msk [vmem:[%s163 + $0x68] sm:$0xff] %vm169, %v3924
        %4031 = vst.msk [vmem:[%s163 + $0x70] sm:$0xff] %vm169, %v3929
        %4032 = vst.msk [vmem:[%s163 + $0x78] sm:$0xff] %vm169, %v3934
        %4033 = vst.msk [vmem:[%s163 + $0x80] sm:$0xff] %vm169, %v3939
        %4034 = vst.msk [vmem:[%s163 + $0x88] sm:$0xff] %vm169, %v3944
        %4035 = vst.msk [vmem:[%s163 + $0x90] sm:$0xff] %vm169, %v3949
        %4036 = vst.msk [vmem:[%s163 + $0x98] sm:$0xff] %vm169, %v3954
        %4037 = vst.msk [vmem:[%s163 + $0xa0] sm:$0xff] %vm169, %v3959
        %4038 = vst.msk [vmem:[%s163 + $0xa8] sm:$0xff] %vm169, %v3964
        %4039 = vst.msk [vmem:[%s163 + $0xb0] sm:$0xff] %vm169, %v3969
        %4040 = vst.msk [vmem:[%s163 + $0xb8] sm:$0xff] %vm169, %v3974
        %4041 = vst.msk [vmem:[%s163 + $0xc0] sm:$0xff] %vm169, %v3979
        %4042 = vst.msk [vmem:[%s163 + $0xc8] sm:$0xff] %vm169, %v3984
        %4043 = vst.msk [vmem:[%s163 + $0xd0] sm:$0xff] %vm169, %v3989
        %4044 = vst.msk [vmem:[%s163 + $0xd8] sm:$0xff] %vm169, %v3994
        %4045 = vst.msk [vmem:[%s163 + $0xe0] sm:$0xff] %vm169, %v3999
        %4046 = vst.msk [vmem:[%s163 + $0xe8] sm:$0xff] %vm169, %v4004
        %4047 = vst.msk [vmem:[%s163 + $0xf0] sm:$0xff] %vm169, %v4009
        %4048 = vst.msk [vmem:[%s163 + $0xf8] sm:$0xff] %vm169, %v4014
        %s4049 = sand.u32 %s93, 1
        %s4050 = scalar_lea.sflag [#allocation5], %s4049
        %s4051 = sand.u32 %s93, 1
        %s4052 = smul.addr %s4051, 256
        %s4053 = scalar_lea.vmem [#allocation4], %s4052
        // Predicated region
        $region33: #{residual_block.1} parent=31 // pred_check
          %p4054 = pneg %p103
        $region34: #{residual_block.1} parent=31 // pred_check_branch
          %4056 = sbr.rel (%p4054) target = $region36
        $region35: #{residual_block.1} parent=31 // pred_region
          %s4058 = ssub.s32 4096, 4096
          %4059 = vsyncadd %s4050, %s4058
          %s4060 = smul.addr %s17, 32
          %s4061 = smul.addr %s4060, 128
          %s4062 = scalar_lea.hbm %s3, %s4061
          %s4063 = sshll.u32 %s4053, 4
          %s4064 = int_to_ptr.vmem [resolvable:$true] %s4063
          %4069 = dma.vmem_to_hbm [thread:$0]  %s4064, 4096, %s4062, %s4050, 128, 128, 8
        $region36: #{residual_block.1} parent=31 // pred_fallthru
          _
      $region32: #{residual_block.1} parent=5 // pred_fallthru
        _
      %p4070 = scmp.le.s32.totalorder 2, %s12
      // Predicated region
      $region37: #{residual_block.1} parent=5 // pred_check
        %p4071 = pneg %p4070
      $region38: #{residual_block.1} parent=5 // pred_check_branch
        %4073 = sbr.rel (%p4071) target = $region40
      $region39: #{residual_block.1} parent=5 // pred_region
        %s4074 = ssub.s32 %s12, 2
        // Predicated region
        $region41: #{residual_block.1} parent=39 // pred_check
          %p4075 = pneg %p109
        $region42: #{residual_block.1} parent=39 // pred_check_branch
          %4077 = sbr.rel (%p4075) target = $region44
        $region43: #{residual_block.1} parent=39 // pred_region
          %s4078 = sand.u32 %s94, 1
          %s4079 = scalar_lea.sflag [#allocation5], %s4078
          %s4080 = sand.u32 %s94, 1
          %s4081 = smul.addr %s4080, 256
          %s4082 = scalar_lea.vmem [#allocation4], %s4081
          %4083 = dma.done %s4079, 4096
        $region44: #{residual_block.1} parent=39 // pred_fallthru
          _
      $region40: #{residual_block.1} parent=5 // pred_fallthru
        _
    $region6: #{residual_block.1} parent=1 // loop_footer
      %s16 = sadd.s32 1, %s12
    $region7: #{residual_block.1} parent=1 // loop_footer_branch
      %11 = sbr.rel target = $region3
    $region8: #{residual_block.1} parent=1 // loop_exit
      _
    %4084 = vsyncpa [#allocation5], 1
    %s4085 = scalar_lea.sflag [#allocation5], 1
    %4086 = vsyncpa %s4085, 1

</llo_original>
